<compile_context>
chip_gen: v7x
topology: tpu7x:2x2x1
jax: 0.10.0
libtpu: 0.0.40
codegen_flags: <defaults>
</compile_context>

<pallas_src>
import functools

import jax
import jax.numpy as jnp
from jax import lax
from jax.experimental import pallas as pl
from jax.experimental.pallas import tpu as pltpu

BN_EPS = 1e-5


# ------------------------------- Pallas kernel -------------------------------

def fused_front_kernel(patch_ref, w1_ref, wl_ref, bl_ref, o_ref,
                       zpad_ref, hrow_ref, xpad_ref, col_ref,
                       *, conv_hw, pool_hw, zhalo, xhalo, cdtype):
    """conv1 GEMM + ReLU + 3x3/s2/p1 maxpool + layer1 (2 BasicBlocks) for one image."""
    HO, WO = conv_hw                     # conv1 output spatial dims
    HP, WP = pool_hw                     # pooled / layer1 spatial dims
    Mc, Mp = HO * WO, HP * WP
    C = o_ref.shape[-1]

    # ---- conv1 7x7/s2/p3 + BN + ReLU as one GEMM (bias folded into K row) ----
    z = jnp.dot(patch_ref[...], w1_ref[...], preferred_element_type=jnp.float32)
    z = jnp.maximum(z, 0.0)

    # ---- zero ONLY the halo rows of the line buffers (interiors get overwritten) ----
    zpad_ref[:zhalo, :] = jnp.zeros((zhalo, C), jnp.float32)
    hrow_ref[:8, :] = jnp.zeros((8, C), jnp.float32)          # row 7 is the x = -1 zero pad
    xpad_ref[:xhalo, :] = jnp.zeros((xhalo, C), jnp.float32)
    xpad_ref[xhalo + Mp:xhalo + Mp + xhalo, :] = jnp.zeros((xhalo, C), jnp.float32)

    # ---- 3x3/s2/p1 maxpool fully in VMEM (post-ReLU => zero pad == -inf pad) ----
    zpad_ref[zhalo:zhalo + Mc, :] = z
    for oy in range(HP):
        r0 = zhalo + (2 * oy - 1) * WO                        # image row 2*oy-1 (halo if <0)
        v = jnp.maximum(jnp.maximum(zpad_ref[r0:r0 + WO, :],
                                    zpad_ref[r0 + WO:r0 + 2 * WO, :]),
                        zpad_ref[r0 + 2 * WO:r0 + 3 * WO, :])  # vertical 3-max, (WO, C)
        hrow_ref[8:8 + WO, :] = v
        p = jnp.maximum(jnp.maximum(hrow_ref[pl.ds(7, WP, stride=2), :],
                                    hrow_ref[pl.ds(8, WP, stride=2), :]),
                        hrow_ref[pl.ds(9, WP, stride=2), :])   # horizontal 3-max @ stride 2
        xpad_ref[xhalo + oy * WP:xhalo + (oy + 1) * WP, :] = p  # pooled row -> layer1 input

    # ---- layer1: 2x BasicBlock(64); each conv is ONE (Mp, 9C) @ (9C, C) dot ----
    col = lax.broadcasted_iota(jnp.int32, (Mp, 1), 0) % WP     # hoisted once, reused 4x
    mask_l = col >= 1                                          # x-1 stays inside the row
    mask_r = col < (WP - 1)                                    # x+1 stays inside the row

    def conv3x3(i, x_val=None):
        """3x3/s1/p1 conv (BN folded) of the image sitting in xpad_ref's interior."""
        if x_val is not None:
            xpad_ref[xhalo:xhalo + Mp, :] = x_val
        t = 0
        for dy in (-1, 0, 1):
            for dx in (-1, 0, 1):
                s = dy * WP + dx
                xin = xpad_ref[xhalo + s:xhalo + s + Mp, :]
                if dx == -1:
                    xin = jnp.where(mask_l, xin, 0.0)
                elif dx == 1:
                    xin = jnp.where(mask_r, xin, 0.0)
                col_ref[:, t * C:(t + 1) * C] = xin.astype(cdtype)
                t += 1
        acc = jnp.dot(col_ref[...], wl_ref[i], preferred_element_type=jnp.float32)
        return acc + bl_ref[i]

    x0 = xpad_ref[xhalo:xhalo + Mp, :]                 # pooled activation (residual 0)
    h = jnp.maximum(conv3x3(0), 0.0)                   # pooled input already in xpad
    x1 = jnp.maximum(conv3x3(1, h) + x0, 0.0)
    h = jnp.maximum(conv3x3(2, x1), 0.0)
    out = jnp.maximum(conv3x3(3, h) + x1, 0.0)
    o_ref[...] = out.astype(o_ref.dtype)


# --------------------------------- wrappers ----------------------------------

def _round_up(x, m):
    return ((x + m - 1) // m) * m


def _fold_bn(w_oihw, bn):
    """Fold eval-mode BN into a tap-major GEMM weight (f32) and bias row (f32)."""
    cout, cin, kh, kw = w_oihw.shape
    g, b, m, v = bn
    scale = g / jnp.sqrt(v + BN_EPS)
    bias = (b - m * scale).astype(jnp.float32).reshape(1, cout)
    w2d = jnp.transpose(w_oihw, (2, 3, 1, 0)).reshape(kh * kw * cin, cout)
    return (w2d * scale[None, :]).astype(jnp.float32), bias


@functools.partial(jax.jit, static_argnames=("compute_dtype",))
def mycnn_sppnet_front(x_nchw, params, compute_dtype=jnp.bfloat16):
    x = jnp.transpose(x_nchw, (0, 2, 3, 1))                    # NCHW -> NHWC
    N, H, W, Cin = x.shape
    conv1_w = params["conv1_w"]
    Cout, _, KH, KW = conv1_w.shape
    stride, pad = 2, 3
    HO = (H + 2 * pad - KH) // stride + 1
    WO = (W + 2 * pad - KW) // stride + 1
    Mc = HO * WO
    assert HO % 2 == 0 and WO % 2 == 0 and Mc % 8 == 0
    HP, WP = HO // 2, WO // 2                                  # 3x3/s2/p1 maxpool output
    Mp = HP * WP
    assert Mp % 8 == 0, "pooled per-image row count must be sublane aligned"

    zhalo = _round_up(WO, 8)          # maxpool line-buffer top halo (>= one image row)
    xhalo = _round_up(WP + 1, 8)      # layer1 conv line-buffer halo

    # conv1 weight: fold BN; bias goes into K row `K` (patches carry a ones column there);
    # contraction zero-padded to a lane multiple.  Cast to compute dtype last.
    w2d, bias = _fold_bn(conv1_w, params["bn1"])
    K = KH * KW * Cin
    Kpad = _round_up(K + 1, 128)
    w1 = jnp.concatenate(
        [w2d, bias, jnp.zeros((Kpad - K - 1, Cout), jnp.float32)], axis=0,
    ).astype(compute_dtype)

    # Stem im2col (pure data movement, built by XLA).
    # TODO(synk): build this in-kernel too for SPP-scale inputs.
    xp = jnp.pad(x, ((0, 0), (pad, pad), (pad, pad), (0, 0)))
    cols = [xp[:, i:i + stride * HO:stride, j:j + stride * WO:stride, :]
            for i in range(KH) for j in range(KW)]
    patches = jnp.stack(cols, axis=-2).reshape(N * Mc, K)
    patches = jnp.concatenate(
        [patches, jnp.ones((N * Mc, 1), jnp.float32),
         jnp.zeros((N * Mc, Kpad - K - 1), jnp.float32)], axis=1).astype(compute_dtype)

    # layer1: 4 convs -> one stacked tap-major weight tensor + one bias tensor.
    ws, bs = [], []
    for blk in (params["layer1_0"], params["layer1_1"]):
        for wk, bk in (("conv1_w", "bn1"), ("conv2_w", "bn2")):
            w2, b2 = _fold_bn(blk[wk], blk[bk])
            ws.append(w2)
            bs.append(b2)
    wl = jnp.stack(ws).astype(compute_dtype)    # (4, 9C, C)
    bl = jnp.stack(bs)                          # (4, 1, C) f32

    kernel = functools.partial(
        fused_front_kernel, conv_hw=(HO, WO), pool_hw=(HP, WP),
        zhalo=zhalo, xhalo=xhalo, cdtype=compute_dtype)

    out = pl.pallas_call(
        kernel,
        out_shape=jax.ShapeDtypeStruct((N * Mp, Cout), jnp.float32),
        grid=(N,),
        in_specs=[pl.BlockSpec((Mc, Kpad), lambda n: (n, 0)),
                  pl.BlockSpec((Kpad, Cout), lambda n: (0, 0)),
                  pl.BlockSpec((4, 9 * Cout, Cout), lambda n: (0, 0, 0)),
                  pl.BlockSpec((4, 1, Cout), lambda n: (0, 0, 0))],
        out_specs=pl.BlockSpec((Mp, Cout), lambda n: (n, 0)),
        scratch_shapes=[
            pltpu.VMEM((zhalo + Mc, Cout), jnp.float32),       # conv1-output line buffer
            pltpu.VMEM((8 + WO, Cout), jnp.float32),           # per-pooled-row staging
            pltpu.VMEM((Mp + 2 * xhalo, Cout), jnp.float32),   # layer1 conv line buffer
            pltpu.VMEM((Mp, 9 * Cout), compute_dtype),         # layer1 im2col staging
        ],
        compiler_params=pltpu.CompilerParams(dimension_semantics=("parallel",)),
    )(patches, w1, wl, bl)

    out = out.reshape(N, HP, WP, Cout)
    return jnp.transpose(out, (0, 3, 1, 2))                    # NHWC -> NCHW


# ----------------------------- pure-JAX reference ----------------------------

def _ref_conv(x, w_oihw, stride, pad):
    w_hwio = jnp.transpose(w_oihw, (2, 3, 1, 0))
    return lax.conv_general_dilated(
        x, w_hwio, (stride, stride), ((pad, pad), (pad, pad)),
        dimension_numbers=("NHWC", "HWIO", "NHWC"))


def _ref_bn(x, bn):
    g, b, m, v = bn
    return (x - m) / jnp.sqrt(v + BN_EPS) * g + b


def ref_forward(x_nchw, params):
    x = jnp.transpose(x_nchw, (0, 2, 3, 1))
    x = jax.nn.relu(_ref_bn(_ref_conv(x, params["conv1_w"], 2, 3), params["bn1"]))
    x = lax.reduce_window(x, -jnp.inf, lax.max, (1, 3, 3, 1), (1, 2, 2, 1),
                          ((0, 0), (1, 1), (1, 1), (0, 0)))
    for name in ("layer1_0", "layer1_1"):
        p = params[name]
        out = jax.nn.relu(_ref_bn(_ref_conv(x, p["conv1_w"], 1, 1), p["bn1"]))
        out = _ref_bn(_ref_conv(out, p["conv2_w"], 1, 1), p["bn2"]) + x
        x = jax.nn.relu(out)
    return jnp.transpose(x, (0, 3, 1, 2))


# --------------------------------- param init --------------------------------

def init_conv(key, cout, cin, kh, kw):
    # PyTorch conv weight layout: (C_out, C_in, KH, KW)
    return jax.random.normal(key, (cout, cin, kh, kw), jnp.float32) * 0.1


def init_bn(key, c):
    k1, k2, k3, k4 = jax.random.split(key, 4)
    gamma = 1.0 + 0.1 * jax.random.normal(k1, (c,), jnp.float32)
    beta = 0.1 * jax.random.normal(k2, (c,), jnp.float32)
    mean = 0.1 * jax.random.normal(k3, (c,), jnp.float32)
    var = 0.9 + 0.1 * jnp.abs(jax.random.normal(k4, (c,), jnp.float32))
    return (gamma, beta, mean, var)


def init_block(key, c):
    k1, k2, k3, k4 = jax.random.split(key, 4)
    return {
        "conv1_w": init_conv(k1, c, c, 3, 3),
        "bn1": init_bn(k2, c),
        "conv2_w": init_conv(k3, c, c, 3, 3),
        "bn2": init_bn(k4, c),
    }


if __name__ == "__main__":
    key = jax.random.PRNGKey(0)
    kx, kc1, kb1, kl0, kl1 = jax.random.split(key, 5)

    params = {
        "conv1_w": init_conv(kc1, 64, 3, 7, 7),   # resnet18 conv1: 7x7/s2/p3, no bias
        "bn1": init_bn(kb1, 64),
        "layer1_0": init_block(kl0, 64),
        "layer1_1": init_block(kl1, 64),
    }

    # Input in PyTorch NCHW convention.
    x = jax.random.normal(kx, (2, 3, 32, 32), jnp.float32)

    ref = jax.block_until_ready(ref_forward(x, params))

    # Tight structural check with f32 compute.
    out_f32 = jax.block_until_ready(
        mycnn_sppnet_front(x, params, compute_dtype=jnp.float32))
    assert out_f32.shape == (2, 64, 8, 8), out_f32.shape
    if not bool(jnp.allclose(out_f32, ref, atol=5e-3, rtol=5e-3)):
        raise AssertionError(
            "f32 mismatch vs reference, max abs diff = "
            f"{float(jnp.max(jnp.abs(out_f32 - ref)))}")

    # Fast (default) bf16 path: error budget relative to the output scale.
    out = jax.block_until_ready(
        mycnn_sppnet_front(x, params, compute_dtype=jnp.bfloat16))
    assert out.shape == (2, 64, 8, 8), out.shape
    err = float(jnp.max(jnp.abs(out - ref)))
    tol = 5e-2 * float(jnp.max(jnp.abs(ref))) + 5e-2
    if err > tol:
        raise AssertionError(f"bf16 mismatch vs reference: max abs diff {err} > {tol}")

    print("KERNEL_OK")
</pallas_src>

<mosaic_0001>
module attributes {stable_mosaic.version = 11 : i64} {
  func.func @fused_front_kernel(%arg0: i32, %arg1: memref<256x256xf32, #tpu.memory_space<vmem>>, %arg2: memref<256x64xf32, #tpu.memory_space<vmem>>, %arg3: memref<4x576x64xf32, #tpu.memory_space<vmem>>, %arg4: memref<4x1x64xf32, #tpu.memory_space<vmem>>, %arg5: memref<64x64xf32, #tpu.memory_space<vmem>>, %arg6: memref<272x64xf32, #tpu.memory_space<vmem>>, %arg7: memref<24x64xf32, #tpu.memory_space<vmem>>, %arg8: memref<96x64xf32, #tpu.memory_space<vmem>>, %arg9: memref<64x576xf32, #tpu.memory_space<vmem>>) attributes {dimension_semantics = [#tpu.dimension_semantics<parallel>], iteration_bounds = array<i64: 2>, scalar_prefetch = 0 : i64, scratch_operands = 4 : i64, tpu.core_type = #tpu.core_type<tc>, window_params = [{transform_indices = @transform_0, window_bounds = array<i64: 256, 256>}, {pipeline_mode = #tpu.pipeline_mode<synchronous>, transform_indices = @transform_1, window_bounds = array<i64: 256, 64>}, {pipeline_mode = #tpu.pipeline_mode<synchronous>, transform_indices = @transform_2, window_bounds = array<i64: 4, 576, 64>}, {pipeline_mode = #tpu.pipeline_mode<synchronous>, transform_indices = @transform_3, window_bounds = array<i64: 4, 1, 64>}, {transform_indices = @transform_4, window_bounds = array<i64: 64, 64>}]} {
    %c0 = arith.constant 0 : index
    %c0_0 = arith.constant 0 : index
    %0 = vector.load %arg1[%c0, %c0_0] : memref<256x256xf32, #tpu.memory_space<vmem>>, vector<256x256xf32>
    %c0_1 = arith.constant 0 : index
    %c0_2 = arith.constant 0 : index
    %1 = vector.load %arg2[%c0_1, %c0_2] : memref<256x64xf32, #tpu.memory_space<vmem>>, vector<256x64xf32>
    %cst = arith.constant dense<0.000000e+00> : vector<256x64xf32>
    %2 = tpu.matmul %0, %1, %cst {dimension_numbers = #tpu.dot_dimension_numbers<[1], [0], [0], [1], [0, 0, 1, 1], [], []>} : vector<256x256xf32>, vector<256x64xf32>, vector<256x64xf32> -> vector<256x64xf32>
    %cst_3 = arith.constant 0.000000e+00 : f32
    %3 = vector.broadcast %cst_3 : f32 to vector<256x64xf32>
    %4 = arith.maximumf %2, %3 : vector<256x64xf32>
    %cst_4 = arith.constant 0.000000e+00 : f32
    %5 = vector.broadcast %cst_4 : f32 to vector<16x64xf32>
    %c0_5 = arith.constant 0 : index
    %c0_6 = arith.constant 0 : index
    %6 = vector.load %arg6[%c0_5, %c0_6] : memref<272x64xf32, #tpu.memory_space<vmem>>, vector<16x64xf32>
    tpu.vector_store %arg6[%c0_5, %c0_6], %5 {strides = array<i32>} : memref<272x64xf32, #tpu.memory_space<vmem>>, vector<16x64xf32>,
    %cst_7 = arith.constant 0.000000e+00 : f32
    %7 = vector.broadcast %cst_7 : f32 to vector<8x64xf32>
    %c0_8 = arith.constant 0 : index
    %c0_9 = arith.constant 0 : index
    %8 = vector.load %arg7[%c0_8, %c0_9] : memref<24x64xf32, #tpu.memory_space<vmem>>, vector<8x64xf32>
    tpu.vector_store %arg7[%c0_8, %c0_9], %7 {strides = array<i32>} : memref<24x64xf32, #tpu.memory_space<vmem>>, vector<8x64xf32>,
    %cst_10 = arith.constant 0.000000e+00 : f32
    %9 = vector.broadcast %cst_10 : f32 to vector<16x64xf32>
    %c0_11 = arith.constant 0 : index
    %c0_12 = arith.constant 0 : index
    %10 = vector.load %arg8[%c0_11, %c0_12] : memref<96x64xf32, #tpu.memory_space<vmem>>, vector<16x64xf32>
    tpu.vector_store %arg8[%c0_11, %c0_12], %9 {strides = array<i32>} : memref<96x64xf32, #tpu.memory_space<vmem>>, vector<16x64xf32>,
    %cst_13 = arith.constant 0.000000e+00 : f32
    %11 = vector.broadcast %cst_13 : f32 to vector<16x64xf32>
    %c80 = arith.constant 80 : index
    %c0_14 = arith.constant 0 : index
    %12 = vector.load %arg8[%c80, %c0_14] : memref<96x64xf32, #tpu.memory_space<vmem>>, vector<16x64xf32>
    tpu.vector_store %arg8[%c80, %c0_14], %11 {strides = array<i32>} : memref<96x64xf32, #tpu.memory_space<vmem>>, vector<16x64xf32>,
    %c16 = arith.constant 16 : index
    %c0_15 = arith.constant 0 : index
    %13 = vector.load %arg6[%c16, %c0_15] : memref<272x64xf32, #tpu.memory_space<vmem>>, vector<256x64xf32>
    tpu.vector_store %arg6[%c16, %c0_15], %4 {strides = array<i32>} : memref<272x64xf32, #tpu.memory_space<vmem>>, vector<256x64xf32>,
    %c0_16 = arith.constant 0 : index
    %c0_17 = arith.constant 0 : index
    %14 = vector.load %arg6[%c0_16, %c0_17] : memref<272x64xf32, #tpu.memory_space<vmem>>, vector<16x64xf32>
    %c16_18 = arith.constant 16 : index
    %c0_19 = arith.constant 0 : index
    %15 = vector.load %arg6[%c16_18, %c0_19] : memref<272x64xf32, #tpu.memory_space<vmem>>, vector<16x64xf32>
    %16 = arith.maximumf %14, %15 : vector<16x64xf32>
    %c32 = arith.constant 32 : index
    %c0_20 = arith.constant 0 : index
    %17 = vector.load %arg6[%c32, %c0_20] : memref<272x64xf32, #tpu.memory_space<vmem>>, vector<16x64xf32>
    %18 = arith.maximumf %16, %17 : vector<16x64xf32>
    %c8 = arith.constant 8 : index
    %c0_21 = arith.constant 0 : index
    %19 = vector.load %arg7[%c8, %c0_21] : memref<24x64xf32, #tpu.memory_space<vmem>>, vector<16x64xf32>
    tpu.vector_store %arg7[%c8, %c0_21], %18 {strides = array<i32>} : memref<24x64xf32, #tpu.memory_space<vmem>>, vector<16x64xf32>,
    %c7 = arith.constant 7 : index
    %c0_22 = arith.constant 0 : index
    %20 = tpu.strided_load %arg7[%c7, %c0_22] {strides = array<i32: 2, 1>} : memref<24x64xf32, #tpu.memory_space<vmem>>, vector<8x64xf32>
    %c8_23 = arith.constant 8 : index
    %c0_24 = arith.constant 0 : index
    %21 = tpu.strided_load %arg7[%c8_23, %c0_24] {strides = array<i32: 2, 1>} : memref<24x64xf32, #tpu.memory_space<vmem>>, vector<8x64xf32>
    %22 = arith.maximumf %20, %21 : vector<8x64xf32>
    %c9 = arith.constant 9 : index
    %c0_25 = arith.constant 0 : index
    %23 = tpu.strided_load %arg7[%c9, %c0_25] {strides = array<i32: 2, 1>} : memref<24x64xf32, #tpu.memory_space<vmem>>, vector<8x64xf32>
    %24 = arith.maximumf %22, %23 : vector<8x64xf32>
    %c16_26 = arith.constant 16 : index
    %c0_27 = arith.constant 0 : index
    %25 = vector.load %arg8[%c16_26, %c0_27] : memref<96x64xf32, #tpu.memory_space<vmem>>, vector<8x64xf32>
    tpu.vector_store %arg8[%c16_26, %c0_27], %24 {strides = array<i32>} : memref<96x64xf32, #tpu.memory_space<vmem>>, vector<8x64xf32>,
    %c32_28 = arith.constant 32 : index
    %c0_29 = arith.constant 0 : index
    %26 = vector.load %arg6[%c32_28, %c0_29] : memref<272x64xf32, #tpu.memory_space<vmem>>, vector<16x64xf32>
    %c48 = arith.constant 48 : index
    %c0_30 = arith.constant 0 : index
    %27 = vector.load %arg6[%c48, %c0_30] : memref<272x64xf32, #tpu.memory_space<vmem>>, vector<16x64xf32>
    %28 = arith.maximumf %26, %27 : vector<16x64xf32>
    %c64 = arith.constant 64 : index
    %c0_31 = arith.constant 0 : index
    %29 = vector.load %arg6[%c64, %c0_31] : memref<272x64xf32, #tpu.memory_space<vmem>>, vector<16x64xf32>
    %30 = arith.maximumf %28, %29 : vector<16x64xf32>
    %c8_32 = arith.constant 8 : index
    %c0_33 = arith.constant 0 : index
    %31 = vector.load %arg7[%c8_32, %c0_33] : memref<24x64xf32, #tpu.memory_space<vmem>>, vector<16x64xf32>
    tpu.vector_store %arg7[%c8_32, %c0_33], %30 {strides = array<i32>} : memref<24x64xf32, #tpu.memory_space<vmem>>, vector<16x64xf32>,
    %c7_34 = arith.constant 7 : index
    %c0_35 = arith.constant 0 : index
    %32 = tpu.strided_load %arg7[%c7_34, %c0_35] {strides = array<i32: 2, 1>} : memref<24x64xf32, #tpu.memory_space<vmem>>, vector<8x64xf32>
    %c8_36 = arith.constant 8 : index
    %c0_37 = arith.constant 0 : index
    %33 = tpu.strided_load %arg7[%c8_36, %c0_37] {strides = array<i32: 2, 1>} : memref<24x64xf32, #tpu.memory_space<vmem>>, vector<8x64xf32>
    %34 = arith.maximumf %32, %33 : vector<8x64xf32>
    %c9_38 = arith.constant 9 : index
    %c0_39 = arith.constant 0 : index
    %35 = tpu.strided_load %arg7[%c9_38, %c0_39] {strides = array<i32: 2, 1>} : memref<24x64xf32, #tpu.memory_space<vmem>>, vector<8x64xf32>
    %36 = arith.maximumf %34, %35 : vector<8x64xf32>
    %c24 = arith.constant 24 : index
    %c0_40 = arith.constant 0 : index
    %37 = vector.load %arg8[%c24, %c0_40] : memref<96x64xf32, #tpu.memory_space<vmem>>, vector<8x64xf32>
    tpu.vector_store %arg8[%c24, %c0_40], %36 {strides = array<i32>} : memref<96x64xf32, #tpu.memory_space<vmem>>, vector<8x64xf32>,
    %c64_41 = arith.constant 64 : index
    %c0_42 = arith.constant 0 : index
    %38 = vector.load %arg6[%c64_41, %c0_42] : memref<272x64xf32, #tpu.memory_space<vmem>>, vector<16x64xf32>
    %c80_43 = arith.constant 80 : index
    %c0_44 = arith.constant 0 : index
    %39 = vector.load %arg6[%c80_43, %c0_44] : memref<272x64xf32, #tpu.memory_space<vmem>>, vector<16x64xf32>
    %40 = arith.maximumf %38, %39 : vector<16x64xf32>
    %c96 = arith.constant 96 : index
    %c0_45 = arith.constant 0 : index
    %41 = vector.load %arg6[%c96, %c0_45] : memref<272x64xf32, #tpu.memory_space<vmem>>, vector<16x64xf32>
    %42 = arith.maximumf %40, %41 : vector<16x64xf32>
    %c8_46 = arith.constant 8 : index
    %c0_47 = arith.constant 0 : index
    %43 = vector.load %arg7[%c8_46, %c0_47] : memref<24x64xf32, #tpu.memory_space<vmem>>, vector<16x64xf32>
    tpu.vector_store %arg7[%c8_46, %c0_47], %42 {strides = array<i32>} : memref<24x64xf32, #tpu.memory_space<vmem>>, vector<16x64xf32>,
    %c7_48 = arith.constant 7 : index
    %c0_49 = arith.constant 0 : index
    %44 = tpu.strided_load %arg7[%c7_48, %c0_49] {strides = array<i32: 2, 1>} : memref<24x64xf32, #tpu.memory_space<vmem>>, vector<8x64xf32>
    %c8_50 = arith.constant 8 : index
    %c0_51 = arith.constant 0 : index
    %45 = tpu.strided_load %arg7[%c8_50, %c0_51] {strides = array<i32: 2, 1>} : memref<24x64xf32, #tpu.memory_space<vmem>>, vector<8x64xf32>
    %46 = arith.maximumf %44, %45 : vector<8x64xf32>
    %c9_52 = arith.constant 9 : index
    %c0_53 = arith.constant 0 : index
    %47 = tpu.strided_load %arg7[%c9_52, %c0_53] {strides = array<i32: 2, 1>} : memref<24x64xf32, #tpu.memory_space<vmem>>, vector<8x64xf32>
    %48 = arith.maximumf %46, %47 : vector<8x64xf32>
    %c32_54 = arith.constant 32 : index
    %c0_55 = arith.constant 0 : index
    %49 = vector.load %arg8[%c32_54, %c0_55] : memref<96x64xf32, #tpu.memory_space<vmem>>, vector<8x64xf32>
    tpu.vector_store %arg8[%c32_54, %c0_55], %48 {strides = array<i32>} : memref<96x64xf32, #tpu.memory_space<vmem>>, vector<8x64xf32>,
    %c96_56 = arith.constant 96 : index
    %c0_57 = arith.constant 0 : index
    %50 = vector.load %arg6[%c96_56, %c0_57] : memref<272x64xf32, #tpu.memory_space<vmem>>, vector<16x64xf32>
    %c112 = arith.constant 112 : index
    %c0_58 = arith.constant 0 : index
    %51 = vector.load %arg6[%c112, %c0_58] : memref<272x64xf32, #tpu.memory_space<vmem>>, vector<16x64xf32>
    %52 = arith.maximumf %50, %51 : vector<16x64xf32>
    %c128 = arith.constant 128 : index
    %c0_59 = arith.constant 0 : index
    %53 = vector.load %arg6[%c128, %c0_59] : memref<272x64xf32, #tpu.memory_space<vmem>>, vector<16x64xf32>
    %54 = arith.maximumf %52, %53 : vector<16x64xf32>
    %c8_60 = arith.constant 8 : index
    %c0_61 = arith.constant 0 : index
    %55 = vector.load %arg7[%c8_60, %c0_61] : memref<24x64xf32, #tpu.memory_space<vmem>>, vector<16x64xf32>
    tpu.vector_store %arg7[%c8_60, %c0_61], %54 {strides = array<i32>} : memref<24x64xf32, #tpu.memory_space<vmem>>, vector<16x64xf32>,
    %c7_62 = arith.constant 7 : index
    %c0_63 = arith.constant 0 : index
    %56 = tpu.strided_load %arg7[%c7_62, %c0_63] {strides = array<i32: 2, 1>} : memref<24x64xf32, #tpu.memory_space<vmem>>, vector<8x64xf32>
    %c8_64 = arith.constant 8 : index
    %c0_65 = arith.constant 0 : index
    %57 = tpu.strided_load %arg7[%c8_64, %c0_65] {strides = array<i32: 2, 1>} : memref<24x64xf32, #tpu.memory_space<vmem>>, vector<8x64xf32>
    %58 = arith.maximumf %56, %57 : vector<8x64xf32>
    %c9_66 = arith.constant 9 : index
    %c0_67 = arith.constant 0 : index
    %59 = tpu.strided_load %arg7[%c9_66, %c0_67] {strides = array<i32: 2, 1>} : memref<24x64xf32, #tpu.memory_space<vmem>>, vector<8x64xf32>
    %60 = arith.maximumf %58, %59 : vector<8x64xf32>
    %c40 = arith.constant 40 : index
    %c0_68 = arith.constant 0 : index
    %61 = vector.load %arg8[%c40, %c0_68] : memref<96x64xf32, #tpu.memory_space<vmem>>, vector<8x64xf32>
    tpu.vector_store %arg8[%c40, %c0_68], %60 {strides = array<i32>} : memref<96x64xf32, #tpu.memory_space<vmem>>, vector<8x64xf32>,
    %c128_69 = arith.constant 128 : index
    %c0_70 = arith.constant 0 : index
    %62 = vector.load %arg6[%c128_69, %c0_70] : memref<272x64xf32, #tpu.memory_space<vmem>>, vector<16x64xf32>
    %c144 = arith.constant 144 : index
    %c0_71 = arith.constant 0 : index
    %63 = vector.load %arg6[%c144, %c0_71] : memref<272x64xf32, #tpu.memory_space<vmem>>, vector<16x64xf32>
    %64 = arith.maximumf %62, %63 : vector<16x64xf32>
    %c160 = arith.constant 160 : index
    %c0_72 = arith.constant 0 : index
    %65 = vector.load %arg6[%c160, %c0_72] : memref<272x64xf32, #tpu.memory_space<vmem>>, vector<16x64xf32>
    %66 = arith.maximumf %64, %65 : vector<16x64xf32>
    %c8_73 = arith.constant 8 : index
    %c0_74 = arith.constant 0 : index
    %67 = vector.load %arg7[%c8_73, %c0_74] : memref<24x64xf32, #tpu.memory_space<vmem>>, vector<16x64xf32>
    tpu.vector_store %arg7[%c8_73, %c0_74], %66 {strides = array<i32>} : memref<24x64xf32, #tpu.memory_space<vmem>>, vector<16x64xf32>,
    %c7_75 = arith.constant 7 : index
    %c0_76 = arith.constant 0 : index
    %68 = tpu.strided_load %arg7[%c7_75, %c0_76] {strides = array<i32: 2, 1>} : memref<24x64xf32, #tpu.memory_space<vmem>>, vector<8x64xf32>
    %c8_77 = arith.constant 8 : index
    %c0_78 = arith.constant 0 : index
    %69 = tpu.strided_load %arg7[%c8_77, %c0_78] {strides = array<i32: 2, 1>} : memref<24x64xf32, #tpu.memory_space<vmem>>, vector<8x64xf32>
    %70 = arith.maximumf %68, %69 : vector<8x64xf32>
    %c9_79 = arith.constant 9 : index
    %c0_80 = arith.constant 0 : index
    %71 = tpu.strided_load %arg7[%c9_79, %c0_80] {strides = array<i32: 2, 1>} : memref<24x64xf32, #tpu.memory_space<vmem>>, vector<8x64xf32>
    %72 = arith.maximumf %70, %71 : vector<8x64xf32>
    %c48_81 = arith.constant 48 : index
    %c0_82 = arith.constant 0 : index
    %73 = vector.load %arg8[%c48_81, %c0_82] : memref<96x64xf32, #tpu.memory_space<vmem>>, vector<8x64xf32>
    tpu.vector_store %arg8[%c48_81, %c0_82], %72 {strides = array<i32>} : memref<96x64xf32, #tpu.memory_space<vmem>>, vector<8x64xf32>,
    %c160_83 = arith.constant 160 : index
    %c0_84 = arith.constant 0 : index
    %74 = vector.load %arg6[%c160_83, %c0_84] : memref<272x64xf32, #tpu.memory_space<vmem>>, vector<16x64xf32>
    %c176 = arith.constant 176 : index
    %c0_85 = arith.constant 0 : index
    %75 = vector.load %arg6[%c176, %c0_85] : memref<272x64xf32, #tpu.memory_space<vmem>>, vector<16x64xf32>
    %76 = arith.maximumf %74, %75 : vector<16x64xf32>
    %c192 = arith.constant 192 : index
    %c0_86 = arith.constant 0 : index
    %77 = vector.load %arg6[%c192, %c0_86] : memref<272x64xf32, #tpu.memory_space<vmem>>, vector<16x64xf32>
    %78 = arith.maximumf %76, %77 : vector<16x64xf32>
    %c8_87 = arith.constant 8 : index
    %c0_88 = arith.constant 0 : index
    %79 = vector.load %arg7[%c8_87, %c0_88] : memref<24x64xf32, #tpu.memory_space<vmem>>, vector<16x64xf32>
    tpu.vector_store %arg7[%c8_87, %c0_88], %78 {strides = array<i32>} : memref<24x64xf32, #tpu.memory_space<vmem>>, vector<16x64xf32>,
    %c7_89 = arith.constant 7 : index
    %c0_90 = arith.constant 0 : index
    %80 = tpu.strided_load %arg7[%c7_89, %c0_90] {strides = array<i32: 2, 1>} : memref<24x64xf32, #tpu.memory_space<vmem>>, vector<8x64xf32>
    %c8_91 = arith.constant 8 : index
    %c0_92 = arith.constant 0 : index
    %81 = tpu.strided_load %arg7[%c8_91, %c0_92] {strides = array<i32: 2, 1>} : memref<24x64xf32, #tpu.memory_space<vmem>>, vector<8x64xf32>
    %82 = arith.maximumf %80, %81 : vector<8x64xf32>
    %c9_93 = arith.constant 9 : index
    %c0_94 = arith.constant 0 : index
    %83 = tpu.strided_load %arg7[%c9_93, %c0_94] {strides = array<i32: 2, 1>} : memref<24x64xf32, #tpu.memory_space<vmem>>, vector<8x64xf32>
    %84 = arith.maximumf %82, %83 : vector<8x64xf32>
    %c56 = arith.constant 56 : index
    %c0_95 = arith.constant 0 : index
    %85 = vector.load %arg8[%c56, %c0_95] : memref<96x64xf32, #tpu.memory_space<vmem>>, vector<8x64xf32>
    tpu.vector_store %arg8[%c56, %c0_95], %84 {strides = array<i32>} : memref<96x64xf32, #tpu.memory_space<vmem>>, vector<8x64xf32>,
    %c192_96 = arith.constant 192 : index
    %c0_97 = arith.constant 0 : index
    %86 = vector.load %arg6[%c192_96, %c0_97] : memref<272x64xf32, #tpu.memory_space<vmem>>, vector<16x64xf32>
    %c208 = arith.constant 208 : index
    %c0_98 = arith.constant 0 : index
    %87 = vector.load %arg6[%c208, %c0_98] : memref<272x64xf32, #tpu.memory_space<vmem>>, vector<16x64xf32>
    %88 = arith.maximumf %86, %87 : vector<16x64xf32>
    %c224 = arith.constant 224 : index
    %c0_99 = arith.constant 0 : index
    %89 = vector.load %arg6[%c224, %c0_99] : memref<272x64xf32, #tpu.memory_space<vmem>>, vector<16x64xf32>
    %90 = arith.maximumf %88, %89 : vector<16x64xf32>
    %c8_100 = arith.constant 8 : index
    %c0_101 = arith.constant 0 : index
    %91 = vector.load %arg7[%c8_100, %c0_101] : memref<24x64xf32, #tpu.memory_space<vmem>>, vector<16x64xf32>
    tpu.vector_store %arg7[%c8_100, %c0_101], %90 {strides = array<i32>} : memref<24x64xf32, #tpu.memory_space<vmem>>, vector<16x64xf32>,
    %c7_102 = arith.constant 7 : index
    %c0_103 = arith.constant 0 : index
    %92 = tpu.strided_load %arg7[%c7_102, %c0_103] {strides = array<i32: 2, 1>} : memref<24x64xf32, #tpu.memory_space<vmem>>, vector<8x64xf32>
    %c8_104 = arith.constant 8 : index
    %c0_105 = arith.constant 0 : index
    %93 = tpu.strided_load %arg7[%c8_104, %c0_105] {strides = array<i32: 2, 1>} : memref<24x64xf32, #tpu.memory_space<vmem>>, vector<8x64xf32>
    %94 = arith.maximumf %92, %93 : vector<8x64xf32>
    %c9_106 = arith.constant 9 : index
    %c0_107 = arith.constant 0 : index
    %95 = tpu.strided_load %arg7[%c9_106, %c0_107] {strides = array<i32: 2, 1>} : memref<24x64xf32, #tpu.memory_space<vmem>>, vector<8x64xf32>
    %96 = arith.maximumf %94, %95 : vector<8x64xf32>
    %c64_108 = arith.constant 64 : index
    %c0_109 = arith.constant 0 : index
    %97 = vector.load %arg8[%c64_108, %c0_109] : memref<96x64xf32, #tpu.memory_space<vmem>>, vector<8x64xf32>
    tpu.vector_store %arg8[%c64_108, %c0_109], %96 {strides = array<i32>} : memref<96x64xf32, #tpu.memory_space<vmem>>, vector<8x64xf32>,
    %c224_110 = arith.constant 224 : index
    %c0_111 = arith.constant 0 : index
    %98 = vector.load %arg6[%c224_110, %c0_111] : memref<272x64xf32, #tpu.memory_space<vmem>>, vector<16x64xf32>
    %c240 = arith.constant 240 : index
    %c0_112 = arith.constant 0 : index
    %99 = vector.load %arg6[%c240, %c0_112] : memref<272x64xf32, #tpu.memory_space<vmem>>, vector<16x64xf32>
    %100 = arith.maximumf %98, %99 : vector<16x64xf32>
    %c256 = arith.constant 256 : index
    %c0_113 = arith.constant 0 : index
    %101 = vector.load %arg6[%c256, %c0_113] : memref<272x64xf32, #tpu.memory_space<vmem>>, vector<16x64xf32>
    %102 = arith.maximumf %100, %101 : vector<16x64xf32>
    %c8_114 = arith.constant 8 : index
    %c0_115 = arith.constant 0 : index
    %103 = vector.load %arg7[%c8_114, %c0_115] : memref<24x64xf32, #tpu.memory_space<vmem>>, vector<16x64xf32>
    tpu.vector_store %arg7[%c8_114, %c0_115], %102 {strides = array<i32>} : memref<24x64xf32, #tpu.memory_space<vmem>>, vector<16x64xf32>,
    %c7_116 = arith.constant 7 : index
    %c0_117 = arith.constant 0 : index
    %104 = tpu.strided_load %arg7[%c7_116, %c0_117] {strides = array<i32: 2, 1>} : memref<24x64xf32, #tpu.memory_space<vmem>>, vector<8x64xf32>
    %c8_118 = arith.constant 8 : index
    %c0_119 = arith.constant 0 : index
    %105 = tpu.strided_load %arg7[%c8_118, %c0_119] {strides = array<i32: 2, 1>} : memref<24x64xf32, #tpu.memory_space<vmem>>, vector<8x64xf32>
    %106 = arith.maximumf %104, %105 : vector<8x64xf32>
    %c9_120 = arith.constant 9 : index
    %c0_121 = arith.constant 0 : index
    %107 = tpu.strided_load %arg7[%c9_120, %c0_121] {strides = array<i32: 2, 1>} : memref<24x64xf32, #tpu.memory_space<vmem>>, vector<8x64xf32>
    %108 = arith.maximumf %106, %107 : vector<8x64xf32>
    %c72 = arith.constant 72 : index
    %c0_122 = arith.constant 0 : index
    %109 = vector.load %arg8[%c72, %c0_122] : memref<96x64xf32, #tpu.memory_space<vmem>>, vector<8x64xf32>
    tpu.vector_store %arg8[%c72, %c0_122], %108 {strides = array<i32>} : memref<96x64xf32, #tpu.memory_space<vmem>>, vector<8x64xf32>,
    %110 = tpu.iota {dimensions = array<i32: 0>} : vector<64x1xi32>
    %c8_i32 = arith.constant 8 : i32
    %c0_i32 = arith.constant 0 : i32
    %111 = arith.cmpi eq, %c8_i32, %c0_i32 : i32
    %c1_i32 = arith.constant 1 : i32
    %112 = arith.select %111, %c1_i32, %c8_i32 : i32
    %113 = vector.broadcast %112 : i32 to vector<64x1xi32>
    %114 = arith.remsi %110, %113 : vector<64x1xi32>
    %c0_i32_123 = arith.constant 0 : i32
    %115 = vector.broadcast %c0_i32_123 : i32 to vector<64x1xi32>
    %116 = arith.cmpi ne, %114, %115 : vector<64x1xi32>
    %c0_i32_124 = arith.constant 0 : i32
    %117 = vector.broadcast %c0_i32_124 : i32 to vector<64x1xi32>
    %118 = arith.cmpi slt, %114, %117 : vector<64x1xi32>
    %c0_i32_125 = arith.constant 0 : i32
    %119 = arith.cmpi slt, %112, %c0_i32_125 : i32
    %120 = vector.broadcast %119 : i1 to vector<64x1xi1>
    %121 = vector.broadcast %120 : vector<64x1xi1> to vector<64x1xi1>
    %122 = arith.xori %118, %121 : vector<64x1xi1>
    %123 = arith.andi %122, %116 : vector<64x1xi1>
    %124 = vector.broadcast %112 : i32 to vector<64x1xi32>
    %125 = arith.addi %114, %124 : vector<64x1xi32>
    %126 = arith.select %123, %125, %114 : vector<64x1xi1>, vector<64x1xi32>
    %c1_i32_126 = arith.constant 1 : i32
    %127 = vector.broadcast %c1_i32_126 : i32 to vector<64x1xi32>
    %128 = arith.cmpi sge, %126, %127 : vector<64x1xi32>
    %c7_i32 = arith.constant 7 : i32
    %129 = vector.broadcast %c7_i32 : i32 to vector<64x1xi32>
    %130 = arith.cmpi slt, %126, %129 : vector<64x1xi32>
    %c16_127 = arith.constant 16 : index
    %c0_128 = arith.constant 0 : index
    %131 = vector.load %arg8[%c16_127, %c0_128] : memref<96x64xf32, #tpu.memory_space<vmem>>, vector<64x64xf32>
    %c7_129 = arith.constant 7 : index
    %c0_130 = arith.constant 0 : index
    %132 = vector.load %arg8[%c7_129, %c0_130] : memref<96x64xf32, #tpu.memory_space<vmem>>, vector<64x64xf32>
    %cst_131 = arith.constant 0.000000e+00 : f32
    %133 = vector.shape_cast %128 : vector<64x1xi1> to vector<64x1xi1>
    %134 = vector.broadcast %133 : vector<64x1xi1> to vector<64x64xi1>
    %135 = vector.broadcast %cst_131 : f32 to vector<64x64xf32>
    %136 = arith.select %134, %132, %135 : vector<64x64xi1>, vector<64x64xf32>
    %c0_132 = arith.constant 0 : index
    %c0_133 = arith.constant 0 : index
    %137 = vector.load %arg9[%c0_132, %c0_133] : memref<64x576xf32, #tpu.memory_space<vmem>>, vector<64x64xf32>
    tpu.vector_store %arg9[%c0_132, %c0_133], %136 {strides = array<i32>} : memref<64x576xf32, #tpu.memory_space<vmem>>, vector<64x64xf32>,
    %c8_134 = arith.constant 8 : index
    %c0_135 = arith.constant 0 : index
    %138 = vector.load %arg8[%c8_134, %c0_135] : memref<96x64xf32, #tpu.memory_space<vmem>>, vector<64x64xf32>
    %c0_136 = arith.constant 0 : index
    %c64_137 = arith.constant 64 : index
    %139 = vector.load %arg9[%c0_136, %c64_137] : memref<64x576xf32, #tpu.memory_space<vmem>>, vector<64x64xf32>
    tpu.vector_store %arg9[%c0_136, %c64_137], %138 {strides = array<i32>} : memref<64x576xf32, #tpu.memory_space<vmem>>, vector<64x64xf32>,
    %c9_138 = arith.constant 9 : index
    %c0_139 = arith.constant 0 : index
    %140 = vector.load %arg8[%c9_138, %c0_139] : memref<96x64xf32, #tpu.memory_space<vmem>>, vector<64x64xf32>
    %cst_140 = arith.constant 0.000000e+00 : f32
    %141 = vector.shape_cast %130 : vector<64x1xi1> to vector<64x1xi1>
    %142 = vector.broadcast %141 : vector<64x1xi1> to vector<64x64xi1>
    %143 = vector.broadcast %cst_140 : f32 to vector<64x64xf32>
    %144 = arith.select %142, %140, %143 : vector<64x64xi1>, vector<64x64xf32>
    %c0_141 = arith.constant 0 : index
    %c128_142 = arith.constant 128 : index
    %145 = vector.load %arg9[%c0_141, %c128_142] : memref<64x576xf32, #tpu.memory_space<vmem>>, vector<64x64xf32>
    tpu.vector_store %arg9[%c0_141, %c128_142], %144 {strides = array<i32>} : memref<64x576xf32, #tpu.memory_space<vmem>>, vector<64x64xf32>,
    %c15 = arith.constant 15 : index
    %c0_143 = arith.constant 0 : index
    %146 = vector.load %arg8[%c15, %c0_143] : memref<96x64xf32, #tpu.memory_space<vmem>>, vector<64x64xf32>
    %cst_144 = arith.constant 0.000000e+00 : f32
    %147 = vector.shape_cast %128 : vector<64x1xi1> to vector<64x1xi1>
    %148 = vector.broadcast %147 : vector<64x1xi1> to vector<64x64xi1>
    %149 = vector.broadcast %cst_144 : f32 to vector<64x64xf32>
    %150 = arith.select %148, %146, %149 : vector<64x64xi1>, vector<64x64xf32>
    %c0_145 = arith.constant 0 : index
    %c192_146 = arith.constant 192 : index
    %151 = vector.load %arg9[%c0_145, %c192_146] : memref<64x576xf32, #tpu.memory_space<vmem>>, vector<64x64xf32>
    tpu.vector_store %arg9[%c0_145, %c192_146], %150 {strides = array<i32>} : memref<64x576xf32, #tpu.memory_space<vmem>>, vector<64x64xf32>,
    %c16_147 = arith.constant 16 : index
    %c0_148 = arith.constant 0 : index
    %152 = vector.load %arg8[%c16_147, %c0_148] : memref<96x64xf32, #tpu.memory_space<vmem>>, vector<64x64xf32>
    %c0_149 = arith.constant 0 : index
    %c256_150 = arith.constant 256 : index
    %153 = vector.load %arg9[%c0_149, %c256_150] : memref<64x576xf32, #tpu.memory_space<vmem>>, vector<64x64xf32>
    tpu.vector_store %arg9[%c0_149, %c256_150], %152 {strides = array<i32>} : memref<64x576xf32, #tpu.memory_space<vmem>>, vector<64x64xf32>,
    %c17 = arith.constant 17 : index
    %c0_151 = arith.constant 0 : index
    %154 = vector.load %arg8[%c17, %c0_151] : memref<96x64xf32, #tpu.memory_space<vmem>>, vector<64x64xf32>
    %cst_152 = arith.constant 0.000000e+00 : f32
    %155 = vector.shape_cast %130 : vector<64x1xi1> to vector<64x1xi1>
    %156 = vector.broadcast %155 : vector<64x1xi1> to vector<64x64xi1>
    %157 = vector.broadcast %cst_152 : f32 to vector<64x64xf32>
    %158 = arith.select %156, %154, %157 : vector<64x64xi1>, vector<64x64xf32>
    %c0_153 = arith.constant 0 : index
    %c320 = arith.constant 320 : index
    %159 = vector.load %arg9[%c0_153, %c320] : memref<64x576xf32, #tpu.memory_space<vmem>>, vector<64x64xf32>
    tpu.vector_store %arg9[%c0_153, %c320], %158 {strides = array<i32>} : memref<64x576xf32, #tpu.memory_space<vmem>>, vector<64x64xf32>,
    %c23 = arith.constant 23 : index
    %c0_154 = arith.constant 0 : index
    %160 = vector.load %arg8[%c23, %c0_154] : memref<96x64xf32, #tpu.memory_space<vmem>>, vector<64x64xf32>
    %cst_155 = arith.constant 0.000000e+00 : f32
    %161 = vector.shape_cast %128 : vector<64x1xi1> to vector<64x1xi1>
    %162 = vector.broadcast %161 : vector<64x1xi1> to vector<64x64xi1>
    %163 = vector.broadcast %cst_155 : f32 to vector<64x64xf32>
    %164 = arith.select %162, %160, %163 : vector<64x64xi1>, vector<64x64xf32>
    %c0_156 = arith.constant 0 : index
    %c384 = arith.constant 384 : index
    %165 = vector.load %arg9[%c0_156, %c384] : memref<64x576xf32, #tpu.memory_space<vmem>>, vector<64x64xf32>
    tpu.vector_store %arg9[%c0_156, %c384], %164 {strides = array<i32>} : memref<64x576xf32, #tpu.memory_space<vmem>>, vector<64x64xf32>,
    %c24_157 = arith.constant 24 : index
    %c0_158 = arith.constant 0 : index
    %166 = vector.load %arg8[%c24_157, %c0_158] : memref<96x64xf32, #tpu.memory_space<vmem>>, vector<64x64xf32>
    %c0_159 = arith.constant 0 : index
    %c448 = arith.constant 448 : index
    %167 = vector.load %arg9[%c0_159, %c448] : memref<64x576xf32, #tpu.memory_space<vmem>>, vector<64x64xf32>
    tpu.vector_store %arg9[%c0_159, %c448], %166 {strides = array<i32>} : memref<64x576xf32, #tpu.memory_space<vmem>>, vector<64x64xf32>,
    %c25 = arith.constant 25 : index
    %c0_160 = arith.constant 0 : index
    %168 = vector.load %arg8[%c25, %c0_160] : memref<96x64xf32, #tpu.memory_space<vmem>>, vector<64x64xf32>
    %cst_161 = arith.constant 0.000000e+00 : f32
    %169 = vector.shape_cast %130 : vector<64x1xi1> to vector<64x1xi1>
    %170 = vector.broadcast %169 : vector<64x1xi1> to vector<64x64xi1>
    %171 = vector.broadcast %cst_161 : f32 to vector<64x64xf32>
    %172 = arith.select %170, %168, %171 : vector<64x64xi1>, vector<64x64xf32>
    %c0_162 = arith.constant 0 : index
    %c512 = arith.constant 512 : index
    %173 = vector.load %arg9[%c0_162, %c512] : memref<64x576xf32, #tpu.memory_space<vmem>>, vector<64x64xf32>
    tpu.vector_store %arg9[%c0_162, %c512], %172 {strides = array<i32>} : memref<64x576xf32, #tpu.memory_space<vmem>>, vector<64x64xf32>,
    %c0_163 = arith.constant 0 : index
    %c0_164 = arith.constant 0 : index
    %174 = vector.load %arg9[%c0_163, %c0_164] : memref<64x576xf32, #tpu.memory_space<vmem>>, vector<64x576xf32>
    %c0_165 = arith.constant 0 : index
    %c0_166 = arith.constant 0 : index
    %c0_167 = arith.constant 0 : index
    %175 = vector.load %arg3[%c0_165, %c0_166, %c0_167] : memref<4x576x64xf32, #tpu.memory_space<vmem>>, vector<1x576x64xf32>
    %176 = vector.shape_cast %175 : vector<1x576x64xf32> to vector<576x64xf32>
    %cst_168 = arith.constant dense<0.000000e+00> : vector<64x64xf32>
    %177 = tpu.matmul %174, %176, %cst_168 {dimension_numbers = #tpu.dot_dimension_numbers<[1], [0], [0], [1], [0, 0, 1, 1], [], []>} : vector<64x576xf32>, vector<576x64xf32>, vector<64x64xf32> -> vector<64x64xf32>
    %c0_169 = arith.constant 0 : index
    %c0_170 = arith.constant 0 : index
    %c0_171 = arith.constant 0 : index
    %178 = vector.load %arg4[%c0_169, %c0_170, %c0_171] : memref<4x1x64xf32, #tpu.memory_space<vmem>>, vector<1x1x64xf32>
    %179 = vector.shape_cast %178 : vector<1x1x64xf32> to vector<1x64xf32>
    %180 = vector.broadcast %179 : vector<1x64xf32> to vector<64x64xf32>
    %181 = arith.addf %177, %180 : vector<64x64xf32>
    %cst_172 = arith.constant 0.000000e+00 : f32
    %182 = vector.broadcast %cst_172 : f32 to vector<64x64xf32>
    %183 = arith.maximumf %181, %182 : vector<64x64xf32>
    %c16_173 = arith.constant 16 : index
    %c0_174 = arith.constant 0 : index
    %184 = vector.load %arg8[%c16_173, %c0_174] : memref<96x64xf32, #tpu.memory_space<vmem>>, vector<64x64xf32>
    tpu.vector_store %arg8[%c16_173, %c0_174], %183 {strides = array<i32>} : memref<96x64xf32, #tpu.memory_space<vmem>>, vector<64x64xf32>,
    %c7_175 = arith.constant 7 : index
    %c0_176 = arith.constant 0 : index
    %185 = vector.load %arg8[%c7_175, %c0_176] : memref<96x64xf32, #tpu.memory_space<vmem>>, vector<64x64xf32>
    %cst_177 = arith.constant 0.000000e+00 : f32
    %186 = vector.shape_cast %128 : vector<64x1xi1> to vector<64x1xi1>
    %187 = vector.broadcast %186 : vector<64x1xi1> to vector<64x64xi1>
    %188 = vector.broadcast %cst_177 : f32 to vector<64x64xf32>
    %189 = arith.select %187, %185, %188 : vector<64x64xi1>, vector<64x64xf32>
    %c0_178 = arith.constant 0 : index
    %c0_179 = arith.constant 0 : index
    %190 = vector.load %arg9[%c0_178, %c0_179] : memref<64x576xf32, #tpu.memory_space<vmem>>, vector<64x64xf32>
    tpu.vector_store %arg9[%c0_178, %c0_179], %189 {strides = array<i32>} : memref<64x576xf32, #tpu.memory_space<vmem>>, vector<64x64xf32>,
    %c8_180 = arith.constant 8 : index
    %c0_181 = arith.constant 0 : index
    %191 = vector.load %arg8[%c8_180, %c0_181] : memref<96x64xf32, #tpu.memory_space<vmem>>, vector<64x64xf32>
    %c0_182 = arith.constant 0 : index
    %c64_183 = arith.constant 64 : index
    %192 = vector.load %arg9[%c0_182, %c64_183] : memref<64x576xf32, #tpu.memory_space<vmem>>, vector<64x64xf32>
    tpu.vector_store %arg9[%c0_182, %c64_183], %191 {strides = array<i32>} : memref<64x576xf32, #tpu.memory_space<vmem>>, vector<64x64xf32>,
    %c9_184 = arith.constant 9 : index
    %c0_185 = arith.constant 0 : index
    %193 = vector.load %arg8[%c9_184, %c0_185] : memref<96x64xf32, #tpu.memory_space<vmem>>, vector<64x64xf32>
    %cst_186 = arith.constant 0.000000e+00 : f32
    %194 = vector.shape_cast %130 : vector<64x1xi1> to vector<64x1xi1>
    %195 = vector.broadcast %194 : vector<64x1xi1> to vector<64x64xi1>
    %196 = vector.broadcast %cst_186 : f32 to vector<64x64xf32>
    %197 = arith.select %195, %193, %196 : vector<64x64xi1>, vector<64x64xf32>
    %c0_187 = arith.constant 0 : index
    %c128_188 = arith.constant 128 : index
    %198 = vector.load %arg9[%c0_187, %c128_188] : memref<64x576xf32, #tpu.memory_space<vmem>>, vector<64x64xf32>
    tpu.vector_store %arg9[%c0_187, %c128_188], %197 {strides = array<i32>} : memref<64x576xf32, #tpu.memory_space<vmem>>, vector<64x64xf32>,
    %c15_189 = arith.constant 15 : index
    %c0_190 = arith.constant 0 : index
    %199 = vector.load %arg8[%c15_189, %c0_190] : memref<96x64xf32, #tpu.memory_space<vmem>>, vector<64x64xf32>
    %cst_191 = arith.constant 0.000000e+00 : f32
    %200 = vector.shape_cast %128 : vector<64x1xi1> to vector<64x1xi1>
    %201 = vector.broadcast %200 : vector<64x1xi1> to vector<64x64xi1>
    %202 = vector.broadcast %cst_191 : f32 to vector<64x64xf32>
    %203 = arith.select %201, %199, %202 : vector<64x64xi1>, vector<64x64xf32>
    %c0_192 = arith.constant 0 : index
    %c192_193 = arith.constant 192 : index
    %204 = vector.load %arg9[%c0_192, %c192_193] : memref<64x576xf32, #tpu.memory_space<vmem>>, vector<64x64xf32>
    tpu.vector_store %arg9[%c0_192, %c192_193], %203 {strides = array<i32>} : memref<64x576xf32, #tpu.memory_space<vmem>>, vector<64x64xf32>,
    %c16_194 = arith.constant 16 : index
    %c0_195 = arith.constant 0 : index
    %205 = vector.load %arg8[%c16_194, %c0_195] : memref<96x64xf32, #tpu.memory_space<vmem>>, vector<64x64xf32>
    %c0_196 = arith.constant 0 : index
    %c256_197 = arith.constant 256 : index
    %206 = vector.load %arg9[%c0_196, %c256_197] : memref<64x576xf32, #tpu.memory_space<vmem>>, vector<64x64xf32>
    tpu.vector_store %arg9[%c0_196, %c256_197], %205 {strides = array<i32>} : memref<64x576xf32, #tpu.memory_space<vmem>>, vector<64x64xf32>,
    %c17_198 = arith.constant 17 : index
    %c0_199 = arith.constant 0 : index
    %207 = vector.load %arg8[%c17_198, %c0_199] : memref<96x64xf32, #tpu.memory_space<vmem>>, vector<64x64xf32>
    %cst_200 = arith.constant 0.000000e+00 : f32
    %208 = vector.shape_cast %130 : vector<64x1xi1> to vector<64x1xi1>
    %209 = vector.broadcast %208 : vector<64x1xi1> to vector<64x64xi1>
    %210 = vector.broadcast %cst_200 : f32 to vector<64x64xf32>
    %211 = arith.select %209, %207, %210 : vector<64x64xi1>, vector<64x64xf32>
    %c0_201 = arith.constant 0 : index
    %c320_202 = arith.constant 320 : index
    %212 = vector.load %arg9[%c0_201, %c320_202] : memref<64x576xf32, #tpu.memory_space<vmem>>, vector<64x64xf32>
    tpu.vector_store %arg9[%c0_201, %c320_202], %211 {strides = array<i32>} : memref<64x576xf32, #tpu.memory_space<vmem>>, vector<64x64xf32>,
    %c23_203 = arith.constant 23 : index
    %c0_204 = arith.constant 0 : index
    %213 = vector.load %arg8[%c23_203, %c0_204] : memref<96x64xf32, #tpu.memory_space<vmem>>, vector<64x64xf32>
    %cst_205 = arith.constant 0.000000e+00 : f32
    %214 = vector.shape_cast %128 : vector<64x1xi1> to vector<64x1xi1>
    %215 = vector.broadcast %214 : vector<64x1xi1> to vector<64x64xi1>
    %216 = vector.broadcast %cst_205 : f32 to vector<64x64xf32>
    %217 = arith.select %215, %213, %216 : vector<64x64xi1>, vector<64x64xf32>
    %c0_206 = arith.constant 0 : index
    %c384_207 = arith.constant 384 : index
    %218 = vector.load %arg9[%c0_206, %c384_207] : memref<64x576xf32, #tpu.memory_space<vmem>>, vector<64x64xf32>
    tpu.vector_store %arg9[%c0_206, %c384_207], %217 {strides = array<i32>} : memref<64x576xf32, #tpu.memory_space<vmem>>, vector<64x64xf32>,
    %c24_208 = arith.constant 24 : index
    %c0_209 = arith.constant 0 : index
    %219 = vector.load %arg8[%c24_208, %c0_209] : memref<96x64xf32, #tpu.memory_space<vmem>>, vector<64x64xf32>
    %c0_210 = arith.constant 0 : index
    %c448_211 = arith.constant 448 : index
    %220 = vector.load %arg9[%c0_210, %c448_211] : memref<64x576xf32, #tpu.memory_space<vmem>>, vector<64x64xf32>
    tpu.vector_store %arg9[%c0_210, %c448_211], %219 {strides = array<i32>} : memref<64x576xf32, #tpu.memory_space<vmem>>, vector<64x64xf32>,
    %c25_212 = arith.constant 25 : index
    %c0_213 = arith.constant 0 : index
    %221 = vector.load %arg8[%c25_212, %c0_213] : memref<96x64xf32, #tpu.memory_space<vmem>>, vector<64x64xf32>
    %cst_214 = arith.constant 0.000000e+00 : f32
    %222 = vector.shape_cast %130 : vector<64x1xi1> to vector<64x1xi1>
    %223 = vector.broadcast %222 : vector<64x1xi1> to vector<64x64xi1>
    %224 = vector.broadcast %cst_214 : f32 to vector<64x64xf32>
    %225 = arith.select %223, %221, %224 : vector<64x64xi1>, vector<64x64xf32>
    %c0_215 = arith.constant 0 : index
    %c512_216 = arith.constant 512 : index
    %226 = vector.load %arg9[%c0_215, %c512_216] : memref<64x576xf32, #tpu.memory_space<vmem>>, vector<64x64xf32>
    tpu.vector_store %arg9[%c0_215, %c512_216], %225 {strides = array<i32>} : memref<64x576xf32, #tpu.memory_space<vmem>>, vector<64x64xf32>,
    %c0_217 = arith.constant 0 : index
    %c0_218 = arith.constant 0 : index
    %227 = vector.load %arg9[%c0_217, %c0_218] : memref<64x576xf32, #tpu.memory_space<vmem>>, vector<64x576xf32>
    %c1 = arith.constant 1 : index
    %c0_219 = arith.constant 0 : index
    %c0_220 = arith.constant 0 : index
    %228 = vector.load %arg3[%c1, %c0_219, %c0_220] : memref<4x576x64xf32, #tpu.memory_space<vmem>>, vector<1x576x64xf32>
    %229 = vector.shape_cast %228 : vector<1x576x64xf32> to vector<576x64xf32>
    %cst_221 = arith.constant dense<0.000000e+00> : vector<64x64xf32>
    %230 = tpu.matmul %227, %229, %cst_221 {dimension_numbers = #tpu.dot_dimension_numbers<[1], [0], [0], [1], [0, 0, 1, 1], [], []>} : vector<64x576xf32>, vector<576x64xf32>, vector<64x64xf32> -> vector<64x64xf32>
    %c1_222 = arith.constant 1 : index
    %c0_223 = arith.constant 0 : index
    %c0_224 = arith.constant 0 : index
    %231 = vector.load %arg4[%c1_222, %c0_223, %c0_224] : memref<4x1x64xf32, #tpu.memory_space<vmem>>, vector<1x1x64xf32>
    %232 = vector.shape_cast %231 : vector<1x1x64xf32> to vector<1x64xf32>
    %233 = vector.broadcast %232 : vector<1x64xf32> to vector<64x64xf32>
    %234 = arith.addf %230, %233 : vector<64x64xf32>
    %235 = arith.addf %234, %131 : vector<64x64xf32>
    %cst_225 = arith.constant 0.000000e+00 : f32
    %236 = vector.broadcast %cst_225 : f32 to vector<64x64xf32>
    %237 = arith.maximumf %235, %236 : vector<64x64xf32>
    %c16_226 = arith.constant 16 : index
    %c0_227 = arith.constant 0 : index
    %238 = vector.load %arg8[%c16_226, %c0_227] : memref<96x64xf32, #tpu.memory_space<vmem>>, vector<64x64xf32>
    tpu.vector_store %arg8[%c16_226, %c0_227], %237 {strides = array<i32>} : memref<96x64xf32, #tpu.memory_space<vmem>>, vector<64x64xf32>,
    %c7_228 = arith.constant 7 : index
    %c0_229 = arith.constant 0 : index
    %239 = vector.load %arg8[%c7_228, %c0_229] : memref<96x64xf32, #tpu.memory_space<vmem>>, vector<64x64xf32>
    %cst_230 = arith.constant 0.000000e+00 : f32
    %240 = vector.shape_cast %128 : vector<64x1xi1> to vector<64x1xi1>
    %241 = vector.broadcast %240 : vector<64x1xi1> to vector<64x64xi1>
    %242 = vector.broadcast %cst_230 : f32 to vector<64x64xf32>
    %243 = arith.select %241, %239, %242 : vector<64x64xi1>, vector<64x64xf32>
    %c0_231 = arith.constant 0 : index
    %c0_232 = arith.constant 0 : index
    %244 = vector.load %arg9[%c0_231, %c0_232] : memref<64x576xf32, #tpu.memory_space<vmem>>, vector<64x64xf32>
    tpu.vector_store %arg9[%c0_231, %c0_232], %243 {strides = array<i32>} : memref<64x576xf32, #tpu.memory_space<vmem>>, vector<64x64xf32>,
    %c8_233 = arith.constant 8 : index
    %c0_234 = arith.constant 0 : index
    %245 = vector.load %arg8[%c8_233, %c0_234] : memref<96x64xf32, #tpu.memory_space<vmem>>, vector<64x64xf32>
    %c0_235 = arith.constant 0 : index
    %c64_236 = arith.constant 64 : index
    %246 = vector.load %arg9[%c0_235, %c64_236] : memref<64x576xf32, #tpu.memory_space<vmem>>, vector<64x64xf32>
    tpu.vector_store %arg9[%c0_235, %c64_236], %245 {strides = array<i32>} : memref<64x576xf32, #tpu.memory_space<vmem>>, vector<64x64xf32>,
    %c9_237 = arith.constant 9 : index
    %c0_238 = arith.constant 0 : index
    %247 = vector.load %arg8[%c9_237, %c0_238] : memref<96x64xf32, #tpu.memory_space<vmem>>, vector<64x64xf32>
    %cst_239 = arith.constant 0.000000e+00 : f32
    %248 = vector.shape_cast %130 : vector<64x1xi1> to vector<64x1xi1>
    %249 = vector.broadcast %248 : vector<64x1xi1> to vector<64x64xi1>
    %250 = vector.broadcast %cst_239 : f32 to vector<64x64xf32>
    %251 = arith.select %249, %247, %250 : vector<64x64xi1>, vector<64x64xf32>
    %c0_240 = arith.constant 0 : index
    %c128_241 = arith.constant 128 : index
    %252 = vector.load %arg9[%c0_240, %c128_241] : memref<64x576xf32, #tpu.memory_space<vmem>>, vector<64x64xf32>
    tpu.vector_store %arg9[%c0_240, %c128_241], %251 {strides = array<i32>} : memref<64x576xf32, #tpu.memory_space<vmem>>, vector<64x64xf32>,
    %c15_242 = arith.constant 15 : index
    %c0_243 = arith.constant 0 : index
    %253 = vector.load %arg8[%c15_242, %c0_243] : memref<96x64xf32, #tpu.memory_space<vmem>>, vector<64x64xf32>
    %cst_244 = arith.constant 0.000000e+00 : f32
    %254 = vector.shape_cast %128 : vector<64x1xi1> to vector<64x1xi1>
    %255 = vector.broadcast %254 : vector<64x1xi1> to vector<64x64xi1>
    %256 = vector.broadcast %cst_244 : f32 to vector<64x64xf32>
    %257 = arith.select %255, %253, %256 : vector<64x64xi1>, vector<64x64xf32>
    %c0_245 = arith.constant 0 : index
    %c192_246 = arith.constant 192 : index
    %258 = vector.load %arg9[%c0_245, %c192_246] : memref<64x576xf32, #tpu.memory_space<vmem>>, vector<64x64xf32>
    tpu.vector_store %arg9[%c0_245, %c192_246], %257 {strides = array<i32>} : memref<64x576xf32, #tpu.memory_space<vmem>>, vector<64x64xf32>,
    %c16_247 = arith.constant 16 : index
    %c0_248 = arith.constant 0 : index
    %259 = vector.load %arg8[%c16_247, %c0_248] : memref<96x64xf32, #tpu.memory_space<vmem>>, vector<64x64xf32>
    %c0_249 = arith.constant 0 : index
    %c256_250 = arith.constant 256 : index
    %260 = vector.load %arg9[%c0_249, %c256_250] : memref<64x576xf32, #tpu.memory_space<vmem>>, vector<64x64xf32>
    tpu.vector_store %arg9[%c0_249, %c256_250], %259 {strides = array<i32>} : memref<64x576xf32, #tpu.memory_space<vmem>>, vector<64x64xf32>,
    %c17_251 = arith.constant 17 : index
    %c0_252 = arith.constant 0 : index
    %261 = vector.load %arg8[%c17_251, %c0_252] : memref<96x64xf32, #tpu.memory_space<vmem>>, vector<64x64xf32>
    %cst_253 = arith.constant 0.000000e+00 : f32
    %262 = vector.shape_cast %130 : vector<64x1xi1> to vector<64x1xi1>
    %263 = vector.broadcast %262 : vector<64x1xi1> to vector<64x64xi1>
    %264 = vector.broadcast %cst_253 : f32 to vector<64x64xf32>
    %265 = arith.select %263, %261, %264 : vector<64x64xi1>, vector<64x64xf32>
    %c0_254 = arith.constant 0 : index
    %c320_255 = arith.constant 320 : index
    %266 = vector.load %arg9[%c0_254, %c320_255] : memref<64x576xf32, #tpu.memory_space<vmem>>, vector<64x64xf32>
    tpu.vector_store %arg9[%c0_254, %c320_255], %265 {strides = array<i32>} : memref<64x576xf32, #tpu.memory_space<vmem>>, vector<64x64xf32>,
    %c23_256 = arith.constant 23 : index
    %c0_257 = arith.constant 0 : index
    %267 = vector.load %arg8[%c23_256, %c0_257] : memref<96x64xf32, #tpu.memory_space<vmem>>, vector<64x64xf32>
    %cst_258 = arith.constant 0.000000e+00 : f32
    %268 = vector.shape_cast %128 : vector<64x1xi1> to vector<64x1xi1>
    %269 = vector.broadcast %268 : vector<64x1xi1> to vector<64x64xi1>
    %270 = vector.broadcast %cst_258 : f32 to vector<64x64xf32>
    %271 = arith.select %269, %267, %270 : vector<64x64xi1>, vector<64x64xf32>
    %c0_259 = arith.constant 0 : index
    %c384_260 = arith.constant 384 : index
    %272 = vector.load %arg9[%c0_259, %c384_260] : memref<64x576xf32, #tpu.memory_space<vmem>>, vector<64x64xf32>
    tpu.vector_store %arg9[%c0_259, %c384_260], %271 {strides = array<i32>} : memref<64x576xf32, #tpu.memory_space<vmem>>, vector<64x64xf32>,
    %c24_261 = arith.constant 24 : index
    %c0_262 = arith.constant 0 : index
    %273 = vector.load %arg8[%c24_261, %c0_262] : memref<96x64xf32, #tpu.memory_space<vmem>>, vector<64x64xf32>
    %c0_263 = arith.constant 0 : index
    %c448_264 = arith.constant 448 : index
    %274 = vector.load %arg9[%c0_263, %c448_264] : memref<64x576xf32, #tpu.memory_space<vmem>>, vector<64x64xf32>
    tpu.vector_store %arg9[%c0_263, %c448_264], %273 {strides = array<i32>} : memref<64x576xf32, #tpu.memory_space<vmem>>, vector<64x64xf32>,
    %c25_265 = arith.constant 25 : index
    %c0_266 = arith.constant 0 : index
    %275 = vector.load %arg8[%c25_265, %c0_266] : memref<96x64xf32, #tpu.memory_space<vmem>>, vector<64x64xf32>
    %cst_267 = arith.constant 0.000000e+00 : f32
    %276 = vector.shape_cast %130 : vector<64x1xi1> to vector<64x1xi1>
    %277 = vector.broadcast %276 : vector<64x1xi1> to vector<64x64xi1>
    %278 = vector.broadcast %cst_267 : f32 to vector<64x64xf32>
    %279 = arith.select %277, %275, %278 : vector<64x64xi1>, vector<64x64xf32>
    %c0_268 = arith.constant 0 : index
    %c512_269 = arith.constant 512 : index
    %280 = vector.load %arg9[%c0_268, %c512_269] : memref<64x576xf32, #tpu.memory_space<vmem>>, vector<64x64xf32>
    tpu.vector_store %arg9[%c0_268, %c512_269], %279 {strides = array<i32>} : memref<64x576xf32, #tpu.memory_space<vmem>>, vector<64x64xf32>,
    %c0_270 = arith.constant 0 : index
    %c0_271 = arith.constant 0 : index
    %281 = vector.load %arg9[%c0_270, %c0_271] : memref<64x576xf32, #tpu.memory_space<vmem>>, vector<64x576xf32>
    %c2 = arith.constant 2 : index
    %c0_272 = arith.constant 0 : index
    %c0_273 = arith.constant 0 : index
    %282 = vector.load %arg3[%c2, %c0_272, %c0_273] : memref<4x576x64xf32, #tpu.memory_space<vmem>>, vector<1x576x64xf32>
    %283 = vector.shape_cast %282 : vector<1x576x64xf32> to vector<576x64xf32>
    %cst_274 = arith.constant dense<0.000000e+00> : vector<64x64xf32>
    %284 = tpu.matmul %281, %283, %cst_274 {dimension_numbers = #tpu.dot_dimension_numbers<[1], [0], [0], [1], [0, 0, 1, 1], [], []>} : vector<64x576xf32>, vector<576x64xf32>, vector<64x64xf32> -> vector<64x64xf32>
    %c2_275 = arith.constant 2 : index
    %c0_276 = arith.constant 0 : index
    %c0_277 = arith.constant 0 : index
    %285 = vector.load %arg4[%c2_275, %c0_276, %c0_277] : memref<4x1x64xf32, #tpu.memory_space<vmem>>, vector<1x1x64xf32>
    %286 = vector.shape_cast %285 : vector<1x1x64xf32> to vector<1x64xf32>
    %287 = vector.broadcast %286 : vector<1x64xf32> to vector<64x64xf32>
    %288 = arith.addf %284, %287 : vector<64x64xf32>
    %cst_278 = arith.constant 0.000000e+00 : f32
    %289 = vector.broadcast %cst_278 : f32 to vector<64x64xf32>
    %290 = arith.maximumf %288, %289 : vector<64x64xf32>
    %c16_279 = arith.constant 16 : index
    %c0_280 = arith.constant 0 : index
    %291 = vector.load %arg8[%c16_279, %c0_280] : memref<96x64xf32, #tpu.memory_space<vmem>>, vector<64x64xf32>
    tpu.vector_store %arg8[%c16_279, %c0_280], %290 {strides = array<i32>} : memref<96x64xf32, #tpu.memory_space<vmem>>, vector<64x64xf32>,
    %c7_281 = arith.constant 7 : index
    %c0_282 = arith.constant 0 : index
    %292 = vector.load %arg8[%c7_281, %c0_282] : memref<96x64xf32, #tpu.memory_space<vmem>>, vector<64x64xf32>
    %cst_283 = arith.constant 0.000000e+00 : f32
    %293 = vector.shape_cast %128 : vector<64x1xi1> to vector<64x1xi1>
    %294 = vector.broadcast %293 : vector<64x1xi1> to vector<64x64xi1>
    %295 = vector.broadcast %cst_283 : f32 to vector<64x64xf32>
    %296 = arith.select %294, %292, %295 : vector<64x64xi1>, vector<64x64xf32>
    %c0_284 = arith.constant 0 : index
    %c0_285 = arith.constant 0 : index
    %297 = vector.load %arg9[%c0_284, %c0_285] : memref<64x576xf32, #tpu.memory_space<vmem>>, vector<64x64xf32>
    tpu.vector_store %arg9[%c0_284, %c0_285], %296 {strides = array<i32>} : memref<64x576xf32, #tpu.memory_space<vmem>>, vector<64x64xf32>,
    %c8_286 = arith.constant 8 : index
    %c0_287 = arith.constant 0 : index
    %298 = vector.load %arg8[%c8_286, %c0_287] : memref<96x64xf32, #tpu.memory_space<vmem>>, vector<64x64xf32>
    %c0_288 = arith.constant 0 : index
    %c64_289 = arith.constant 64 : index
    %299 = vector.load %arg9[%c0_288, %c64_289] : memref<64x576xf32, #tpu.memory_space<vmem>>, vector<64x64xf32>
    tpu.vector_store %arg9[%c0_288, %c64_289], %298 {strides = array<i32>} : memref<64x576xf32, #tpu.memory_space<vmem>>, vector<64x64xf32>,
    %c9_290 = arith.constant 9 : index
    %c0_291 = arith.constant 0 : index
    %300 = vector.load %arg8[%c9_290, %c0_291] : memref<96x64xf32, #tpu.memory_space<vmem>>, vector<64x64xf32>
    %cst_292 = arith.constant 0.000000e+00 : f32
    %301 = vector.shape_cast %130 : vector<64x1xi1> to vector<64x1xi1>
    %302 = vector.broadcast %301 : vector<64x1xi1> to vector<64x64xi1>
    %303 = vector.broadcast %cst_292 : f32 to vector<64x64xf32>
    %304 = arith.select %302, %300, %303 : vector<64x64xi1>, vector<64x64xf32>
    %c0_293 = arith.constant 0 : index
    %c128_294 = arith.constant 128 : index
    %305 = vector.load %arg9[%c0_293, %c128_294] : memref<64x576xf32, #tpu.memory_space<vmem>>, vector<64x64xf32>
    tpu.vector_store %arg9[%c0_293, %c128_294], %304 {strides = array<i32>} : memref<64x576xf32, #tpu.memory_space<vmem>>, vector<64x64xf32>,
    %c15_295 = arith.constant 15 : index
    %c0_296 = arith.constant 0 : index
    %306 = vector.load %arg8[%c15_295, %c0_296] : memref<96x64xf32, #tpu.memory_space<vmem>>, vector<64x64xf32>
    %cst_297 = arith.constant 0.000000e+00 : f32
    %307 = vector.shape_cast %128 : vector<64x1xi1> to vector<64x1xi1>
    %308 = vector.broadcast %307 : vector<64x1xi1> to vector<64x64xi1>
    %309 = vector.broadcast %cst_297 : f32 to vector<64x64xf32>
    %310 = arith.select %308, %306, %309 : vector<64x64xi1>, vector<64x64xf32>
    %c0_298 = arith.constant 0 : index
    %c192_299 = arith.constant 192 : index
    %311 = vector.load %arg9[%c0_298, %c192_299] : memref<64x576xf32, #tpu.memory_space<vmem>>, vector<64x64xf32>
    tpu.vector_store %arg9[%c0_298, %c192_299], %310 {strides = array<i32>} : memref<64x576xf32, #tpu.memory_space<vmem>>, vector<64x64xf32>,
    %c16_300 = arith.constant 16 : index
    %c0_301 = arith.constant 0 : index
    %312 = vector.load %arg8[%c16_300, %c0_301] : memref<96x64xf32, #tpu.memory_space<vmem>>, vector<64x64xf32>
    %c0_302 = arith.constant 0 : index
    %c256_303 = arith.constant 256 : index
    %313 = vector.load %arg9[%c0_302, %c256_303] : memref<64x576xf32, #tpu.memory_space<vmem>>, vector<64x64xf32>
    tpu.vector_store %arg9[%c0_302, %c256_303], %312 {strides = array<i32>} : memref<64x576xf32, #tpu.memory_space<vmem>>, vector<64x64xf32>,
    %c17_304 = arith.constant 17 : index
    %c0_305 = arith.constant 0 : index
    %314 = vector.load %arg8[%c17_304, %c0_305] : memref<96x64xf32, #tpu.memory_space<vmem>>, vector<64x64xf32>
    %cst_306 = arith.constant 0.000000e+00 : f32
    %315 = vector.shape_cast %130 : vector<64x1xi1> to vector<64x1xi1>
    %316 = vector.broadcast %315 : vector<64x1xi1> to vector<64x64xi1>
    %317 = vector.broadcast %cst_306 : f32 to vector<64x64xf32>
    %318 = arith.select %316, %314, %317 : vector<64x64xi1>, vector<64x64xf32>
    %c0_307 = arith.constant 0 : index
    %c320_308 = arith.constant 320 : index
    %319 = vector.load %arg9[%c0_307, %c320_308] : memref<64x576xf32, #tpu.memory_space<vmem>>, vector<64x64xf32>
    tpu.vector_store %arg9[%c0_307, %c320_308], %318 {strides = array<i32>} : memref<64x576xf32, #tpu.memory_space<vmem>>, vector<64x64xf32>,
    %c23_309 = arith.constant 23 : index
    %c0_310 = arith.constant 0 : index
    %320 = vector.load %arg8[%c23_309, %c0_310] : memref<96x64xf32, #tpu.memory_space<vmem>>, vector<64x64xf32>
    %cst_311 = arith.constant 0.000000e+00 : f32
    %321 = vector.shape_cast %128 : vector<64x1xi1> to vector<64x1xi1>
    %322 = vector.broadcast %321 : vector<64x1xi1> to vector<64x64xi1>
    %323 = vector.broadcast %cst_311 : f32 to vector<64x64xf32>
    %324 = arith.select %322, %320, %323 : vector<64x64xi1>, vector<64x64xf32>
    %c0_312 = arith.constant 0 : index
    %c384_313 = arith.constant 384 : index
    %325 = vector.load %arg9[%c0_312, %c384_313] : memref<64x576xf32, #tpu.memory_space<vmem>>, vector<64x64xf32>
    tpu.vector_store %arg9[%c0_312, %c384_313], %324 {strides = array<i32>} : memref<64x576xf32, #tpu.memory_space<vmem>>, vector<64x64xf32>,
    %c24_314 = arith.constant 24 : index
    %c0_315 = arith.constant 0 : index
    %326 = vector.load %arg8[%c24_314, %c0_315] : memref<96x64xf32, #tpu.memory_space<vmem>>, vector<64x64xf32>
    %c0_316 = arith.constant 0 : index
    %c448_317 = arith.constant 448 : index
    %327 = vector.load %arg9[%c0_316, %c448_317] : memref<64x576xf32, #tpu.memory_space<vmem>>, vector<64x64xf32>
    tpu.vector_store %arg9[%c0_316, %c448_317], %326 {strides = array<i32>} : memref<64x576xf32, #tpu.memory_space<vmem>>, vector<64x64xf32>,
    %c25_318 = arith.constant 25 : index
    %c0_319 = arith.constant 0 : index
    %328 = vector.load %arg8[%c25_318, %c0_319] : memref<96x64xf32, #tpu.memory_space<vmem>>, vector<64x64xf32>
    %cst_320 = arith.constant 0.000000e+00 : f32
    %329 = vector.shape_cast %130 : vector<64x1xi1> to vector<64x1xi1>
    %330 = vector.broadcast %329 : vector<64x1xi1> to vector<64x64xi1>
    %331 = vector.broadcast %cst_320 : f32 to vector<64x64xf32>
    %332 = arith.select %330, %328, %331 : vector<64x64xi1>, vector<64x64xf32>
    %c0_321 = arith.constant 0 : index
    %c512_322 = arith.constant 512 : index
    %333 = vector.load %arg9[%c0_321, %c512_322] : memref<64x576xf32, #tpu.memory_space<vmem>>, vector<64x64xf32>
    tpu.vector_store %arg9[%c0_321, %c512_322], %332 {strides = array<i32>} : memref<64x576xf32, #tpu.memory_space<vmem>>, vector<64x64xf32>,
    %c0_323 = arith.constant 0 : index
    %c0_324 = arith.constant 0 : index
    %334 = vector.load %arg9[%c0_323, %c0_324] : memref<64x576xf32, #tpu.memory_space<vmem>>, vector<64x576xf32>
    %c3 = arith.constant 3 : index
    %c0_325 = arith.constant 0 : index
    %c0_326 = arith.constant 0 : index
    %335 = vector.load %arg3[%c3, %c0_325, %c0_326] : memref<4x576x64xf32, #tpu.memory_space<vmem>>, vector<1x576x64xf32>
    %336 = vector.shape_cast %335 : vector<1x576x64xf32> to vector<576x64xf32>
    %cst_327 = arith.constant dense<0.000000e+00> : vector<64x64xf32>
    %337 = tpu.matmul %334, %336, %cst_327 {dimension_numbers = #tpu.dot_dimension_numbers<[1], [0], [0], [1], [0, 0, 1, 1], [], []>} : vector<64x576xf32>, vector<576x64xf32>, vector<64x64xf32> -> vector<64x64xf32>
    %c3_328 = arith.constant 3 : index
    %c0_329 = arith.constant 0 : index
    %c0_330 = arith.constant 0 : index
    %338 = vector.load %arg4[%c3_328, %c0_329, %c0_330] : memref<4x1x64xf32, #tpu.memory_space<vmem>>, vector<1x1x64xf32>
    %339 = vector.shape_cast %338 : vector<1x1x64xf32> to vector<1x64xf32>
    %340 = vector.broadcast %339 : vector<1x64xf32> to vector<64x64xf32>
    %341 = arith.addf %337, %340 : vector<64x64xf32>
    %342 = arith.addf %341, %237 : vector<64x64xf32>
    %cst_331 = arith.constant 0.000000e+00 : f32
    %343 = vector.broadcast %cst_331 : f32 to vector<64x64xf32>
    %344 = arith.maximumf %342, %343 : vector<64x64xf32>
    %c0_332 = arith.constant 0 : index
    %c0_333 = arith.constant 0 : index
    %345 = vector.load %arg5[%c0_332, %c0_333] : memref<64x64xf32, #tpu.memory_space<vmem>>, vector<64x64xf32>
    tpu.vector_store %arg5[%c0_332, %c0_333], %344 {strides = array<i32>} : memref<64x64xf32, #tpu.memory_space<vmem>>, vector<64x64xf32>,
    return
  }
  func.func @transform_0(%arg0: i32) -> (i32, i32) {
    %c0_i32 = arith.constant 0 : i32
    %c0_i32_0 = arith.constant 0 : i32
    return %arg0, %c0_i32 : i32, i32
  }
  func.func @transform_1(%arg0: i32) -> (i32, i32) {
    %c0_i32 = arith.constant 0 : i32
    %c0_i32_0 = arith.constant 0 : i32
    %c0_i32_1 = arith.constant 0 : i32
    return %c0_i32, %c0_i32_0 : i32, i32
  }
  func.func @transform_2(%arg0: i32) -> (i32, i32, i32) {
    %c0_i32 = arith.constant 0 : i32
    %c0_i32_0 = arith.constant 0 : i32
    %c0_i32_1 = arith.constant 0 : i32
    %c0_i32_2 = arith.constant 0 : i32
    return %c0_i32, %c0_i32_0, %c0_i32_1 : i32, i32, i32
  }
  func.func @transform_3(%arg0: i32) -> (i32, i32, i32) {
    %c0_i32 = arith.constant 0 : i32
    %c0_i32_0 = arith.constant 0 : i32
    %c0_i32_1 = arith.constant 0 : i32
    %c0_i32_2 = arith.constant 0 : i32
    return %c0_i32, %c0_i32_0, %c0_i32_1 : i32, i32, i32
  }
  func.func @transform_4(%arg0: i32) -> (i32, i32) {
    %c0_i32 = arith.constant 0 : i32
    %c0_i32_0 = arith.constant 0 : i32
    return %arg0, %c0_i32 : i32, i32
  }
}

</mosaic_0001>

<llo_original>
// kernel: mycnn_sppnet_front.1
$region0: #{mycnn_sppnet_front.1}
  #allocation0 [shape = 'u32[]', space=smem, size = 0x4, offset = 0x4, fixed_abs, tag = 'smem constant byte address 0x4 - core index']
  #allocation1 [shape = 'u32[144,128]{1,0:T(1,128)}', space=vmem, size = 0x12000, scoped, tag = 'internal scratch']
  #allocation2 [shape = 'f32[272,64]{1,0:T(8,128)}', space=vmem, size = 0x22000, scoped, tag = 'scratch operand']
  #allocation3 [shape = 'f32[24,64]{1,0:T(8,128)}', space=vmem, size = 0x3000, scoped, tag = 'scratch operand']
  #allocation4 [shape = 'f32[96,64]{1,0:T(8,128)}', space=vmem, size = 0xc000, scoped, tag = 'scratch operand']
  #allocation5 [shape = 'f32[64,576]{1,0:T(8,128)}', space=vmem, size = 0x28000, scoped, tag = 'scratch operand']
  %s0 = inlined_call_operand.vmem [shape: f32[512,256], index: 0, kind: input, shape index: {}]
  %s1 = inlined_call_operand.vmem [shape: f32[256,64], index: 1, kind: input, shape index: {}]
  %s2 = inlined_call_operand.vmem [shape: f32[4,576,64], index: 2, kind: input, shape index: {}]
  %s3 = inlined_call_operand.vmem [shape: f32[4,1,64], index: 3, kind: input, shape index: {}]
  %s4 = inlined_call_operand.hbm [shape: f32[128,64], index: 4, kind: output, shape index: {}]
  %s5 = sld [smem:[#allocation0]]
  $region49: #{mycnn_sppnet_front.1} parent=0
    _
  %s7 = ssub.s32 1, %s5
  %s8 = scalar_select 0, %s7, %s5
  $region1: #{mycnn_sppnet_front.1} parent=0
    #allocation6 [shape = 'u8[65536]{0}', space=vmem, size = 0x10000, scoped, tag = 'output window, operand 0']
    #allocation7 [shape = 's32[2]{0}', space=sflag, size = 0x8, scoped, tag = 'scoped memory for mycnn_sppnet_front.1']
    %9 = vsyncpa [#allocation7], 0
    %s10 = scalar_lea.sflag [#allocation7], 1
    %11 = vsyncpa %s10, 0
    loop: start=0, step=1, limit=4
    $region2: #{mycnn_sppnet_front.1} parent=1 // loop_pre_header
      _
    $region3: #{mycnn_sppnet_front.1} parent=1 // loop_header
      %s13 = sphi 0, %s17
      %p14 = scmp.ge.s32.totalorder %s13, 4
      %s23 = sphi 0, %s25
      %s26 = sphi 0, %s23
      %s27 = sphi 0, %s26
      %s43 = sphi 0, %s27
      %s47 = sphi 0, %s47
      %s49 = sphi 0, %s47
      %s50 = sphi 0, %s49
      %s64 = sphi 0, %s50
      %s68 = sphi 0, %s68
      %s70 = sphi 0, %s68
      %s71 = sphi 0, %s70
      %s85 = sphi 0, %s71
      %s89 = sphi 0, %s89
      %s91 = sphi 0, %s89
      %s92 = sphi 0, %s91
      %s106 = sphi 0, %s92
      %s112 = sphi 0, %s114
      %s115 = sphi 0, %s112
      %s116 = sphi 0, %s115
      %s132 = sphi 0, %s116
    $region4: #{mycnn_sppnet_front.1} parent=1 // loop_header_branch
      %16 = sbr.rel (%p14) target = $region8
    $region5: #{mycnn_sppnet_front.1} parent=1 // loop_body
      %s18 = ssub.s32 %s13, 1
      %s19 = ssub.s32 %s13, 2
      %s20 = sadd.s32 %s13, 1
      %s21 = ssub.s32 %s13, %s20
      %p22 = scmp.eq.s32.totalorder %s21, 0
      %s24 = sadd.s32 %s23, 1
      %s25 = scalar_select %p22, %s23, %s24
      %p28 = pneg %p22
      %p29 = scmp.eq.s32.totalorder %s13, 1
      %p30 = por %p28, %p29
      %p31 = scmp.ne.s32.totalorder %s23, %s26
      %p32 = scmp.eq.s32.totalorder %s13, 0
      %p33 = por %p31, %p32
      %p34 = scmp.ne.s32.totalorder %s23, %s26
      %p35 = scmp.eq.s32.totalorder %s18, 1
      %p36 = por %p34, %p35
      %p37 = scmp.ne.s32.totalorder %s26, %s27
      %p38 = scmp.eq.s32.totalorder %s18, 0
      %p39 = por %p37, %p38
      %p40 = scmp.ne.s32.totalorder %s26, %s27
      %p41 = scmp.eq.s32.totalorder %s19, 1
      %p42 = por %p40, %p41
      %p44 = scmp.ne.s32.totalorder %s27, %s43
      %p45 = scmp.eq.s32.totalorder %s19, 0
      %p46 = por %p44, %p45
      %s48 = sadd.s32 %s47, 1
      %p51 = scmp.eq.s32.totalorder %s13, 1
      %p52 = scmp.ne.s32.totalorder %s47, %s49
      %p53 = scmp.eq.s32.totalorder %s13, 0
      %p54 = por %p52, %p53
      %p55 = scmp.ne.s32.totalorder %s47, %s49
      %p56 = scmp.eq.s32.totalorder %s18, 1
      %p57 = por %p55, %p56
      %p58 = scmp.ne.s32.totalorder %s49, %s50
      %p59 = scmp.eq.s32.totalorder %s18, 0
      %p60 = por %p58, %p59
      %p61 = scmp.ne.s32.totalorder %s49, %s50
      %p62 = scmp.eq.s32.totalorder %s19, 1
      %p63 = por %p61, %p62
      %p65 = scmp.ne.s32.totalorder %s50, %s64
      %p66 = scmp.eq.s32.totalorder %s19, 0
      %p67 = por %p65, %p66
      %s69 = sadd.s32 %s68, 1
      %p72 = scmp.eq.s32.totalorder %s13, 1
      %p73 = scmp.ne.s32.totalorder %s68, %s70
      %p74 = scmp.eq.s32.totalorder %s13, 0
      %p75 = por %p73, %p74
      %p76 = scmp.ne.s32.totalorder %s68, %s70
      %p77 = scmp.eq.s32.totalorder %s18, 1
      %p78 = por %p76, %p77
      %p79 = scmp.ne.s32.totalorder %s70, %s71
      %p80 = scmp.eq.s32.totalorder %s18, 0
      %p81 = por %p79, %p80
      %p82 = scmp.ne.s32.totalorder %s70, %s71
      %p83 = scmp.eq.s32.totalorder %s19, 1
      %p84 = por %p82, %p83
      %p86 = scmp.ne.s32.totalorder %s71, %s85
      %p87 = scmp.eq.s32.totalorder %s19, 0
      %p88 = por %p86, %p87
      %s90 = sadd.s32 %s89, 1
      %p93 = scmp.eq.s32.totalorder %s13, 1
      %p94 = scmp.ne.s32.totalorder %s89, %s91
      %p95 = scmp.eq.s32.totalorder %s13, 0
      %p96 = por %p94, %p95
      %p97 = scmp.ne.s32.totalorder %s89, %s91
      %p98 = scmp.eq.s32.totalorder %s18, 1
      %p99 = por %p97, %p98
      %p100 = scmp.ne.s32.totalorder %s91, %s92
      %p101 = scmp.eq.s32.totalorder %s18, 0
      %p102 = por %p100, %p101
      %p103 = scmp.ne.s32.totalorder %s91, %s92
      %p104 = scmp.eq.s32.totalorder %s19, 1
      %p105 = por %p103, %p104
      %p107 = scmp.ne.s32.totalorder %s92, %s106
      %p108 = scmp.eq.s32.totalorder %s19, 0
      %p109 = por %p107, %p108
      %s110 = ssub.s32 %s13, %s20
      %p111 = scmp.eq.s32.totalorder %s110, 0
      %s113 = sadd.s32 %s112, 1
      %s114 = scalar_select %p111, %s112, %s113
      %p117 = pneg %p111
      %p118 = scmp.eq.s32.totalorder %s13, 1
      %p119 = por %p117, %p118
      %p120 = scmp.ne.s32.totalorder %s112, %s115
      %p121 = scmp.eq.s32.totalorder %s13, 0
      %p122 = por %p120, %p121
      %p123 = scmp.ne.s32.totalorder %s112, %s115
      %p124 = scmp.eq.s32.totalorder %s18, 1
      %p125 = por %p123, %p124
      %p126 = scmp.ne.s32.totalorder %s115, %s116
      %p127 = scmp.eq.s32.totalorder %s18, 0
      %p128 = por %p126, %p127
      %p129 = scmp.ne.s32.totalorder %s115, %s116
      %p130 = scmp.eq.s32.totalorder %s19, 1
      %p131 = por %p129, %p130
      %p133 = scmp.ne.s32.totalorder %s116, %s132
      %p134 = scmp.eq.s32.totalorder %s19, 0
      %p135 = por %p133, %p134
      %p136 = scmp.le.s32.totalorder 1, %s13
      %p137 = scmp.lt.s32.totalorder %s13, 3
      %p138 = pnand %p136, %p137
      %p139 = pneg %p138
      // Predicated region
      $region9: #{mycnn_sppnet_front.1} parent=5 // pred_check
        _
      $region10: #{mycnn_sppnet_front.1} parent=5 // pred_check_branch
        %141 = sbr.rel (%p138) target = $region12
      $region11: #{mycnn_sppnet_front.1} parent=5 // pred_region
        %s142 = ssub.s32 %s13, 1
        // Predicated region
        $region13: #{mycnn_sppnet_front.1} parent=11 // pred_check
          %p143 = pneg %p60
        $region14: #{mycnn_sppnet_front.1} parent=11 // pred_check_branch
          %145 = sbr.rel (%p143) target = $region16
        $region15: #{mycnn_sppnet_front.1} parent=11 // pred_region
          _
        $region16: #{mycnn_sppnet_front.1} parent=11 // pred_fallthru
          _
        // Predicated region
        $region17: #{mycnn_sppnet_front.1} parent=11 // pred_check
          %p146 = pneg %p81
        $region18: #{mycnn_sppnet_front.1} parent=11 // pred_check_branch
          %148 = sbr.rel (%p146) target = $region20
        $region19: #{mycnn_sppnet_front.1} parent=11 // pred_region
          _
        $region20: #{mycnn_sppnet_front.1} parent=11 // pred_fallthru
          _
        // Predicated region
        $region21: #{mycnn_sppnet_front.1} parent=11 // pred_check
          %p149 = pneg %p102
        $region22: #{mycnn_sppnet_front.1} parent=11 // pred_check_branch
          %151 = sbr.rel (%p149) target = $region24
        $region23: #{mycnn_sppnet_front.1} parent=11 // pred_region
          _
        $region24: #{mycnn_sppnet_front.1} parent=11 // pred_fallthru
          _
      $region12: #{mycnn_sppnet_front.1} parent=5 // pred_fallthru
        _
      %p152 = scmp.lt.s32.totalorder %s13, 2
      // Predicated region
      $region25: #{mycnn_sppnet_front.1} parent=5 // pred_check
        %p153 = pneg %p152
      $region26: #{mycnn_sppnet_front.1} parent=5 // pred_check_branch
        %155 = sbr.rel (%p153) target = $region28
      $region27: #{mycnn_sppnet_front.1} parent=5 // pred_region
        // Predicated region
        $region29: #{mycnn_sppnet_front.1} parent=27 // pred_check
          %p156 = pneg %p33
        $region30: #{mycnn_sppnet_front.1} parent=27 // pred_check_branch
          %158 = sbr.rel (%p156) target = $region32
        $region31: #{mycnn_sppnet_front.1} parent=27 // pred_region
          %s159 = smul.u32 32, %s13
          %p160 = scmp.lt.s32.totalorder %s159, 63
          %s161 = scalar_select %p160, %s159, 63
          %s162 = smul.addr %s161, 2
          %s163 = smul.addr %s162, 8
          %s164 = scalar_lea.vmem %s0, %s163
          %s165 = smul.u32 32, %s13
        $region32: #{mycnn_sppnet_front.1} parent=27 // pred_fallthru
          _
      $region28: #{mycnn_sppnet_front.1} parent=5 // pred_fallthru
        _
      %p166 = scmp.le.s32.totalorder 1, %s13
      %p167 = scmp.lt.s32.totalorder %s13, 3
      %p168 = pnand %p166, %p167
      %p169 = pneg %p168
      // Predicated region
      $region33: #{mycnn_sppnet_front.1} parent=5 // pred_check
        _
      $region34: #{mycnn_sppnet_front.1} parent=5 // pred_check_branch
        %171 = sbr.rel (%p168) target = $region36
      $region35: #{mycnn_sppnet_front.1} parent=5 // pred_region
        %s172 = ssub.s32 %s13, 1
        %s173 = smul.u32 32, %s18
        %p174 = scmp.lt.s32.totalorder %s173, 63
        %s175 = scalar_select %p174, %s173, 63
        %s176 = smul.addr %s175, 2
        %s177 = smul.addr %s176, 8
        %s178 = scalar_lea.vmem %s0, %s177
        %p179 = pneg %p39
        %p180 = pneg %p36
        %p181 = pneg %p60
        %p182 = pneg %p57
        %p183 = pneg %p81
        %p184 = pneg %p78
        %p185 = pneg %p102
        %p186 = pneg %p99
        %p187 = pneg %p128
        %p188 = pneg %p125
        %s189 = sand.u32 %s115, 1
        %s190 = scalar_lea.sflag [#allocation7], %s189
        %s191 = sand.u32 %s115, 1
        %s192 = smul.addr %s191, 64
        %s193 = scalar_lea.vmem [#allocation6], %s192
        %s194 = smul.u32 32, %s18
        %p195 = scmp.lt.s32.totalorder %s194, 63
        %s196 = scalar_select %p195, %s194, 63
        %s197 = smul.addr %s196, 2
        %s198 = smul.addr %s197, 8
        %s199 = scalar_lea.vmem %s0, %s198
        %s200 = smul.u32 32, %s18
        %s201 = smul.u32 8, %s18
        %v202 = vld [vmem:[%s199] sm:$0xff]
        %v203 = vld [vmem:[%s199 + $0x8] sm:$0xff]
        %v204 = vld [vmem:[%s199 + $0x10] sm:$0xff]
        %v205 = vld [vmem:[%s199 + $0x18] sm:$0xff]
        %v206 = vld [vmem:[%s199 + $0x20] sm:$0xff]
        %v207 = vld [vmem:[%s199 + $0x28] sm:$0xff]
        %v208 = vld [vmem:[%s199 + $0x30] sm:$0xff]
        %v209 = vld [vmem:[%s199 + $0x38] sm:$0xff]
        %v210 = vld [vmem:[%s199 + $0x40] sm:$0xff]
        %v211 = vld [vmem:[%s199 + $0x48] sm:$0xff]
        %v212 = vld [vmem:[%s199 + $0x50] sm:$0xff]
        %v213 = vld [vmem:[%s199 + $0x58] sm:$0xff]
        %v214 = vld [vmem:[%s199 + $0x60] sm:$0xff]
        %v215 = vld [vmem:[%s199 + $0x68] sm:$0xff]
        %v216 = vld [vmem:[%s199 + $0x70] sm:$0xff]
        %v217 = vld [vmem:[%s199 + $0x78] sm:$0xff]
        %v218 = vld [vmem:[%s199 + $0x80] sm:$0xff]
        %v219 = vld [vmem:[%s199 + $0x88] sm:$0xff]
        %v220 = vld [vmem:[%s199 + $0x90] sm:$0xff]
        %v221 = vld [vmem:[%s199 + $0x98] sm:$0xff]
        %v222 = vld [vmem:[%s199 + $0xa0] sm:$0xff]
        %v223 = vld [vmem:[%s199 + $0xa8] sm:$0xff]
        %v224 = vld [vmem:[%s199 + $0xb0] sm:$0xff]
        %v225 = vld [vmem:[%s199 + $0xb8] sm:$0xff]
        %v226 = vld [vmem:[%s199 + $0xc0] sm:$0xff]
        %v227 = vld [vmem:[%s199 + $0xc8] sm:$0xff]
        %v228 = vld [vmem:[%s199 + $0xd0] sm:$0xff]
        %v229 = vld [vmem:[%s199 + $0xd8] sm:$0xff]
        %v230 = vld [vmem:[%s199 + $0xe0] sm:$0xff]
        %v231 = vld [vmem:[%s199 + $0xe8] sm:$0xff]
        %v232 = vld [vmem:[%s199 + $0xf0] sm:$0xff]
        %v233 = vld [vmem:[%s199 + $0xf8] sm:$0xff]
        %v234 = vld [vmem:[%s199 + $0x100] sm:$0xff]
        %v235 = vld [vmem:[%s199 + $0x108] sm:$0xff]
        %v236 = vld [vmem:[%s199 + $0x110] sm:$0xff]
        %v237 = vld [vmem:[%s199 + $0x118] sm:$0xff]
        %v238 = vld [vmem:[%s199 + $0x120] sm:$0xff]
        %v239 = vld [vmem:[%s199 + $0x128] sm:$0xff]
        %v240 = vld [vmem:[%s199 + $0x130] sm:$0xff]
        %v241 = vld [vmem:[%s199 + $0x138] sm:$0xff]
        %v242 = vld [vmem:[%s199 + $0x140] sm:$0xff]
        %v243 = vld [vmem:[%s199 + $0x148] sm:$0xff]
        %v244 = vld [vmem:[%s199 + $0x150] sm:$0xff]
        %v245 = vld [vmem:[%s199 + $0x158] sm:$0xff]
        %v246 = vld [vmem:[%s199 + $0x160] sm:$0xff]
        %v247 = vld [vmem:[%s199 + $0x168] sm:$0xff]
        %v248 = vld [vmem:[%s199 + $0x170] sm:$0xff]
        %v249 = vld [vmem:[%s199 + $0x178] sm:$0xff]
        %v250 = vld [vmem:[%s199 + $0x180] sm:$0xff]
        %v251 = vld [vmem:[%s199 + $0x188] sm:$0xff]
        %v252 = vld [vmem:[%s199 + $0x190] sm:$0xff]
        %v253 = vld [vmem:[%s199 + $0x198] sm:$0xff]
        %v254 = vld [vmem:[%s199 + $0x1a0] sm:$0xff]
        %v255 = vld [vmem:[%s199 + $0x1a8] sm:$0xff]
        %v256 = vld [vmem:[%s199 + $0x1b0] sm:$0xff]
        %v257 = vld [vmem:[%s199 + $0x1b8] sm:$0xff]
        %v258 = vld [vmem:[%s199 + $0x1c0] sm:$0xff]
        %v259 = vld [vmem:[%s199 + $0x1c8] sm:$0xff]
        %v260 = vld [vmem:[%s199 + $0x1d0] sm:$0xff]
        %v261 = vld [vmem:[%s199 + $0x1d8] sm:$0xff]
        %v262 = vld [vmem:[%s199 + $0x1e0] sm:$0xff]
        %v263 = vld [vmem:[%s199 + $0x1e8] sm:$0xff]
        %v264 = vld [vmem:[%s199 + $0x1f0] sm:$0xff]
        %v265 = vld [vmem:[%s199 + $0x1f8] sm:$0xff]
        %v266 = vld [vmem:[%s1] sm:$0xff]
        %v267 = vld [vmem:[%s1 + $0x8] sm:$0xff]
        %v268 = vld [vmem:[%s1 + $0x10] sm:$0xff]
        %v269 = vld [vmem:[%s1 + $0x18] sm:$0xff]
        %v270 = vld [vmem:[%s1 + $0x20] sm:$0xff]
        %v271 = vld [vmem:[%s1 + $0x28] sm:$0xff]
        %v272 = vld [vmem:[%s1 + $0x30] sm:$0xff]
        %v273 = vld [vmem:[%s1 + $0x38] sm:$0xff]
        %v274 = vld [vmem:[%s1 + $0x40] sm:$0xff]
        %v275 = vld [vmem:[%s1 + $0x48] sm:$0xff]
        %v276 = vld [vmem:[%s1 + $0x50] sm:$0xff]
        %v277 = vld [vmem:[%s1 + $0x58] sm:$0xff]
        %v278 = vld [vmem:[%s1 + $0x60] sm:$0xff]
        %v279 = vld [vmem:[%s1 + $0x68] sm:$0xff]
        %v280 = vld [vmem:[%s1 + $0x70] sm:$0xff]
        %v281 = vld [vmem:[%s1 + $0x78] sm:$0xff]
        %v282 = vld [vmem:[%s1 + $0x80] sm:$0xff]
        %v283 = vld [vmem:[%s1 + $0x88] sm:$0xff]
        %v284 = vld [vmem:[%s1 + $0x90] sm:$0xff]
        %v285 = vld [vmem:[%s1 + $0x98] sm:$0xff]
        %v286 = vld [vmem:[%s1 + $0xa0] sm:$0xff]
        %v287 = vld [vmem:[%s1 + $0xa8] sm:$0xff]
        %v288 = vld [vmem:[%s1 + $0xb0] sm:$0xff]
        %v289 = vld [vmem:[%s1 + $0xb8] sm:$0xff]
        %v290 = vld [vmem:[%s1 + $0xc0] sm:$0xff]
        %v291 = vld [vmem:[%s1 + $0xc8] sm:$0xff]
        %v292 = vld [vmem:[%s1 + $0xd0] sm:$0xff]
        %v293 = vld [vmem:[%s1 + $0xd8] sm:$0xff]
        %v294 = vld [vmem:[%s1 + $0xe0] sm:$0xff]
        %v295 = vld [vmem:[%s1 + $0xe8] sm:$0xff]
        %v296 = vld [vmem:[%s1 + $0xf0] sm:$0xff]
        %v297 = vld [vmem:[%s1 + $0xf8] sm:$0xff]
        %298 = vmatprep.subr.mxu0 0.0
        %299 = vmatpush1.msra.mxu0 %v266
        %300 = vmatprep.subr.mxu0 0.0
        %301 = vmatpush1.msra.mxu0 %v267
        %302 = vmatprep.subr.mxu0 0.0
        %303 = vmatpush1.msra.mxu0 %v268
        %304 = vmatprep.subr.mxu0 0.0
        %305 = vmatpush1.msra.mxu0 %v269
        %306 = vmatprep.subr.mxu0 0.0
        %307 = vmatpush1.msra.mxu0 %v270
        %308 = vmatprep.subr.mxu0 0.0
        %309 = vmatpush1.msra.mxu0 %v271
        %310 = vmatprep.subr.mxu0 0.0
        %311 = vmatpush1.msra.mxu0 %v272
        %312 = vmatprep.subr.mxu0 0.0
        %313 = vmatpush1.msra.mxu0 %v273
        %314 = vmatprep.subr.mxu0 0.0
        %315 = vmatpush1.msra.mxu0 %v274
        %316 = vmatprep.subr.mxu0 0.0
        %317 = vmatpush1.msra.mxu0 %v275
        %318 = vmatprep.subr.mxu0 0.0
        %319 = vmatpush1.msra.mxu0 %v276
        %320 = vmatprep.subr.mxu0 0.0
        %321 = vmatpush1.msra.mxu0 %v277
        %322 = vmatprep.subr.mxu0 0.0
        %323 = vmatpush1.msra.mxu0 %v278
        %324 = vmatprep.subr.mxu0 0.0
        %325 = vmatpush1.msra.mxu0 %v279
        %326 = vmatprep.subr.mxu0 0.0
        %327 = vmatpush1.msra.mxu0 %v280
        %328 = vmatprep.subr.mxu0 0.0
        %329 = vmatpush1.msra.mxu0 %v281
        %330 = vmatprep.subr.mxu0 0.0
        %331 = vmatpush1.msra.mxu0 %v282
        %332 = vmatprep.subr.mxu0 0.0
        %333 = vmatpush1.msra.mxu0 %v283
        %334 = vmatprep.subr.mxu0 0.0
        %335 = vmatpush1.msra.mxu0 %v284
        %336 = vmatprep.subr.mxu0 0.0
        %337 = vmatpush1.msra.mxu0 %v285
        %338 = vmatprep.subr.mxu0 0.0
        %339 = vmatpush1.msra.mxu0 %v286
        %340 = vmatprep.subr.mxu0 0.0
        %341 = vmatpush1.msra.mxu0 %v287
        %342 = vmatprep.subr.mxu0 0.0
        %343 = vmatpush1.msra.mxu0 %v288
        %344 = vmatprep.subr.mxu0 0.0
        %345 = vmatpush1.msra.mxu0 %v289
        %346 = vmatprep.subr.mxu0 0.0
        %347 = vmatpush1.msra.mxu0 %v290
        %348 = vmatprep.subr.mxu0 0.0
        %349 = vmatpush1.msra.mxu0 %v291
        %350 = vmatprep.subr.mxu0 0.0
        %351 = vmatpush1.msra.mxu0 %v292
        %352 = vmatprep.subr.mxu0 0.0
        %353 = vmatpush1.msra.mxu0 %v293
        %354 = vmatprep.subr.mxu0 0.0
        %355 = vmatpush1.msra.mxu0 %v294
        %356 = vmatprep.subr.mxu0 0.0
        %357 = vmatpush1.msra.mxu0 %v295
        %358 = vmatprep.subr.mxu0 0.0
        %359 = vmatpush1.msra.mxu0 %v296
        %360 = vmatprep.subr.mxu0 0.0
        %361 = vmatpush1.msra.mxu0 %v297
        %362 = vmatprep.mubr.f32.mxu0 %v203
        %363 = vmatmul.mubr.f32.gmra.mrb[0].mxu0 %v202
        %v364 = vpop.f32.mrb[0].mxu0
        %v365 = vadd.f32 0.0, %v364
        %v366 = vpop.f32.mrb[0].mxu0
        %367 = vmatprep.mubr.f32.mxu0 %v205
        %368 = vmatmul.mubr.f32.gmra.mrb[0].mxu0 %v204
        %v369 = vpop.f32.mrb[0].mxu0
        %v370 = vadd.f32 0.0, %v369
        %v371 = vpop.f32.mrb[0].mxu0
        %372 = vmatprep.mubr.f32.mxu0 %v207
        %373 = vmatmul.mubr.f32.gmra.mrb[0].mxu0 %v206
        %v374 = vpop.f32.mrb[0].mxu0
        %v375 = vadd.f32 0.0, %v374
        %v376 = vpop.f32.mrb[0].mxu0
        %377 = vmatprep.mubr.f32.mxu0 %v209
        %378 = vmatmul.mubr.f32.gmra.mrb[0].mxu0 %v208
        %v379 = vpop.f32.mrb[0].mxu0
        %v380 = vadd.f32 0.0, %v379
        %v381 = vpop.f32.mrb[0].mxu0
        %382 = vmatprep.mubr.f32.mxu0 %v211
        %383 = vmatmul.mubr.f32.gmra.mrb[0].mxu0 %v210
        %v384 = vpop.f32.mrb[0].mxu0
        %v385 = vadd.f32 0.0, %v384
        %v386 = vpop.f32.mrb[0].mxu0
        %387 = vmatprep.mubr.f32.mxu0 %v213
        %388 = vmatmul.mubr.f32.gmra.mrb[0].mxu0 %v212
        %v389 = vpop.f32.mrb[0].mxu0
        %v390 = vadd.f32 0.0, %v389
        %v391 = vpop.f32.mrb[0].mxu0
        %392 = vmatprep.mubr.f32.mxu0 %v215
        %393 = vmatmul.mubr.f32.gmra.mrb[0].mxu0 %v214
        %v394 = vpop.f32.mrb[0].mxu0
        %v395 = vadd.f32 0.0, %v394
        %v396 = vpop.f32.mrb[0].mxu0
        %397 = vmatprep.mubr.f32.mxu0 %v217
        %398 = vmatmul.mubr.f32.gmra.mrb[0].mxu0 %v216
        %v399 = vpop.f32.mrb[0].mxu0
        %v400 = vadd.f32 0.0, %v399
        %v401 = vpop.f32.mrb[0].mxu0
        %402 = vmatprep.mubr.f32.mxu0 %v219
        %403 = vmatmul.mubr.f32.gmra.mrb[0].mxu0 %v218
        %v404 = vpop.f32.mrb[0].mxu0
        %v405 = vadd.f32 0.0, %v404
        %v406 = vpop.f32.mrb[0].mxu0
        %407 = vmatprep.mubr.f32.mxu0 %v221
        %408 = vmatmul.mubr.f32.gmra.mrb[0].mxu0 %v220
        %v409 = vpop.f32.mrb[0].mxu0
        %v410 = vadd.f32 0.0, %v409
        %v411 = vpop.f32.mrb[0].mxu0
        %412 = vmatprep.mubr.f32.mxu0 %v223
        %413 = vmatmul.mubr.f32.gmra.mrb[0].mxu0 %v222
        %v414 = vpop.f32.mrb[0].mxu0
        %v415 = vadd.f32 0.0, %v414
        %v416 = vpop.f32.mrb[0].mxu0
        %417 = vmatprep.mubr.f32.mxu0 %v225
        %418 = vmatmul.mubr.f32.gmra.mrb[0].mxu0 %v224
        %v419 = vpop.f32.mrb[0].mxu0
        %v420 = vadd.f32 0.0, %v419
        %v421 = vpop.f32.mrb[0].mxu0
        %422 = vmatprep.mubr.f32.mxu0 %v227
        %423 = vmatmul.mubr.f32.gmra.mrb[0].mxu0 %v226
        %v424 = vpop.f32.mrb[0].mxu0
        %v425 = vadd.f32 0.0, %v424
        %v426 = vpop.f32.mrb[0].mxu0
        %427 = vmatprep.mubr.f32.mxu0 %v229
        %428 = vmatmul.mubr.f32.gmra.mrb[0].mxu0 %v228
        %v429 = vpop.f32.mrb[0].mxu0
        %v430 = vadd.f32 0.0, %v429
        %v431 = vpop.f32.mrb[0].mxu0
        %432 = vmatprep.mubr.f32.mxu0 %v231
        %433 = vmatmul.mubr.f32.gmra.mrb[0].mxu0 %v230
        %v434 = vpop.f32.mrb[0].mxu0
        %v435 = vadd.f32 0.0, %v434
        %v436 = vpop.f32.mrb[0].mxu0
        %437 = vmatprep.mubr.f32.mxu0 %v233
        %438 = vmatmul.mubr.f32.gmra.mrb[0].mxu0 %v232
        %v439 = vpop.f32.mrb[0].mxu0
        %v440 = vadd.f32 0.0, %v439
        %v441 = vpop.f32.mrb[0].mxu0
        %442 = vmatprep.mubr.f32.mxu0 %v235
        %443 = vmatmul.mubr.f32.gmra.mrb[0].mxu0 %v234
        %v444 = vpop.f32.mrb[0].mxu0
        %v445 = vadd.f32 0.0, %v444
        %v446 = vpop.f32.mrb[0].mxu0
        %447 = vmatprep.mubr.f32.mxu0 %v237
        %448 = vmatmul.mubr.f32.gmra.mrb[0].mxu0 %v236
        %v449 = vpop.f32.mrb[0].mxu0
        %v450 = vadd.f32 0.0, %v449
        %v451 = vpop.f32.mrb[0].mxu0
        %452 = vmatprep.mubr.f32.mxu0 %v239
        %453 = vmatmul.mubr.f32.gmra.mrb[0].mxu0 %v238
        %v454 = vpop.f32.mrb[0].mxu0
        %v455 = vadd.f32 0.0, %v454
        %v456 = vpop.f32.mrb[0].mxu0
        %457 = vmatprep.mubr.f32.mxu0 %v241
        %458 = vmatmul.mubr.f32.gmra.mrb[0].mxu0 %v240
        %v459 = vpop.f32.mrb[0].mxu0
        %v460 = vadd.f32 0.0, %v459
        %v461 = vpop.f32.mrb[0].mxu0
        %462 = vmatprep.mubr.f32.mxu0 %v243
        %463 = vmatmul.mubr.f32.gmra.mrb[0].mxu0 %v242
        %v464 = vpop.f32.mrb[0].mxu0
        %v465 = vadd.f32 0.0, %v464
        %v466 = vpop.f32.mrb[0].mxu0
        %467 = vmatprep.mubr.f32.mxu0 %v245
        %468 = vmatmul.mubr.f32.gmra.mrb[0].mxu0 %v244
        %v469 = vpop.f32.mrb[0].mxu0
        %v470 = vadd.f32 0.0, %v469
        %v471 = vpop.f32.mrb[0].mxu0
        %472 = vmatprep.mubr.f32.mxu0 %v247
        %473 = vmatmul.mubr.f32.gmra.mrb[0].mxu0 %v246
        %v474 = vpop.f32.mrb[0].mxu0
        %v475 = vadd.f32 0.0, %v474
        %v476 = vpop.f32.mrb[0].mxu0
        %477 = vmatprep.mubr.f32.mxu0 %v249
        %478 = vmatmul.mubr.f32.gmra.mrb[0].mxu0 %v248
        %v479 = vpop.f32.mrb[0].mxu0
        %v480 = vadd.f32 0.0, %v479
        %v481 = vpop.f32.mrb[0].mxu0
        %482 = vmatprep.mubr.f32.mxu0 %v251
        %483 = vmatmul.mubr.f32.gmra.mrb[0].mxu0 %v250
        %v484 = vpop.f32.mrb[0].mxu0
        %v485 = vadd.f32 0.0, %v484
        %v486 = vpop.f32.mrb[0].mxu0
        %487 = vmatprep.mubr.f32.mxu0 %v253
        %488 = vmatmul.mubr.f32.gmra.mrb[0].mxu0 %v252
        %v489 = vpop.f32.mrb[0].mxu0
        %v490 = vadd.f32 0.0, %v489
        %v491 = vpop.f32.mrb[0].mxu0
        %492 = vmatprep.mubr.f32.mxu0 %v255
        %493 = vmatmul.mubr.f32.gmra.mrb[0].mxu0 %v254
        %v494 = vpop.f32.mrb[0].mxu0
        %v495 = vadd.f32 0.0, %v494
        %v496 = vpop.f32.mrb[0].mxu0
        %497 = vmatprep.mubr.f32.mxu0 %v257
        %498 = vmatmul.mubr.f32.gmra.mrb[0].mxu0 %v256
        %v499 = vpop.f32.mrb[0].mxu0
        %v500 = vadd.f32 0.0, %v499
        %v501 = vpop.f32.mrb[0].mxu0
        %502 = vmatprep.mubr.f32.mxu0 %v259
        %503 = vmatmul.mubr.f32.gmra.mrb[0].mxu0 %v258
        %v504 = vpop.f32.mrb[0].mxu0
        %v505 = vadd.f32 0.0, %v504
        %v506 = vpop.f32.mrb[0].mxu0
        %507 = vmatprep.mubr.f32.mxu0 %v261
        %508 = vmatmul.mubr.f32.gmra.mrb[0].mxu0 %v260
        %v509 = vpop.f32.mrb[0].mxu0
        %v510 = vadd.f32 0.0, %v509
        %v511 = vpop.f32.mrb[0].mxu0
        %512 = vmatprep.mubr.f32.mxu0 %v263
        %513 = vmatmul.mubr.f32.gmra.mrb[0].mxu0 %v262
        %v514 = vpop.f32.mrb[0].mxu0
        %v515 = vadd.f32 0.0, %v514
        %v516 = vpop.f32.mrb[0].mxu0
        %517 = vmatprep.mubr.f32.mxu0 %v265
        %518 = vmatmul.mubr.f32.gmra.mrb[0].mxu0 %v264
        %v519 = vpop.f32.mrb[0].mxu0
        %v520 = vadd.f32 0.0, %v519
        %v521 = vpop.f32.mrb[0].mxu0
        %522 = vdwg.mxu0
        %v523 = vmax.f32 %v365, 0.0
        %v524 = vmax.f32 %v370, 0.0
        %v525 = vmax.f32 %v375, 0.0
        %v526 = vmax.f32 %v380, 0.0
        %v527 = vmax.f32 %v385, 0.0
        %v528 = vmax.f32 %v390, 0.0
        %v529 = vmax.f32 %v395, 0.0
        %v530 = vmax.f32 %v400, 0.0
        %v531 = vmax.f32 %v405, 0.0
        %v532 = vmax.f32 %v410, 0.0
        %v533 = vmax.f32 %v415, 0.0
        %v534 = vmax.f32 %v420, 0.0
        %v535 = vmax.f32 %v425, 0.0
        %v536 = vmax.f32 %v430, 0.0
        %v537 = vmax.f32 %v435, 0.0
        %v538 = vmax.f32 %v440, 0.0
        %v539 = vmax.f32 %v445, 0.0
        %v540 = vmax.f32 %v450, 0.0
        %v541 = vmax.f32 %v455, 0.0
        %v542 = vmax.f32 %v460, 0.0
        %v543 = vmax.f32 %v465, 0.0
        %v544 = vmax.f32 %v470, 0.0
        %v545 = vmax.f32 %v475, 0.0
        %v546 = vmax.f32 %v480, 0.0
        %v547 = vmax.f32 %v485, 0.0
        %v548 = vmax.f32 %v490, 0.0
        %v549 = vmax.f32 %v495, 0.0
        %v550 = vmax.f32 %v500, 0.0
        %v551 = vmax.f32 %v505, 0.0
        %v552 = vmax.f32 %v510, 0.0
        %v553 = vmax.f32 %v515, 0.0
        %v554 = vmax.f32 %v520, 0.0
        %vm555 = vcmask 523264
        %556 = vst.msk [vmem:[#allocation2] sm:$0xff] %vm555, 0.0
        %557 = vst.msk [vmem:[#allocation2 + $0x8] sm:$0xff] %vm555, 0.0
        %558 = vst.msk [vmem:[#allocation3] sm:$0xff] %vm555, 0.0
        %559 = vst.msk [vmem:[#allocation4] sm:$0xff] %vm555, 0.0
        %560 = vst.msk [vmem:[#allocation4 + $0x8] sm:$0xff] %vm555, 0.0
        %561 = vst.msk [vmem:[#allocation4 + $0x50] sm:$0xff] %vm555, 0.0
        %562 = vst.msk [vmem:[#allocation4 + $0x58] sm:$0xff] %vm555, 0.0
        %563 = vst.msk [vmem:[#allocation2 + $0x10] sm:$0xff] %vm555, %v523
        %564 = vst.msk [vmem:[#allocation2 + $0x18] sm:$0xff] %vm555, %v524
        %565 = vst.msk [vmem:[#allocation2 + $0x20] sm:$0xff] %vm555, %v525
        %566 = vst.msk [vmem:[#allocation2 + $0x28] sm:$0xff] %vm555, %v526
        %567 = vst.msk [vmem:[#allocation2 + $0x30] sm:$0xff] %vm555, %v527
        %568 = vst.msk [vmem:[#allocation2 + $0x38] sm:$0xff] %vm555, %v528
        %569 = vst.msk [vmem:[#allocation2 + $0x40] sm:$0xff] %vm555, %v529
        %570 = vst.msk [vmem:[#allocation2 + $0x48] sm:$0xff] %vm555, %v530
        %571 = vst.msk [vmem:[#allocation2 + $0x50] sm:$0xff] %vm555, %v531
        %572 = vst.msk [vmem:[#allocation2 + $0x58] sm:$0xff] %vm555, %v532
        %573 = vst.msk [vmem:[#allocation2 + $0x60] sm:$0xff] %vm555, %v533
        %574 = vst.msk [vmem:[#allocation2 + $0x68] sm:$0xff] %vm555, %v534
        %575 = vst.msk [vmem:[#allocation2 + $0x70] sm:$0xff] %vm555, %v535
        %576 = vst.msk [vmem:[#allocation2 + $0x78] sm:$0xff] %vm555, %v536
        %577 = vst.msk [vmem:[#allocation2 + $0x80] sm:$0xff] %vm555, %v537
        %578 = vst.msk [vmem:[#allocation2 + $0x88] sm:$0xff] %vm555, %v538
        %579 = vst.msk [vmem:[#allocation2 + $0x90] sm:$0xff] %vm555, %v539
        %580 = vst.msk [vmem:[#allocation2 + $0x98] sm:$0xff] %vm555, %v540
        %581 = vst.msk [vmem:[#allocation2 + $0xa0] sm:$0xff] %vm555, %v541
        %582 = vst.msk [vmem:[#allocation2 + $0xa8] sm:$0xff] %vm555, %v542
        %583 = vst.msk [vmem:[#allocation2 + $0xb0] sm:$0xff] %vm555, %v543
        %584 = vst.msk [vmem:[#allocation2 + $0xb8] sm:$0xff] %vm555, %v544
        %585 = vst.msk [vmem:[#allocation2 + $0xc0] sm:$0xff] %vm555, %v545
        %586 = vst.msk [vmem:[#allocation2 + $0xc8] sm:$0xff] %vm555, %v546
        %587 = vst.msk [vmem:[#allocation2 + $0xd0] sm:$0xff] %vm555, %v547
        %588 = vst.msk [vmem:[#allocation2 + $0xd8] sm:$0xff] %vm555, %v548
        %589 = vst.msk [vmem:[#allocation2 + $0xe0] sm:$0xff] %vm555, %v549
        %590 = vst.msk [vmem:[#allocation2 + $0xe8] sm:$0xff] %vm555, %v550
        %591 = vst.msk [vmem:[#allocation2 + $0xf0] sm:$0xff] %vm555, %v551
        %592 = vst.msk [vmem:[#allocation2 + $0xf8] sm:$0xff] %vm555, %v552
        %593 = vst.msk [vmem:[#allocation2 + $0x100] sm:$0xff] %vm555, %v553
        %594 = vst.msk [vmem:[#allocation2 + $0x108] sm:$0xff] %vm555, %v554
        %v595 = vld [vmem:[#allocation2] sm:$0xff]
        %v596 = vld [vmem:[#allocation2 + $0x8] sm:$0xff]
        %v597 = vld [vmem:[#allocation2 + $0x10] sm:$0xff]
        %v598 = vld [vmem:[#allocation2 + $0x18] sm:$0xff]
        %v599 = vmax.f32 %v595, %v597
        %v600 = vmax.f32 %v596, %v598
        %v601 = vld [vmem:[#allocation2 + $0x20] sm:$0xff]
        %v602 = vld [vmem:[#allocation2 + $0x28] sm:$0xff]
        %v603 = vmax.f32 %v599, %v601
        %v604 = vmax.f32 %v600, %v602
        %605 = vst.msk [vmem:[#allocation3 + $0x8] sm:$0xff] %vm555, %v603
        %606 = vst.msk [vmem:[#allocation3 + $0x10] sm:$0xff] %vm555, %v604
        %s607 = scalar_lea.vmem [#allocation3], 7
        %v608 = vld [vmem:[%s607] ss:$2 sm:$0xff]
        %s609 = scalar_lea.vmem [#allocation3], 8
        %v610 = vld [vmem:[%s609] ss:$2 sm:$0xff]
        %v611 = vmax.f32 %v608, %v610
        %s612 = scalar_lea.vmem [#allocation3], 9
        %v613 = vld [vmem:[%s612] ss:$2 sm:$0xff]
        %v614 = vmax.f32 %v611, %v613
        %615 = vst.msk [vmem:[#allocation4 + $0x10] sm:$0xff] %vm555, %v614
        %v616 = vld [vmem:[#allocation2 + $0x20] sm:$0xff]
        %v617 = vld [vmem:[#allocation2 + $0x28] sm:$0xff]
        %v618 = vld [vmem:[#allocation2 + $0x30] sm:$0xff]
        %v619 = vld [vmem:[#allocation2 + $0x38] sm:$0xff]
        %v620 = vmax.f32 %v616, %v618
        %v621 = vmax.f32 %v617, %v619
        %v622 = vld [vmem:[#allocation2 + $0x40] sm:$0xff]
        %v623 = vld [vmem:[#allocation2 + $0x48] sm:$0xff]
        %v624 = vmax.f32 %v620, %v622
        %v625 = vmax.f32 %v621, %v623
        %626 = vst.msk [vmem:[#allocation3 + $0x8] sm:$0xff] %vm555, %v624
        %627 = vst.msk [vmem:[#allocation3 + $0x10] sm:$0xff] %vm555, %v625
        %v628 = vld [vmem:[%s607] ss:$2 sm:$0xff]
        %v629 = vld [vmem:[%s609] ss:$2 sm:$0xff]
        %v630 = vmax.f32 %v628, %v629
        %v631 = vld [vmem:[%s612] ss:$2 sm:$0xff]
        %v632 = vmax.f32 %v630, %v631
        %633 = vst.msk [vmem:[#allocation4 + $0x18] sm:$0xff] %vm555, %v632
        %v634 = vld [vmem:[#allocation2 + $0x40] sm:$0xff]
        %v635 = vld [vmem:[#allocation2 + $0x48] sm:$0xff]
        %v636 = vld [vmem:[#allocation2 + $0x50] sm:$0xff]
        %v637 = vld [vmem:[#allocation2 + $0x58] sm:$0xff]
        %v638 = vmax.f32 %v634, %v636
        %v639 = vmax.f32 %v635, %v637
        %v640 = vld [vmem:[#allocation2 + $0x60] sm:$0xff]
        %v641 = vld [vmem:[#allocation2 + $0x68] sm:$0xff]
        %v642 = vmax.f32 %v638, %v640
        %v643 = vmax.f32 %v639, %v641
        %644 = vst.msk [vmem:[#allocation3 + $0x8] sm:$0xff] %vm555, %v642
        %645 = vst.msk [vmem:[#allocation3 + $0x10] sm:$0xff] %vm555, %v643
        %v646 = vld [vmem:[%s607] ss:$2 sm:$0xff]
        %v647 = vld [vmem:[%s609] ss:$2 sm:$0xff]
        %v648 = vmax.f32 %v646, %v647
        %v649 = vld [vmem:[%s612] ss:$2 sm:$0xff]
        %v650 = vmax.f32 %v648, %v649
        %651 = vst.msk [vmem:[#allocation4 + $0x20] sm:$0xff] %vm555, %v650
        %v652 = vld [vmem:[#allocation2 + $0x60] sm:$0xff]
        %v653 = vld [vmem:[#allocation2 + $0x68] sm:$0xff]
        %v654 = vld [vmem:[#allocation2 + $0x70] sm:$0xff]
        %v655 = vld [vmem:[#allocation2 + $0x78] sm:$0xff]
        %v656 = vmax.f32 %v652, %v654
        %v657 = vmax.f32 %v653, %v655
        %v658 = vld [vmem:[#allocation2 + $0x80] sm:$0xff]
        %v659 = vld [vmem:[#allocation2 + $0x88] sm:$0xff]
        %v660 = vmax.f32 %v656, %v658
        %v661 = vmax.f32 %v657, %v659
        %662 = vst.msk [vmem:[#allocation3 + $0x8] sm:$0xff] %vm555, %v660
        %663 = vst.msk [vmem:[#allocation3 + $0x10] sm:$0xff] %vm555, %v661
        %v664 = vld [vmem:[%s607] ss:$2 sm:$0xff]
        %v665 = vld [vmem:[%s609] ss:$2 sm:$0xff]
        %v666 = vmax.f32 %v664, %v665
        %v667 = vld [vmem:[%s612] ss:$2 sm:$0xff]
        %v668 = vmax.f32 %v666, %v667
        %669 = vst.msk [vmem:[#allocation4 + $0x28] sm:$0xff] %vm555, %v668
        %v670 = vld [vmem:[#allocation2 + $0x80] sm:$0xff]
        %v671 = vld [vmem:[#allocation2 + $0x88] sm:$0xff]
        %v672 = vld [vmem:[#allocation2 + $0x90] sm:$0xff]
        %v673 = vld [vmem:[#allocation2 + $0x98] sm:$0xff]
        %v674 = vmax.f32 %v670, %v672
        %v675 = vmax.f32 %v671, %v673
        %v676 = vld [vmem:[#allocation2 + $0xa0] sm:$0xff]
        %v677 = vld [vmem:[#allocation2 + $0xa8] sm:$0xff]
        %v678 = vmax.f32 %v674, %v676
        %v679 = vmax.f32 %v675, %v677
        %680 = vst.msk [vmem:[#allocation3 + $0x8] sm:$0xff] %vm555, %v678
        %681 = vst.msk [vmem:[#allocation3 + $0x10] sm:$0xff] %vm555, %v679
        %v682 = vld [vmem:[%s607] ss:$2 sm:$0xff]
        %v683 = vld [vmem:[%s609] ss:$2 sm:$0xff]
        %v684 = vmax.f32 %v682, %v683
        %v685 = vld [vmem:[%s612] ss:$2 sm:$0xff]
        %v686 = vmax.f32 %v684, %v685
        %687 = vst.msk [vmem:[#allocation4 + $0x30] sm:$0xff] %vm555, %v686
        %v688 = vld [vmem:[#allocation2 + $0xa0] sm:$0xff]
        %v689 = vld [vmem:[#allocation2 + $0xa8] sm:$0xff]
        %v690 = vld [vmem:[#allocation2 + $0xb0] sm:$0xff]
        %v691 = vld [vmem:[#allocation2 + $0xb8] sm:$0xff]
        %v692 = vmax.f32 %v688, %v690
        %v693 = vmax.f32 %v689, %v691
        %v694 = vld [vmem:[#allocation2 + $0xc0] sm:$0xff]
        %v695 = vld [vmem:[#allocation2 + $0xc8] sm:$0xff]
        %v696 = vmax.f32 %v692, %v694
        %v697 = vmax.f32 %v693, %v695
        %698 = vst.msk [vmem:[#allocation3 + $0x8] sm:$0xff] %vm555, %v696
        %699 = vst.msk [vmem:[#allocation3 + $0x10] sm:$0xff] %vm555, %v697
        %v700 = vld [vmem:[%s607] ss:$2 sm:$0xff]
        %v701 = vld [vmem:[%s609] ss:$2 sm:$0xff]
        %v702 = vmax.f32 %v700, %v701
        %v703 = vld [vmem:[%s612] ss:$2 sm:$0xff]
        %v704 = vmax.f32 %v702, %v703
        %705 = vst.msk [vmem:[#allocation4 + $0x38] sm:$0xff] %vm555, %v704
        %v706 = vld [vmem:[#allocation2 + $0xc0] sm:$0xff]
        %v707 = vld [vmem:[#allocation2 + $0xc8] sm:$0xff]
        %v708 = vld [vmem:[#allocation2 + $0xd0] sm:$0xff]
        %v709 = vld [vmem:[#allocation2 + $0xd8] sm:$0xff]
        %v710 = vmax.f32 %v706, %v708
        %v711 = vmax.f32 %v707, %v709
        %v712 = vld [vmem:[#allocation2 + $0xe0] sm:$0xff]
        %v713 = vld [vmem:[#allocation2 + $0xe8] sm:$0xff]
        %v714 = vmax.f32 %v710, %v712
        %v715 = vmax.f32 %v711, %v713
        %716 = vst.msk [vmem:[#allocation3 + $0x8] sm:$0xff] %vm555, %v714
        %717 = vst.msk [vmem:[#allocation3 + $0x10] sm:$0xff] %vm555, %v715
        %v718 = vld [vmem:[%s607] ss:$2 sm:$0xff]
        %v719 = vld [vmem:[%s609] ss:$2 sm:$0xff]
        %v720 = vmax.f32 %v718, %v719
        %v721 = vld [vmem:[%s612] ss:$2 sm:$0xff]
        %v722 = vmax.f32 %v720, %v721
        %723 = vst.msk [vmem:[#allocation4 + $0x40] sm:$0xff] %vm555, %v722
        %v724 = vld [vmem:[#allocation2 + $0xe0] sm:$0xff]
        %v725 = vld [vmem:[#allocation2 + $0xe8] sm:$0xff]
        %v726 = vld [vmem:[#allocation2 + $0xf0] sm:$0xff]
        %v727 = vld [vmem:[#allocation2 + $0xf8] sm:$0xff]
        %v728 = vmax.f32 %v724, %v726
        %v729 = vmax.f32 %v725, %v727
        %v730 = vld [vmem:[#allocation2 + $0x100] sm:$0xff]
        %v731 = vld [vmem:[#allocation2 + $0x108] sm:$0xff]
        %v732 = vmax.f32 %v728, %v730
        %v733 = vmax.f32 %v729, %v731
        %734 = vst.msk [vmem:[#allocation3 + $0x8] sm:$0xff] %vm555, %v732
        %735 = vst.msk [vmem:[#allocation3 + $0x10] sm:$0xff] %vm555, %v733
        %v736 = vld [vmem:[%s607] ss:$2 sm:$0xff]
        %v737 = vld [vmem:[%s609] ss:$2 sm:$0xff]
        %v738 = vmax.f32 %v736, %v737
        %v739 = vld [vmem:[%s612] ss:$2 sm:$0xff]
        %v740 = vmax.f32 %v738, %v739
        %741 = vst.msk [vmem:[#allocation4 + $0x48] sm:$0xff] %vm555, %v740
        %v742 = vlaneseq
        %v743 = vshrl.u32 %v742, 7
        %v744 = vadd.s32 %v743, 8
        %v745 = vadd.s32 %v743, 16
        %v746 = vadd.s32 %v743, 24
        %v747 = vadd.s32 %v743, 32
        %v748 = vadd.s32 %v743, 40
        %v749 = vadd.s32 %v743, 48
        %v750 = vadd.s32 %v743, 56
        %vm751 = vcmp.lt.s32.totalorder %v743, 0
        %v752 = vsub.s32 0, %v743
        %v753 = vsel %vm751, %v752, %v743
        %v754 = vshrl.u32 %v753, 3
        %v755 = vand.u32 %v753, 7
        %v756 = vsub.s32 0, %v755
        %v757 = vsel %vm751, %v756, %v755
        %vm758 = vcmp.lt.s32.totalorder %v744, 0
        %v759 = vsub.s32 0, %v744
        %v760 = vsel %vm758, %v759, %v744
        %v761 = vshrl.u32 %v760, 3
        %v762 = vand.u32 %v760, 7
        %v763 = vsub.s32 0, %v762
        %v764 = vsel %vm758, %v763, %v762
        %vm765 = vcmp.lt.s32.totalorder %v745, 0
        %v766 = vsub.s32 0, %v745
        %v767 = vsel %vm765, %v766, %v745
        %v768 = vshrl.u32 %v767, 3
        %v769 = vand.u32 %v767, 7
        %v770 = vsub.s32 0, %v769
        %v771 = vsel %vm765, %v770, %v769
        %vm772 = vcmp.lt.s32.totalorder %v746, 0
        %v773 = vsub.s32 0, %v746
        %v774 = vsel %vm772, %v773, %v746
        %v775 = vshrl.u32 %v774, 3
        %v776 = vand.u32 %v774, 7
        %v777 = vsub.s32 0, %v776
        %v778 = vsel %vm772, %v777, %v776
        %vm779 = vcmp.lt.s32.totalorder %v747, 0
        %v780 = vsub.s32 0, %v747
        %v781 = vsel %vm779, %v780, %v747
        %v782 = vshrl.u32 %v781, 3
        %v783 = vand.u32 %v781, 7
        %v784 = vsub.s32 0, %v783
        %v785 = vsel %vm779, %v784, %v783
        %vm786 = vcmp.lt.s32.totalorder %v748, 0
        %v787 = vsub.s32 0, %v748
        %v788 = vsel %vm786, %v787, %v748
        %v789 = vshrl.u32 %v788, 3
        %v790 = vand.u32 %v788, 7
        %v791 = vsub.s32 0, %v790
        %v792 = vsel %vm786, %v791, %v790
        %vm793 = vcmp.lt.s32.totalorder %v749, 0
        %v794 = vsub.s32 0, %v749
        %v795 = vsel %vm793, %v794, %v749
        %v796 = vshrl.u32 %v795, 3
        %v797 = vand.u32 %v795, 7
        %v798 = vsub.s32 0, %v797
        %v799 = vsel %vm793, %v798, %v797
        %vm800 = vcmp.lt.s32.totalorder %v750, 0
        %v801 = vsub.s32 0, %v750
        %v802 = vsel %vm800, %v801, %v750
        %v803 = vshrl.u32 %v802, 3
        %v804 = vand.u32 %v802, 7
        %v805 = vsub.s32 0, %v804
        %v806 = vsel %vm800, %v805, %v804
        %vm807 = vcmp.ne.s32.totalorder %v757, 0
        %vm808 = vcmp.ne.s32.totalorder %v764, 0
        %vm809 = vcmp.ne.s32.totalorder %v771, 0
        %vm810 = vcmp.ne.s32.totalorder %v778, 0
        %vm811 = vcmp.ne.s32.totalorder %v785, 0
        %vm812 = vcmp.ne.s32.totalorder %v792, 0
        %vm813 = vcmp.ne.s32.totalorder %v799, 0
        %vm814 = vcmp.ne.s32.totalorder %v806, 0
        %vm815 = vcmp.lt.s32.totalorder %v757, 0
        %vm816 = vcmp.lt.s32.totalorder %v764, 0
        %vm817 = vcmp.lt.s32.totalorder %v771, 0
        %vm818 = vcmp.lt.s32.totalorder %v778, 0
        %vm819 = vcmp.lt.s32.totalorder %v785, 0
        %vm820 = vcmp.lt.s32.totalorder %v792, 0
        %vm821 = vcmp.lt.s32.totalorder %v799, 0
        %vm822 = vcmp.lt.s32.totalorder %v806, 0
        %vm823 = vmand %vm815, %vm807
        %vm824 = vmand %vm816, %vm808
        %vm825 = vmand %vm817, %vm809
        %vm826 = vmand %vm818, %vm810
        %vm827 = vmand %vm819, %vm811
        %vm828 = vmand %vm820, %vm812
        %vm829 = vmand %vm821, %vm813
        %vm830 = vmand %vm822, %vm814
        %v831 = vadd.s32 %v757, 8
        %v832 = vadd.s32 %v764, 8
        %v833 = vadd.s32 %v771, 8
        %v834 = vadd.s32 %v778, 8
        %v835 = vadd.s32 %v785, 8
        %v836 = vadd.s32 %v792, 8
        %v837 = vadd.s32 %v799, 8
        %v838 = vadd.s32 %v806, 8
        %v839 = vsel %vm823, %v831, %v757
        %v840 = vsel %vm824, %v832, %v764
        %v841 = vsel %vm825, %v833, %v771
        %v842 = vsel %vm826, %v834, %v778
        %v843 = vsel %vm827, %v835, %v785
        %v844 = vsel %vm828, %v836, %v792
        %v845 = vsel %vm829, %v837, %v799
        %v846 = vsel %vm830, %v838, %v806
        %vm847 = vcmp.ge.s32.totalorder %v839, 1
        %vm848 = vcmp.ge.s32.totalorder %v840, 1
        %vm849 = vcmp.ge.s32.totalorder %v841, 1
        %vm850 = vcmp.ge.s32.totalorder %v842, 1
        %vm851 = vcmp.ge.s32.totalorder %v843, 1
        %vm852 = vcmp.ge.s32.totalorder %v844, 1
        %vm853 = vcmp.ge.s32.totalorder %v845, 1
        %vm854 = vcmp.ge.s32.totalorder %v846, 1
        %vm855 = vcmp.lt.s32.totalorder %v839, 7
        %vm856 = vcmp.lt.s32.totalorder %v840, 7
        %vm857 = vcmp.lt.s32.totalorder %v841, 7
        %vm858 = vcmp.lt.s32.totalorder %v842, 7
        %vm859 = vcmp.lt.s32.totalorder %v843, 7
        %vm860 = vcmp.lt.s32.totalorder %v844, 7
        %vm861 = vcmp.lt.s32.totalorder %v845, 7
        %vm862 = vcmp.lt.s32.totalorder %v846, 7
        %v863 = vld [vmem:[#allocation4 + $0x10] sm:$0xff]
        %v864 = vld [vmem:[#allocation4 + $0x18] sm:$0xff]
        %v865 = vld [vmem:[#allocation4 + $0x20] sm:$0xff]
        %v866 = vld [vmem:[#allocation4 + $0x28] sm:$0xff]
        %v867 = vld [vmem:[#allocation4 + $0x30] sm:$0xff]
        %v868 = vld [vmem:[#allocation4 + $0x38] sm:$0xff]
        %v869 = vld [vmem:[#allocation4 + $0x40] sm:$0xff]
        %v870 = vld [vmem:[#allocation4 + $0x48] sm:$0xff]
        %v871 = vld [vmem:[#allocation4 + $0x7] sm:$0xff]
        %v872 = vld [vmem:[#allocation4 + $0xf] sm:$0xff]
        %v873 = vld [vmem:[#allocation4 + $0x17] sm:$0xff]
        %v874 = vld [vmem:[#allocation4 + $0x1f] sm:$0xff]
        %v875 = vld [vmem:[#allocation4 + $0x27] sm:$0xff]
        %v876 = vld [vmem:[#allocation4 + $0x2f] sm:$0xff]
        %v877 = vld [vmem:[#allocation4 + $0x37] sm:$0xff]
        %v878 = vld [vmem:[#allocation4 + $0x3f] sm:$0xff]
        %v879 = vsel %vm847, 1, 0
        %v880 = vsel %vm848, 1, 0
        %v881 = vsel %vm849, 1, 0
        %v882 = vsel %vm850, 1, 0
        %v883 = vsel %vm851, 1, 0
        %v884 = vsel %vm852, 1, 0
        %v885 = vsel %vm853, 1, 0
        %v886 = vsel %vm854, 1, 0
        %vm887 = vcmp.eq.s32.totalorder %v879, 1
        %vm888 = vcmp.eq.s32.totalorder %v880, 1
        %vm889 = vcmp.eq.s32.totalorder %v881, 1
        %vm890 = vcmp.eq.s32.totalorder %v882, 1
        %vm891 = vcmp.eq.s32.totalorder %v883, 1
        %vm892 = vcmp.eq.s32.totalorder %v884, 1
        %vm893 = vcmp.eq.s32.totalorder %v885, 1
        %vm894 = vcmp.eq.s32.totalorder %v886, 1
        %v895 = vsel %vm887, %v871, 0.0
        %v896 = vsel %vm888, %v872, 0.0
        %v897 = vsel %vm889, %v873, 0.0
        %v898 = vsel %vm890, %v874, 0.0
        %v899 = vsel %vm891, %v875, 0.0
        %v900 = vsel %vm892, %v876, 0.0
        %v901 = vsel %vm893, %v877, 0.0
        %v902 = vsel %vm894, %v878, 0.0
        %903 = vst.msk [vmem:[#allocation5] sm:$0xff] %vm555, %v895
        %904 = vst.msk [vmem:[#allocation5 + $0x28] sm:$0xff] %vm555, %v896
        %905 = vst.msk [vmem:[#allocation5 + $0x50] sm:$0xff] %vm555, %v897
        %906 = vst.msk [vmem:[#allocation5 + $0x78] sm:$0xff] %vm555, %v898
        %907 = vst.msk [vmem:[#allocation5 + $0xa0] sm:$0xff] %vm555, %v899
        %908 = vst.msk [vmem:[#allocation5 + $0xc8] sm:$0xff] %vm555, %v900
        %909 = vst.msk [vmem:[#allocation5 + $0xf0] sm:$0xff] %vm555, %v901
        %910 = vst.msk [vmem:[#allocation5 + $0x118] sm:$0xff] %vm555, %v902
        %v911 = vld [vmem:[#allocation4 + $0x8] sm:$0xff]
        %v912 = vld [vmem:[#allocation4 + $0x10] sm:$0xff]
        %v913 = vld [vmem:[#allocation4 + $0x18] sm:$0xff]
        %v914 = vld [vmem:[#allocation4 + $0x20] sm:$0xff]
        %v915 = vld [vmem:[#allocation4 + $0x28] sm:$0xff]
        %v916 = vld [vmem:[#allocation4 + $0x30] sm:$0xff]
        %v917 = vld [vmem:[#allocation4 + $0x38] sm:$0xff]
        %v918 = vld [vmem:[#allocation4 + $0x40] sm:$0xff]
        %927 = vrot.lane.b32.xlu0 %v911, 64
        %v928 = vpop.permute.xlu0 %927
        %929 = vrot.lane.b32.xlu0 %v912, 64
        %v930 = vpop.permute.xlu0 %929
        %931 = vrot.lane.b32.xlu0 %v913, 64
        %v932 = vpop.permute.xlu0 %931
        %933 = vrot.lane.b32.xlu0 %v914, 64
        %v934 = vpop.permute.xlu0 %933
        %935 = vrot.lane.b32.xlu0 %v915, 64
        %v936 = vpop.permute.xlu0 %935
        %937 = vrot.lane.b32.xlu0 %v916, 64
        %v938 = vpop.permute.xlu0 %937
        %939 = vrot.lane.b32.xlu0 %v917, 64
        %v940 = vpop.permute.xlu0 %939
        %941 = vrot.lane.b32.xlu0 %v918, 64
        %v942 = vpop.permute.xlu0 %941
        %vm951 = vcmask 1048064
        %952 = vst.msk [vmem:[#allocation5] sm:$0xff] %vm951, %v928
        %953 = vst.msk [vmem:[#allocation5 + $0x28] sm:$0xff] %vm951, %v930
        %954 = vst.msk [vmem:[#allocation5 + $0x50] sm:$0xff] %vm951, %v932
        %955 = vst.msk [vmem:[#allocation5 + $0x78] sm:$0xff] %vm951, %v934
        %956 = vst.msk [vmem:[#allocation5 + $0xa0] sm:$0xff] %vm951, %v936
        %957 = vst.msk [vmem:[#allocation5 + $0xc8] sm:$0xff] %vm951, %v938
        %958 = vst.msk [vmem:[#allocation5 + $0xf0] sm:$0xff] %vm951, %v940
        %959 = vst.msk [vmem:[#allocation5 + $0x118] sm:$0xff] %vm951, %v942
        %v960 = vld [vmem:[#allocation4 + $0x9] sm:$0xff]
        %v961 = vld [vmem:[#allocation4 + $0x11] sm:$0xff]
        %v962 = vld [vmem:[#allocation4 + $0x19] sm:$0xff]
        %v963 = vld [vmem:[#allocation4 + $0x21] sm:$0xff]
        %v964 = vld [vmem:[#allocation4 + $0x29] sm:$0xff]
        %v965 = vld [vmem:[#allocation4 + $0x31] sm:$0xff]
        %v966 = vld [vmem:[#allocation4 + $0x39] sm:$0xff]
        %v967 = vld [vmem:[#allocation4 + $0x41] sm:$0xff]
        %v968 = vsel %vm855, 1, 0
        %v969 = vsel %vm856, 1, 0
        %v970 = vsel %vm857, 1, 0
        %v971 = vsel %vm858, 1, 0
        %v972 = vsel %vm859, 1, 0
        %v973 = vsel %vm860, 1, 0
        %v974 = vsel %vm861, 1, 0
        %v975 = vsel %vm862, 1, 0
        %vm976 = vcmp.eq.s32.totalorder %v968, 1
        %vm977 = vcmp.eq.s32.totalorder %v969, 1
        %vm978 = vcmp.eq.s32.totalorder %v970, 1
        %vm979 = vcmp.eq.s32.totalorder %v971, 1
        %vm980 = vcmp.eq.s32.totalorder %v972, 1
        %vm981 = vcmp.eq.s32.totalorder %v973, 1
        %vm982 = vcmp.eq.s32.totalorder %v974, 1
        %vm983 = vcmp.eq.s32.totalorder %v975, 1
        %v984 = vsel %vm976, %v960, 0.0
        %v985 = vsel %vm977, %v961, 0.0
        %v986 = vsel %vm978, %v962, 0.0
        %v987 = vsel %vm979, %v963, 0.0
        %v988 = vsel %vm980, %v964, 0.0
        %v989 = vsel %vm981, %v965, 0.0
        %v990 = vsel %vm982, %v966, 0.0
        %v991 = vsel %vm983, %v967, 0.0
        %992 = vst.msk [vmem:[#allocation5 + $0x8] sm:$0xff] %vm555, %v984
        %993 = vst.msk [vmem:[#allocation5 + $0x30] sm:$0xff] %vm555, %v985
        %994 = vst.msk [vmem:[#allocation5 + $0x58] sm:$0xff] %vm555, %v986
        %995 = vst.msk [vmem:[#allocation5 + $0x80] sm:$0xff] %vm555, %v987
        %996 = vst.msk [vmem:[#allocation5 + $0xa8] sm:$0xff] %vm555, %v988
        %997 = vst.msk [vmem:[#allocation5 + $0xd0] sm:$0xff] %vm555, %v989
        %998 = vst.msk [vmem:[#allocation5 + $0xf8] sm:$0xff] %vm555, %v990
        %999 = vst.msk [vmem:[#allocation5 + $0x120] sm:$0xff] %vm555, %v991
        %v1000 = vld [vmem:[#allocation4 + $0xf] sm:$0xff]
        %v1001 = vld [vmem:[#allocation4 + $0x17] sm:$0xff]
        %v1002 = vld [vmem:[#allocation4 + $0x1f] sm:$0xff]
        %v1003 = vld [vmem:[#allocation4 + $0x27] sm:$0xff]
        %v1004 = vld [vmem:[#allocation4 + $0x2f] sm:$0xff]
        %v1005 = vld [vmem:[#allocation4 + $0x37] sm:$0xff]
        %v1006 = vld [vmem:[#allocation4 + $0x3f] sm:$0xff]
        %v1007 = vld [vmem:[#allocation4 + $0x47] sm:$0xff]
        %v1008 = vsel %vm887, %v1000, 0.0
        %v1009 = vsel %vm888, %v1001, 0.0
        %v1010 = vsel %vm889, %v1002, 0.0
        %v1011 = vsel %vm890, %v1003, 0.0
        %v1012 = vsel %vm891, %v1004, 0.0
        %v1013 = vsel %vm892, %v1005, 0.0
        %v1014 = vsel %vm893, %v1006, 0.0
        %v1015 = vsel %vm894, %v1007, 0.0
        %1024 = vrot.lane.b32.xlu0 %v1008, 64
        %v1025 = vpop.permute.xlu0 %1024
        %1026 = vrot.lane.b32.xlu0 %v1009, 64
        %v1027 = vpop.permute.xlu0 %1026
        %1028 = vrot.lane.b32.xlu0 %v1010, 64
        %v1029 = vpop.permute.xlu0 %1028
        %1030 = vrot.lane.b32.xlu0 %v1011, 64
        %v1031 = vpop.permute.xlu0 %1030
        %1032 = vrot.lane.b32.xlu0 %v1012, 64
        %v1033 = vpop.permute.xlu0 %1032
        %1034 = vrot.lane.b32.xlu0 %v1013, 64
        %v1035 = vpop.permute.xlu0 %1034
        %1036 = vrot.lane.b32.xlu0 %v1014, 64
        %v1037 = vpop.permute.xlu0 %1036
        %1038 = vrot.lane.b32.xlu0 %v1015, 64
        %v1039 = vpop.permute.xlu0 %1038
        %1048 = vst.msk [vmem:[#allocation5 + $0x8] sm:$0xff] %vm951, %v1025
        %1049 = vst.msk [vmem:[#allocation5 + $0x30] sm:$0xff] %vm951, %v1027
        %1050 = vst.msk [vmem:[#allocation5 + $0x58] sm:$0xff] %vm951, %v1029
        %1051 = vst.msk [vmem:[#allocation5 + $0x80] sm:$0xff] %vm951, %v1031
        %1052 = vst.msk [vmem:[#allocation5 + $0xa8] sm:$0xff] %vm951, %v1033
        %1053 = vst.msk [vmem:[#allocation5 + $0xd0] sm:$0xff] %vm951, %v1035
        %1054 = vst.msk [vmem:[#allocation5 + $0xf8] sm:$0xff] %vm951, %v1037
        %1055 = vst.msk [vmem:[#allocation5 + $0x120] sm:$0xff] %vm951, %v1039
        %v1056 = vld [vmem:[#allocation4 + $0x10] sm:$0xff]
        %v1057 = vld [vmem:[#allocation4 + $0x18] sm:$0xff]
        %v1058 = vld [vmem:[#allocation4 + $0x20] sm:$0xff]
        %v1059 = vld [vmem:[#allocation4 + $0x28] sm:$0xff]
        %v1060 = vld [vmem:[#allocation4 + $0x30] sm:$0xff]
        %v1061 = vld [vmem:[#allocation4 + $0x38] sm:$0xff]
        %v1062 = vld [vmem:[#allocation4 + $0x40] sm:$0xff]
        %v1063 = vld [vmem:[#allocation4 + $0x48] sm:$0xff]
        %1064 = vst.msk [vmem:[#allocation5 + $0x10] sm:$0xff] %vm555, %v1056
        %1065 = vst.msk [vmem:[#allocation5 + $0x38] sm:$0xff] %vm555, %v1057
        %1066 = vst.msk [vmem:[#allocation5 + $0x60] sm:$0xff] %vm555, %v1058
        %1067 = vst.msk [vmem:[#allocation5 + $0x88] sm:$0xff] %vm555, %v1059
        %1068 = vst.msk [vmem:[#allocation5 + $0xb0] sm:$0xff] %vm555, %v1060
        %1069 = vst.msk [vmem:[#allocation5 + $0xd8] sm:$0xff] %vm555, %v1061
        %1070 = vst.msk [vmem:[#allocation5 + $0x100] sm:$0xff] %vm555, %v1062
        %1071 = vst.msk [vmem:[#allocation5 + $0x128] sm:$0xff] %vm555, %v1063
        %v1072 = vld [vmem:[#allocation4 + $0x11] sm:$0xff]
        %v1073 = vld [vmem:[#allocation4 + $0x19] sm:$0xff]
        %v1074 = vld [vmem:[#allocation4 + $0x21] sm:$0xff]
        %v1075 = vld [vmem:[#allocation4 + $0x29] sm:$0xff]
        %v1076 = vld [vmem:[#allocation4 + $0x31] sm:$0xff]
        %v1077 = vld [vmem:[#allocation4 + $0x39] sm:$0xff]
        %v1078 = vld [vmem:[#allocation4 + $0x41] sm:$0xff]
        %v1079 = vld [vmem:[#allocation4 + $0x49] sm:$0xff]
        %v1080 = vsel %vm976, %v1072, 0.0
        %v1081 = vsel %vm977, %v1073, 0.0
        %v1082 = vsel %vm978, %v1074, 0.0
        %v1083 = vsel %vm979, %v1075, 0.0
        %v1084 = vsel %vm980, %v1076, 0.0
        %v1085 = vsel %vm981, %v1077, 0.0
        %v1086 = vsel %vm982, %v1078, 0.0
        %v1087 = vsel %vm983, %v1079, 0.0
        %1096 = vrot.lane.b32.xlu0 %v1080, 64
        %v1097 = vpop.permute.xlu0 %1096
        %1098 = vrot.lane.b32.xlu0 %v1081, 64
        %v1099 = vpop.permute.xlu0 %1098
        %1100 = vrot.lane.b32.xlu0 %v1082, 64
        %v1101 = vpop.permute.xlu0 %1100
        %1102 = vrot.lane.b32.xlu0 %v1083, 64
        %v1103 = vpop.permute.xlu0 %1102
        %1104 = vrot.lane.b32.xlu0 %v1084, 64
        %v1105 = vpop.permute.xlu0 %1104
        %1106 = vrot.lane.b32.xlu0 %v1085, 64
        %v1107 = vpop.permute.xlu0 %1106
        %1108 = vrot.lane.b32.xlu0 %v1086, 64
        %v1109 = vpop.permute.xlu0 %1108
        %1110 = vrot.lane.b32.xlu0 %v1087, 64
        %v1111 = vpop.permute.xlu0 %1110
        %1120 = vst.msk [vmem:[#allocation5 + $0x10] sm:$0xff] %vm951, %v1097
        %1121 = vst.msk [vmem:[#allocation5 + $0x38] sm:$0xff] %vm951, %v1099
        %1122 = vst.msk [vmem:[#allocation5 + $0x60] sm:$0xff] %vm951, %v1101
        %1123 = vst.msk [vmem:[#allocation5 + $0x88] sm:$0xff] %vm951, %v1103
        %1124 = vst.msk [vmem:[#allocation5 + $0xb0] sm:$0xff] %vm951, %v1105
        %1125 = vst.msk [vmem:[#allocation5 + $0xd8] sm:$0xff] %vm951, %v1107
        %1126 = vst.msk [vmem:[#allocation5 + $0x100] sm:$0xff] %vm951, %v1109
        %1127 = vst.msk [vmem:[#allocation5 + $0x128] sm:$0xff] %vm951, %v1111
        %v1128 = vld [vmem:[#allocation4 + $0x17] sm:$0xff]
        %v1129 = vld [vmem:[#allocation4 + $0x1f] sm:$0xff]
        %v1130 = vld [vmem:[#allocation4 + $0x27] sm:$0xff]
        %v1131 = vld [vmem:[#allocation4 + $0x2f] sm:$0xff]
        %v1132 = vld [vmem:[#allocation4 + $0x37] sm:$0xff]
        %v1133 = vld [vmem:[#allocation4 + $0x3f] sm:$0xff]
        %v1134 = vld [vmem:[#allocation4 + $0x47] sm:$0xff]
        %v1135 = vld [vmem:[#allocation4 + $0x4f] sm:$0xff]
        %v1136 = vsel %vm887, %v1128, 0.0
        %v1137 = vsel %vm888, %v1129, 0.0
        %v1138 = vsel %vm889, %v1130, 0.0
        %v1139 = vsel %vm890, %v1131, 0.0
        %v1140 = vsel %vm891, %v1132, 0.0
        %v1141 = vsel %vm892, %v1133, 0.0
        %v1142 = vsel %vm893, %v1134, 0.0
        %v1143 = vsel %vm894, %v1135, 0.0
        %1144 = vst.msk [vmem:[#allocation5 + $0x18] sm:$0xff] %vm555, %v1136
        %1145 = vst.msk [vmem:[#allocation5 + $0x40] sm:$0xff] %vm555, %v1137
        %1146 = vst.msk [vmem:[#allocation5 + $0x68] sm:$0xff] %vm555, %v1138
        %1147 = vst.msk [vmem:[#allocation5 + $0x90] sm:$0xff] %vm555, %v1139
        %1148 = vst.msk [vmem:[#allocation5 + $0xb8] sm:$0xff] %vm555, %v1140
        %1149 = vst.msk [vmem:[#allocation5 + $0xe0] sm:$0xff] %vm555, %v1141
        %1150 = vst.msk [vmem:[#allocation5 + $0x108] sm:$0xff] %vm555, %v1142
        %1151 = vst.msk [vmem:[#allocation5 + $0x130] sm:$0xff] %vm555, %v1143
        %v1152 = vld [vmem:[#allocation4 + $0x18] sm:$0xff]
        %v1153 = vld [vmem:[#allocation4 + $0x20] sm:$0xff]
        %v1154 = vld [vmem:[#allocation4 + $0x28] sm:$0xff]
        %v1155 = vld [vmem:[#allocation4 + $0x30] sm:$0xff]
        %v1156 = vld [vmem:[#allocation4 + $0x38] sm:$0xff]
        %v1157 = vld [vmem:[#allocation4 + $0x40] sm:$0xff]
        %v1158 = vld [vmem:[#allocation4 + $0x48] sm:$0xff]
        %v1159 = vld [vmem:[#allocation4 + $0x50] sm:$0xff]
        %1168 = vrot.lane.b32.xlu0 %v1152, 64
        %v1169 = vpop.permute.xlu0 %1168
        %1170 = vrot.lane.b32.xlu0 %v1153, 64
        %v1171 = vpop.permute.xlu0 %1170
        %1172 = vrot.lane.b32.xlu0 %v1154, 64
        %v1173 = vpop.permute.xlu0 %1172
        %1174 = vrot.lane.b32.xlu0 %v1155, 64
        %v1175 = vpop.permute.xlu0 %1174
        %1176 = vrot.lane.b32.xlu0 %v1156, 64
        %v1177 = vpop.permute.xlu0 %1176
        %1178 = vrot.lane.b32.xlu0 %v1157, 64
        %v1179 = vpop.permute.xlu0 %1178
        %1180 = vrot.lane.b32.xlu0 %v1158, 64
        %v1181 = vpop.permute.xlu0 %1180
        %1182 = vrot.lane.b32.xlu0 %v1159, 64
        %v1183 = vpop.permute.xlu0 %1182
        %1192 = vst.msk [vmem:[#allocation5 + $0x18] sm:$0xff] %vm951, %v1169
        %1193 = vst.msk [vmem:[#allocation5 + $0x40] sm:$0xff] %vm951, %v1171
        %1194 = vst.msk [vmem:[#allocation5 + $0x68] sm:$0xff] %vm951, %v1173
        %1195 = vst.msk [vmem:[#allocation5 + $0x90] sm:$0xff] %vm951, %v1175
        %1196 = vst.msk [vmem:[#allocation5 + $0xb8] sm:$0xff] %vm951, %v1177
        %1197 = vst.msk [vmem:[#allocation5 + $0xe0] sm:$0xff] %vm951, %v1179
        %1198 = vst.msk [vmem:[#allocation5 + $0x108] sm:$0xff] %vm951, %v1181
        %1199 = vst.msk [vmem:[#allocation5 + $0x130] sm:$0xff] %vm951, %v1183
        %v1200 = vld [vmem:[#allocation4 + $0x19] sm:$0xff]
        %v1201 = vld [vmem:[#allocation4 + $0x21] sm:$0xff]
        %v1202 = vld [vmem:[#allocation4 + $0x29] sm:$0xff]
        %v1203 = vld [vmem:[#allocation4 + $0x31] sm:$0xff]
        %v1204 = vld [vmem:[#allocation4 + $0x39] sm:$0xff]
        %v1205 = vld [vmem:[#allocation4 + $0x41] sm:$0xff]
        %v1206 = vld [vmem:[#allocation4 + $0x49] sm:$0xff]
        %v1207 = vld [vmem:[#allocation4 + $0x51] sm:$0xff]
        %v1208 = vsel %vm976, %v1200, 0.0
        %v1209 = vsel %vm977, %v1201, 0.0
        %v1210 = vsel %vm978, %v1202, 0.0
        %v1211 = vsel %vm979, %v1203, 0.0
        %v1212 = vsel %vm980, %v1204, 0.0
        %v1213 = vsel %vm981, %v1205, 0.0
        %v1214 = vsel %vm982, %v1206, 0.0
        %v1215 = vsel %vm983, %v1207, 0.0
        %1216 = vst.msk [vmem:[#allocation5 + $0x20] sm:$0xff] %vm555, %v1208
        %1217 = vst.msk [vmem:[#allocation5 + $0x48] sm:$0xff] %vm555, %v1209
        %1218 = vst.msk [vmem:[#allocation5 + $0x70] sm:$0xff] %vm555, %v1210
        %1219 = vst.msk [vmem:[#allocation5 + $0x98] sm:$0xff] %vm555, %v1211
        %1220 = vst.msk [vmem:[#allocation5 + $0xc0] sm:$0xff] %vm555, %v1212
        %1221 = vst.msk [vmem:[#allocation5 + $0xe8] sm:$0xff] %vm555, %v1213
        %1222 = vst.msk [vmem:[#allocation5 + $0x110] sm:$0xff] %vm555, %v1214
        %1223 = vst.msk [vmem:[#allocation5 + $0x138] sm:$0xff] %vm555, %v1215
        %v1224 = vld [vmem:[#allocation5] sm:$0xff]
        %v1225 = vld [vmem:[#allocation5 + $0x8] sm:$0xff]
        %v1226 = vld [vmem:[#allocation5 + $0x10] sm:$0xff]
        %v1227 = vld [vmem:[#allocation5 + $0x18] sm:$0xff]
        %v1228 = vld [vmem:[#allocation5 + $0x20] sm:$0xff]
        %v1229 = vld [vmem:[#allocation5 + $0x28] sm:$0xff]
        %v1230 = vld [vmem:[#allocation5 + $0x30] sm:$0xff]
        %v1231 = vld [vmem:[#allocation5 + $0x38] sm:$0xff]
        %v1232 = vld [vmem:[#allocation5 + $0x40] sm:$0xff]
        %v1233 = vld [vmem:[#allocation5 + $0x48] sm:$0xff]
        %v1234 = vld [vmem:[#allocation5 + $0x50] sm:$0xff]
        %v1235 = vld [vmem:[#allocation5 + $0x58] sm:$0xff]
        %v1236 = vld [vmem:[#allocation5 + $0x60] sm:$0xff]
        %v1237 = vld [vmem:[#allocation5 + $0x68] sm:$0xff]
        %v1238 = vld [vmem:[#allocation5 + $0x70] sm:$0xff]
        %v1239 = vld [vmem:[#allocation5 + $0x78] sm:$0xff]
        %v1240 = vld [vmem:[#allocation5 + $0x80] sm:$0xff]
        %v1241 = vld [vmem:[#allocation5 + $0x88] sm:$0xff]
        %v1242 = vld [vmem:[#allocation5 + $0x90] sm:$0xff]
        %v1243 = vld [vmem:[#allocation5 + $0x98] sm:$0xff]
        %v1244 = vld [vmem:[#allocation5 + $0xa0] sm:$0xff]
        %v1245 = vld [vmem:[#allocation5 + $0xa8] sm:$0xff]
        %v1246 = vld [vmem:[#allocation5 + $0xb0] sm:$0xff]
        %v1247 = vld [vmem:[#allocation5 + $0xb8] sm:$0xff]
        %v1248 = vld [vmem:[#allocation5 + $0xc0] sm:$0xff]
        %v1249 = vld [vmem:[#allocation5 + $0xc8] sm:$0xff]
        %v1250 = vld [vmem:[#allocation5 + $0xd0] sm:$0xff]
        %v1251 = vld [vmem:[#allocation5 + $0xd8] sm:$0xff]
        %v1252 = vld [vmem:[#allocation5 + $0xe0] sm:$0xff]
        %v1253 = vld [vmem:[#allocation5 + $0xe8] sm:$0xff]
        %v1254 = vld [vmem:[#allocation5 + $0xf0] sm:$0xff]
        %v1255 = vld [vmem:[#allocation5 + $0xf8] sm:$0xff]
        %v1256 = vld [vmem:[#allocation5 + $0x100] sm:$0xff]
        %v1257 = vld [vmem:[#allocation5 + $0x108] sm:$0xff]
        %v1258 = vld [vmem:[#allocation5 + $0x110] sm:$0xff]
        %v1259 = vld [vmem:[#allocation5 + $0x118] sm:$0xff]
        %v1260 = vld [vmem:[#allocation5 + $0x120] sm:$0xff]
        %v1261 = vld [vmem:[#allocation5 + $0x128] sm:$0xff]
        %v1262 = vld [vmem:[#allocation5 + $0x130] sm:$0xff]
        %v1263 = vld [vmem:[#allocation5 + $0x138] sm:$0xff]
        %v1264 = vld [vmem:[%s2] sm:$0xff]
        %v1265 = vld [vmem:[%s2 + $0x8] sm:$0xff]
        %v1266 = vld [vmem:[%s2 + $0x10] sm:$0xff]
        %v1267 = vld [vmem:[%s2 + $0x18] sm:$0xff]
        %v1268 = vld [vmem:[%s2 + $0x20] sm:$0xff]
        %v1269 = vld [vmem:[%s2 + $0x28] sm:$0xff]
        %v1270 = vld [vmem:[%s2 + $0x30] sm:$0xff]
        %v1271 = vld [vmem:[%s2 + $0x38] sm:$0xff]
        %v1272 = vld [vmem:[%s2 + $0x40] sm:$0xff]
        %v1273 = vld [vmem:[%s2 + $0x48] sm:$0xff]
        %v1274 = vld [vmem:[%s2 + $0x50] sm:$0xff]
        %v1275 = vld [vmem:[%s2 + $0x58] sm:$0xff]
        %v1276 = vld [vmem:[%s2 + $0x60] sm:$0xff]
        %v1277 = vld [vmem:[%s2 + $0x68] sm:$0xff]
        %v1278 = vld [vmem:[%s2 + $0x70] sm:$0xff]
        %v1279 = vld [vmem:[%s2 + $0x78] sm:$0xff]
        %v1280 = vld [vmem:[%s2 + $0x80] sm:$0xff]
        %v1281 = vld [vmem:[%s2 + $0x88] sm:$0xff]
        %v1282 = vld [vmem:[%s2 + $0x90] sm:$0xff]
        %v1283 = vld [vmem:[%s2 + $0x98] sm:$0xff]
        %v1284 = vld [vmem:[%s2 + $0xa0] sm:$0xff]
        %v1285 = vld [vmem:[%s2 + $0xa8] sm:$0xff]
        %v1286 = vld [vmem:[%s2 + $0xb0] sm:$0xff]
        %v1287 = vld [vmem:[%s2 + $0xb8] sm:$0xff]
        %v1288 = vld [vmem:[%s2 + $0xc0] sm:$0xff]
        %v1289 = vld [vmem:[%s2 + $0xc8] sm:$0xff]
        %v1290 = vld [vmem:[%s2 + $0xd0] sm:$0xff]
        %v1291 = vld [vmem:[%s2 + $0xd8] sm:$0xff]
        %v1292 = vld [vmem:[%s2 + $0xe0] sm:$0xff]
        %v1293 = vld [vmem:[%s2 + $0xe8] sm:$0xff]
        %v1294 = vld [vmem:[%s2 + $0xf0] sm:$0xff]
        %v1295 = vld [vmem:[%s2 + $0xf8] sm:$0xff]
        %v1296 = vld [vmem:[%s2 + $0x100] sm:$0xff]
        %v1297 = vld [vmem:[%s2 + $0x108] sm:$0xff]
        %v1298 = vld [vmem:[%s2 + $0x110] sm:$0xff]
        %v1299 = vld [vmem:[%s2 + $0x118] sm:$0xff]
        %v1300 = vld [vmem:[%s2 + $0x120] sm:$0xff]
        %v1301 = vld [vmem:[%s2 + $0x128] sm:$0xff]
        %v1302 = vld [vmem:[%s2 + $0x130] sm:$0xff]
        %v1303 = vld [vmem:[%s2 + $0x138] sm:$0xff]
        %v1304 = vld [vmem:[%s2 + $0x140] sm:$0xff]
        %v1305 = vld [vmem:[%s2 + $0x148] sm:$0xff]
        %v1306 = vld [vmem:[%s2 + $0x150] sm:$0xff]
        %v1307 = vld [vmem:[%s2 + $0x158] sm:$0xff]
        %v1308 = vld [vmem:[%s2 + $0x160] sm:$0xff]
        %v1309 = vld [vmem:[%s2 + $0x168] sm:$0xff]
        %v1310 = vld [vmem:[%s2 + $0x170] sm:$0xff]
        %v1311 = vld [vmem:[%s2 + $0x178] sm:$0xff]
        %v1312 = vld [vmem:[%s2 + $0x180] sm:$0xff]
        %v1313 = vld [vmem:[%s2 + $0x188] sm:$0xff]
        %v1314 = vld [vmem:[%s2 + $0x190] sm:$0xff]
        %v1315 = vld [vmem:[%s2 + $0x198] sm:$0xff]
        %v1316 = vld [vmem:[%s2 + $0x1a0] sm:$0xff]
        %v1317 = vld [vmem:[%s2 + $0x1a8] sm:$0xff]
        %v1318 = vld [vmem:[%s2 + $0x1b0] sm:$0xff]
        %v1319 = vld [vmem:[%s2 + $0x1b8] sm:$0xff]
        %v1320 = vld [vmem:[%s2 + $0x1c0] sm:$0xff]
        %v1321 = vld [vmem:[%s2 + $0x1c8] sm:$0xff]
        %v1322 = vld [vmem:[%s2 + $0x1d0] sm:$0xff]
        %v1323 = vld [vmem:[%s2 + $0x1d8] sm:$0xff]
        %v1324 = vld [vmem:[%s2 + $0x1e0] sm:$0xff]
        %v1325 = vld [vmem:[%s2 + $0x1e8] sm:$0xff]
        %v1326 = vld [vmem:[%s2 + $0x1f0] sm:$0xff]
        %v1327 = vld [vmem:[%s2 + $0x1f8] sm:$0xff]
        %v1328 = vld [vmem:[%s2 + $0x200] sm:$0xff]
        %v1329 = vld [vmem:[%s2 + $0x208] sm:$0xff]
        %v1330 = vld [vmem:[%s2 + $0x210] sm:$0xff]
        %v1331 = vld [vmem:[%s2 + $0x218] sm:$0xff]
        %v1332 = vld [vmem:[%s2 + $0x220] sm:$0xff]
        %v1333 = vld [vmem:[%s2 + $0x228] sm:$0xff]
        %v1334 = vld [vmem:[%s2 + $0x230] sm:$0xff]
        %v1335 = vld [vmem:[%s2 + $0x238] sm:$0xff]
        %v1336 = vld [vmem:[%s3] sm:$0x1]
        %v1338 = vlaneseq
        %v1339 = vshrl.u32 %v1338, 7
        %v1340 = vsub.s32 0, %v1339
        %v1341 = vrot.slane %v1336, %v1340
        %v1344 = vsel %vm555, %v1228, 0
        %v1347 = vsel %vm555, %v1233, 0
        %v1350 = vsel %vm555, %v1238, 0
        %v1353 = vsel %vm555, %v1243, 0
        %v1356 = vsel %vm555, %v1248, 0
        %v1359 = vsel %vm555, %v1253, 0
        %v1362 = vsel %vm555, %v1258, 0
        %v1365 = vsel %vm555, %v1263, 0
        %1367 = vmatprep.subr.mxu0 0.0
        %1368 = vmatpush1.msra.mxu0 %v1264
        %1369 = vmatprep.subr.mxu0 0.0
        %1370 = vmatpush1.msra.mxu0 %v1265
        %1371 = vmatprep.subr.mxu0 0.0
        %1372 = vmatpush1.msra.mxu0 %v1266
        %1373 = vmatprep.subr.mxu0 0.0
        %1374 = vmatpush1.msra.mxu0 %v1267
        %1375 = vmatprep.subr.mxu0 0.0
        %1376 = vmatpush1.msra.mxu0 %v1268
        %1377 = vmatprep.subr.mxu0 0.0
        %1378 = vmatpush1.msra.mxu0 %v1269
        %1379 = vmatprep.subr.mxu0 0.0
        %1380 = vmatpush1.msra.mxu0 %v1270
        %1381 = vmatprep.subr.mxu0 0.0
        %1382 = vmatpush1.msra.mxu0 %v1271
        %1383 = vmatprep.subr.mxu0 0.0
        %1384 = vmatpush1.msra.mxu0 %v1272
        %1385 = vmatprep.subr.mxu0 0.0
        %1386 = vmatpush1.msra.mxu0 %v1273
        %1387 = vmatprep.subr.mxu0 0.0
        %1388 = vmatpush1.msra.mxu0 %v1274
        %1389 = vmatprep.subr.mxu0 0.0
        %1390 = vmatpush1.msra.mxu0 %v1275
        %1391 = vmatprep.subr.mxu0 0.0
        %1392 = vmatpush1.msra.mxu0 %v1276
        %1393 = vmatprep.subr.mxu0 0.0
        %1394 = vmatpush1.msra.mxu0 %v1277
        %1395 = vmatprep.subr.mxu0 0.0
        %1396 = vmatpush1.msra.mxu0 %v1278
        %1397 = vmatprep.subr.mxu0 0.0
        %1398 = vmatpush1.msra.mxu0 %v1279
        %1399 = vmatprep.subr.mxu0 0.0
        %1400 = vmatpush1.msra.mxu0 %v1280
        %1401 = vmatprep.subr.mxu0 0.0
        %1402 = vmatpush1.msra.mxu0 %v1281
        %1403 = vmatprep.subr.mxu0 0.0
        %1404 = vmatpush1.msra.mxu0 %v1282
        %1405 = vmatprep.subr.mxu0 0.0
        %1406 = vmatpush1.msra.mxu0 %v1283
        %1407 = vmatprep.subr.mxu0 0.0
        %1408 = vmatpush1.msra.mxu0 %v1284
        %1409 = vmatprep.subr.mxu0 0.0
        %1410 = vmatpush1.msra.mxu0 %v1285
        %1411 = vmatprep.subr.mxu0 0.0
        %1412 = vmatpush1.msra.mxu0 %v1286
        %1413 = vmatprep.subr.mxu0 0.0
        %1414 = vmatpush1.msra.mxu0 %v1287
        %1415 = vmatprep.subr.mxu0 0.0
        %1416 = vmatpush1.msra.mxu0 %v1288
        %1417 = vmatprep.subr.mxu0 0.0
        %1418 = vmatpush1.msra.mxu0 %v1289
        %1419 = vmatprep.subr.mxu0 0.0
        %1420 = vmatpush1.msra.mxu0 %v1290
        %1421 = vmatprep.subr.mxu0 0.0
        %1422 = vmatpush1.msra.mxu0 %v1291
        %1423 = vmatprep.subr.mxu0 0.0
        %1424 = vmatpush1.msra.mxu0 %v1292
        %1425 = vmatprep.subr.mxu0 0.0
        %1426 = vmatpush1.msra.mxu0 %v1293
        %1427 = vmatprep.subr.mxu0 0.0
        %1428 = vmatpush1.msra.mxu0 %v1294
        %1429 = vmatprep.subr.mxu0 0.0
        %1430 = vmatpush1.msra.mxu0 %v1295
        %1431 = vmatprep.mubr.f32.mxu0 %v1225
        %1432 = vmatmul.mubr.f32.gmra.mrb[0].mxu0 %v1224
        %v1433 = vpop.f32.mrb[0].mxu0
        %v1434 = vadd.f32 %v1341, %v1433
        %v1435 = vpop.f32.mrb[0].mxu0
        %1436 = vmatprep.mubr.f32.mxu0 %v1230
        %1437 = vmatmul.mubr.f32.gmra.mrb[0].mxu0 %v1229
        %v1438 = vpop.f32.mrb[0].mxu0
        %v1439 = vadd.f32 %v1341, %v1438
        %v1440 = vpop.f32.mrb[0].mxu0
        %1441 = vmatprep.mubr.f32.mxu0 %v1235
        %1442 = vmatmul.mubr.f32.gmra.mrb[0].mxu0 %v1234
        %v1443 = vpop.f32.mrb[0].mxu0
        %v1444 = vadd.f32 %v1341, %v1443
        %v1445 = vpop.f32.mrb[0].mxu0
        %1446 = vmatprep.mubr.f32.mxu0 %v1240
        %1447 = vmatmul.mubr.f32.gmra.mrb[0].mxu0 %v1239
        %v1448 = vpop.f32.mrb[0].mxu0
        %v1449 = vadd.f32 %v1341, %v1448
        %v1450 = vpop.f32.mrb[0].mxu0
        %1451 = vmatprep.mubr.f32.mxu0 %v1245
        %1452 = vmatmul.mubr.f32.gmra.mrb[0].mxu0 %v1244
        %v1453 = vpop.f32.mrb[0].mxu0
        %v1454 = vadd.f32 %v1341, %v1453
        %v1455 = vpop.f32.mrb[0].mxu0
        %1456 = vmatprep.mubr.f32.mxu0 %v1250
        %1457 = vmatmul.mubr.f32.gmra.mrb[0].mxu0 %v1249
        %v1458 = vpop.f32.mrb[0].mxu0
        %v1459 = vadd.f32 %v1341, %v1458
        %v1460 = vpop.f32.mrb[0].mxu0
        %1461 = vmatprep.mubr.f32.mxu0 %v1255
        %1462 = vmatmul.mubr.f32.gmra.mrb[0].mxu0 %v1254
        %v1463 = vpop.f32.mrb[0].mxu0
        %v1464 = vadd.f32 %v1341, %v1463
        %v1465 = vpop.f32.mrb[0].mxu0
        %1466 = vmatprep.mubr.f32.mxu0 %v1260
        %1467 = vmatmul.mubr.f32.gmra.mrb[0].mxu0 %v1259
        %v1468 = vpop.f32.mrb[0].mxu0
        %v1469 = vadd.f32 %v1341, %v1468
        %v1470 = vpop.f32.mrb[0].mxu0
        %1471 = vdwg.mxu0
        %1472 = vmatprep.subr.mxu0 0.0
        %1473 = vmatpush1.msra.mxu0 %v1296
        %1474 = vmatprep.subr.mxu0 0.0
        %1475 = vmatpush1.msra.mxu0 %v1297
        %1476 = vmatprep.subr.mxu0 0.0
        %1477 = vmatpush1.msra.mxu0 %v1298
        %1478 = vmatprep.subr.mxu0 0.0
        %1479 = vmatpush1.msra.mxu0 %v1299
        %1480 = vmatprep.subr.mxu0 0.0
        %1481 = vmatpush1.msra.mxu0 %v1300
        %1482 = vmatprep.subr.mxu0 0.0
        %1483 = vmatpush1.msra.mxu0 %v1301
        %1484 = vmatprep.subr.mxu0 0.0
        %1485 = vmatpush1.msra.mxu0 %v1302
        %1486 = vmatprep.subr.mxu0 0.0
        %1487 = vmatpush1.msra.mxu0 %v1303
        %1488 = vmatprep.subr.mxu0 0.0
        %1489 = vmatpush1.msra.mxu0 %v1304
        %1490 = vmatprep.subr.mxu0 0.0
        %1491 = vmatpush1.msra.mxu0 %v1305
        %1492 = vmatprep.subr.mxu0 0.0
        %1493 = vmatpush1.msra.mxu0 %v1306
        %1494 = vmatprep.subr.mxu0 0.0
        %1495 = vmatpush1.msra.mxu0 %v1307
        %1496 = vmatprep.subr.mxu0 0.0
        %1497 = vmatpush1.msra.mxu0 %v1308
        %1498 = vmatprep.subr.mxu0 0.0
        %1499 = vmatpush1.msra.mxu0 %v1309
        %1500 = vmatprep.subr.mxu0 0.0
        %1501 = vmatpush1.msra.mxu0 %v1310
        %1502 = vmatprep.subr.mxu0 0.0
        %1503 = vmatpush1.msra.mxu0 %v1311
        %1504 = vmatprep.subr.mxu0 0.0
        %1505 = vmatpush1.msra.mxu0 %v1312
        %1506 = vmatprep.subr.mxu0 0.0
        %1507 = vmatpush1.msra.mxu0 %v1313
        %1508 = vmatprep.subr.mxu0 0.0
        %1509 = vmatpush1.msra.mxu0 %v1314
        %1510 = vmatprep.subr.mxu0 0.0
        %1511 = vmatpush1.msra.mxu0 %v1315
        %1512 = vmatprep.subr.mxu0 0.0
        %1513 = vmatpush1.msra.mxu0 %v1316
        %1514 = vmatprep.subr.mxu0 0.0
        %1515 = vmatpush1.msra.mxu0 %v1317
        %1516 = vmatprep.subr.mxu0 0.0
        %1517 = vmatpush1.msra.mxu0 %v1318
        %1518 = vmatprep.subr.mxu0 0.0
        %1519 = vmatpush1.msra.mxu0 %v1319
        %1520 = vmatprep.subr.mxu0 0.0
        %1521 = vmatpush1.msra.mxu0 %v1320
        %1522 = vmatprep.subr.mxu0 0.0
        %1523 = vmatpush1.msra.mxu0 %v1321
        %1524 = vmatprep.subr.mxu0 0.0
        %1525 = vmatpush1.msra.mxu0 %v1322
        %1526 = vmatprep.subr.mxu0 0.0
        %1527 = vmatpush1.msra.mxu0 %v1323
        %1528 = vmatprep.subr.mxu0 0.0
        %1529 = vmatpush1.msra.mxu0 %v1324
        %1530 = vmatprep.subr.mxu0 0.0
        %1531 = vmatpush1.msra.mxu0 %v1325
        %1532 = vmatprep.subr.mxu0 0.0
        %1533 = vmatpush1.msra.mxu0 %v1326
        %1534 = vmatprep.subr.mxu0 0.0
        %1535 = vmatpush1.msra.mxu0 %v1327
        %1536 = vmatprep.mubr.f32.mxu0 %v1227
        %1537 = vmatmul.mubr.f32.gmra.mrb[0].mxu0 %v1226
        %v1538 = vpop.f32.mrb[0].mxu0
        %v1539 = vadd.f32 %v1434, %v1538
        %v1540 = vpop.f32.mrb[0].mxu0
        %1541 = vmatprep.mubr.f32.mxu0 %v1232
        %1542 = vmatmul.mubr.f32.gmra.mrb[0].mxu0 %v1231
        %v1543 = vpop.f32.mrb[0].mxu0
        %v1544 = vadd.f32 %v1439, %v1543
        %v1545 = vpop.f32.mrb[0].mxu0
        %1546 = vmatprep.mubr.f32.mxu0 %v1237
        %1547 = vmatmul.mubr.f32.gmra.mrb[0].mxu0 %v1236
        %v1548 = vpop.f32.mrb[0].mxu0
        %v1549 = vadd.f32 %v1444, %v1548
        %v1550 = vpop.f32.mrb[0].mxu0
        %1551 = vmatprep.mubr.f32.mxu0 %v1242
        %1552 = vmatmul.mubr.f32.gmra.mrb[0].mxu0 %v1241
        %v1553 = vpop.f32.mrb[0].mxu0
        %v1554 = vadd.f32 %v1449, %v1553
        %v1555 = vpop.f32.mrb[0].mxu0
        %1556 = vmatprep.mubr.f32.mxu0 %v1247
        %1557 = vmatmul.mubr.f32.gmra.mrb[0].mxu0 %v1246
        %v1558 = vpop.f32.mrb[0].mxu0
        %v1559 = vadd.f32 %v1454, %v1558
        %v1560 = vpop.f32.mrb[0].mxu0
        %1561 = vmatprep.mubr.f32.mxu0 %v1252
        %1562 = vmatmul.mubr.f32.gmra.mrb[0].mxu0 %v1251
        %v1563 = vpop.f32.mrb[0].mxu0
        %v1564 = vadd.f32 %v1459, %v1563
        %v1565 = vpop.f32.mrb[0].mxu0
        %1566 = vmatprep.mubr.f32.mxu0 %v1257
        %1567 = vmatmul.mubr.f32.gmra.mrb[0].mxu0 %v1256
        %v1568 = vpop.f32.mrb[0].mxu0
        %v1569 = vadd.f32 %v1464, %v1568
        %v1570 = vpop.f32.mrb[0].mxu0
        %1571 = vmatprep.mubr.f32.mxu0 %v1262
        %1572 = vmatmul.mubr.f32.gmra.mrb[0].mxu0 %v1261
        %v1573 = vpop.f32.mrb[0].mxu0
        %v1574 = vadd.f32 %v1469, %v1573
        %v1575 = vpop.f32.mrb[0].mxu0
        %1576 = vdwg.mxu0
        %1577 = vmatprep.subr.mxu0 0.0
        %1578 = vmatpush1.msra.mxu0 %v1328
        %1579 = vmatprep.subr.mxu0 0.0
        %1580 = vmatpush1.msra.mxu0 %v1329
        %1581 = vmatprep.subr.mxu0 0.0
        %1582 = vmatpush1.msra.mxu0 %v1330
        %1583 = vmatprep.subr.mxu0 0.0
        %1584 = vmatpush1.msra.mxu0 %v1331
        %1585 = vmatprep.subr.mxu0 0.0
        %1586 = vmatpush1.msra.mxu0 %v1332
        %1587 = vmatprep.subr.mxu0 0.0
        %1588 = vmatpush1.msra.mxu0 %v1333
        %1589 = vmatprep.subr.mxu0 0.0
        %1590 = vmatpush1.msra.mxu0 %v1334
        %1591 = vmatprep.subr.mxu0 0.0
        %1592 = vmatpush1.msra.mxu0 %v1335
        %1593 = vmatprep.subr.mxu0 0.0
        %1594 = vmatpush1.msra.mxu0 0.0
        %1595 = vmatprep.subr.mxu0 0.0
        %1596 = vmatpush1.msra.mxu0 0.0
        %1597 = vmatprep.subr.mxu0 0.0
        %1598 = vmatpush1.msra.mxu0 0.0
        %1599 = vmatprep.subr.mxu0 0.0
        %1600 = vmatpush1.msra.mxu0 0.0
        %1601 = vmatprep.subr.mxu0 0.0
        %1602 = vmatpush1.msra.mxu0 0.0
        %1603 = vmatprep.subr.mxu0 0.0
        %1604 = vmatpush1.msra.mxu0 0.0
        %1605 = vmatprep.subr.mxu0 0.0
        %1606 = vmatpush1.msra.mxu0 0.0
        %1607 = vmatprep.subr.mxu0 0.0
        %1608 = vmatpush1.msra.mxu0 0.0
        %1609 = vmatprep.subr.mxu0 0.0
        %1610 = vmatpush1.msra.mxu0 0.0
        %1611 = vmatprep.subr.mxu0 0.0
        %1612 = vmatpush1.msra.mxu0 0.0
        %1613 = vmatprep.subr.mxu0 0.0
        %1614 = vmatpush1.msra.mxu0 0.0
        %1615 = vmatprep.subr.mxu0 0.0
        %1616 = vmatpush1.msra.mxu0 0.0
        %1617 = vmatprep.subr.mxu0 0.0
        %1618 = vmatpush1.msra.mxu0 0.0
        %1619 = vmatprep.subr.mxu0 0.0
        %1620 = vmatpush1.msra.mxu0 0.0
        %1621 = vmatprep.subr.mxu0 0.0
        %1622 = vmatpush1.msra.mxu0 0.0
        %1623 = vmatprep.subr.mxu0 0.0
        %1624 = vmatpush1.msra.mxu0 0.0
        %1625 = vmatprep.subr.mxu0 0.0
        %1626 = vmatpush1.msra.mxu0 0.0
        %1627 = vmatprep.subr.mxu0 0.0
        %1628 = vmatpush1.msra.mxu0 0.0
        %1629 = vmatprep.subr.mxu0 0.0
        %1630 = vmatpush1.msra.mxu0 0.0
        %1631 = vmatprep.subr.mxu0 0.0
        %1632 = vmatpush1.msra.mxu0 0.0
        %1633 = vmatprep.subr.mxu0 0.0
        %1634 = vmatpush1.msra.mxu0 0.0
        %1635 = vmatprep.subr.mxu0 0.0
        %1636 = vmatpush1.msra.mxu0 0.0
        %1637 = vmatprep.subr.mxu0 0.0
        %1638 = vmatpush1.msra.mxu0 0.0
        %1639 = vmatprep.subr.mxu0 0.0
        %1640 = vmatpush1.msra.mxu0 0.0
        %1641 = vmatprep.mubr.f32.mxu0 0.0
        %1642 = vmatmul.mubr.f32.gmra.mrb[0].mxu0 %v1344
        %v1643 = vpop.f32.mrb[0].mxu0
        %v1644 = vadd.f32 %v1539, %v1643
        %v1645 = vpop.f32.mrb[0].mxu0
        %1646 = vmatprep.mubr.f32.mxu0 0.0
        %1647 = vmatmul.mubr.f32.gmra.mrb[0].mxu0 %v1347
        %v1648 = vpop.f32.mrb[0].mxu0
        %v1649 = vadd.f32 %v1544, %v1648
        %v1650 = vpop.f32.mrb[0].mxu0
        %1651 = vmatprep.mubr.f32.mxu0 0.0
        %1652 = vmatmul.mubr.f32.gmra.mrb[0].mxu0 %v1350
        %v1653 = vpop.f32.mrb[0].mxu0
        %v1654 = vadd.f32 %v1549, %v1653
        %v1655 = vpop.f32.mrb[0].mxu0
        %1656 = vmatprep.mubr.f32.mxu0 0.0
        %1657 = vmatmul.mubr.f32.gmra.mrb[0].mxu0 %v1353
        %v1658 = vpop.f32.mrb[0].mxu0
        %v1659 = vadd.f32 %v1554, %v1658
        %v1660 = vpop.f32.mrb[0].mxu0
        %1661 = vmatprep.mubr.f32.mxu0 0.0
        %1662 = vmatmul.mubr.f32.gmra.mrb[0].mxu0 %v1356
        %v1663 = vpop.f32.mrb[0].mxu0
        %v1664 = vadd.f32 %v1559, %v1663
        %v1665 = vpop.f32.mrb[0].mxu0
        %1666 = vmatprep.mubr.f32.mxu0 0.0
        %1667 = vmatmul.mubr.f32.gmra.mrb[0].mxu0 %v1359
        %v1668 = vpop.f32.mrb[0].mxu0
        %v1669 = vadd.f32 %v1564, %v1668
        %v1670 = vpop.f32.mrb[0].mxu0
        %1671 = vmatprep.mubr.f32.mxu0 0.0
        %1672 = vmatmul.mubr.f32.gmra.mrb[0].mxu0 %v1362
        %v1673 = vpop.f32.mrb[0].mxu0
        %v1674 = vadd.f32 %v1569, %v1673
        %v1675 = vpop.f32.mrb[0].mxu0
        %1676 = vmatprep.mubr.f32.mxu0 0.0
        %1677 = vmatmul.mubr.f32.gmra.mrb[0].mxu0 %v1365
        %v1678 = vpop.f32.mrb[0].mxu0
        %v1679 = vadd.f32 %v1574, %v1678
        %v1680 = vpop.f32.mrb[0].mxu0
        %1681 = vdwg.mxu0
        %v1682 = vmax.f32 %v1644, 0.0
        %v1683 = vmax.f32 %v1649, 0.0
        %v1684 = vmax.f32 %v1654, 0.0
        %v1685 = vmax.f32 %v1659, 0.0
        %v1686 = vmax.f32 %v1664, 0.0
        %v1687 = vmax.f32 %v1669, 0.0
        %v1688 = vmax.f32 %v1674, 0.0
        %v1689 = vmax.f32 %v1679, 0.0
        %1690 = vst.msk [vmem:[#allocation4 + $0x10] sm:$0xff] %vm555, %v1682
        %1691 = vst.msk [vmem:[#allocation4 + $0x18] sm:$0xff] %vm555, %v1683
        %1692 = vst.msk [vmem:[#allocation4 + $0x20] sm:$0xff] %vm555, %v1684
        %1693 = vst.msk [vmem:[#allocation4 + $0x28] sm:$0xff] %vm555, %v1685
        %1694 = vst.msk [vmem:[#allocation4 + $0x30] sm:$0xff] %vm555, %v1686
        %1695 = vst.msk [vmem:[#allocation4 + $0x38] sm:$0xff] %vm555, %v1687
        %1696 = vst.msk [vmem:[#allocation4 + $0x40] sm:$0xff] %vm555, %v1688
        %1697 = vst.msk [vmem:[#allocation4 + $0x48] sm:$0xff] %vm555, %v1689
        %v1698 = vld [vmem:[#allocation4 + $0x7] sm:$0xff]
        %v1699 = vld [vmem:[#allocation4 + $0xf] sm:$0xff]
        %v1700 = vld [vmem:[#allocation4 + $0x17] sm:$0xff]
        %v1701 = vld [vmem:[#allocation4 + $0x1f] sm:$0xff]
        %v1702 = vld [vmem:[#allocation4 + $0x27] sm:$0xff]
        %v1703 = vld [vmem:[#allocation4 + $0x2f] sm:$0xff]
        %v1704 = vld [vmem:[#allocation4 + $0x37] sm:$0xff]
        %v1705 = vld [vmem:[#allocation4 + $0x3f] sm:$0xff]
        %v1706 = vsel %vm887, %v1698, 0.0
        %v1707 = vsel %vm888, %v1699, 0.0
        %v1708 = vsel %vm889, %v1700, 0.0
        %v1709 = vsel %vm890, %v1701, 0.0
        %v1710 = vsel %vm891, %v1702, 0.0
        %v1711 = vsel %vm892, %v1703, 0.0
        %v1712 = vsel %vm893, %v1704, 0.0
        %v1713 = vsel %vm894, %v1705, 0.0
        %1714 = vst.msk [vmem:[#allocation5] sm:$0xff] %vm555, %v1706
        %1715 = vst.msk [vmem:[#allocation5 + $0x28] sm:$0xff] %vm555, %v1707
        %1716 = vst.msk [vmem:[#allocation5 + $0x50] sm:$0xff] %vm555, %v1708
        %1717 = vst.msk [vmem:[#allocation5 + $0x78] sm:$0xff] %vm555, %v1709
        %1718 = vst.msk [vmem:[#allocation5 + $0xa0] sm:$0xff] %vm555, %v1710
        %1719 = vst.msk [vmem:[#allocation5 + $0xc8] sm:$0xff] %vm555, %v1711
        %1720 = vst.msk [vmem:[#allocation5 + $0xf0] sm:$0xff] %vm555, %v1712
        %1721 = vst.msk [vmem:[#allocation5 + $0x118] sm:$0xff] %vm555, %v1713
        %v1722 = vld [vmem:[#allocation4 + $0x8] sm:$0xff]
        %v1723 = vld [vmem:[#allocation4 + $0x10] sm:$0xff]
        %v1724 = vld [vmem:[#allocation4 + $0x18] sm:$0xff]
        %v1725 = vld [vmem:[#allocation4 + $0x20] sm:$0xff]
        %v1726 = vld [vmem:[#allocation4 + $0x28] sm:$0xff]
        %v1727 = vld [vmem:[#allocation4 + $0x30] sm:$0xff]
        %v1728 = vld [vmem:[#allocation4 + $0x38] sm:$0xff]
        %v1729 = vld [vmem:[#allocation4 + $0x40] sm:$0xff]
        %1738 = vrot.lane.b32.xlu0 %v1722, 64
        %v1739 = vpop.permute.xlu0 %1738
        %1740 = vrot.lane.b32.xlu0 %v1723, 64
        %v1741 = vpop.permute.xlu0 %1740
        %1742 = vrot.lane.b32.xlu0 %v1724, 64
        %v1743 = vpop.permute.xlu0 %1742
        %1744 = vrot.lane.b32.xlu0 %v1725, 64
        %v1745 = vpop.permute.xlu0 %1744
        %1746 = vrot.lane.b32.xlu0 %v1726, 64
        %v1747 = vpop.permute.xlu0 %1746
        %1748 = vrot.lane.b32.xlu0 %v1727, 64
        %v1749 = vpop.permute.xlu0 %1748
        %1750 = vrot.lane.b32.xlu0 %v1728, 64
        %v1751 = vpop.permute.xlu0 %1750
        %1752 = vrot.lane.b32.xlu0 %v1729, 64
        %v1753 = vpop.permute.xlu0 %1752
        %1762 = vst.msk [vmem:[#allocation5] sm:$0xff] %vm951, %v1739
        %1763 = vst.msk [vmem:[#allocation5 + $0x28] sm:$0xff] %vm951, %v1741
        %1764 = vst.msk [vmem:[#allocation5 + $0x50] sm:$0xff] %vm951, %v1743
        %1765 = vst.msk [vmem:[#allocation5 + $0x78] sm:$0xff] %vm951, %v1745
        %1766 = vst.msk [vmem:[#allocation5 + $0xa0] sm:$0xff] %vm951, %v1747
        %1767 = vst.msk [vmem:[#allocation5 + $0xc8] sm:$0xff] %vm951, %v1749
        %1768 = vst.msk [vmem:[#allocation5 + $0xf0] sm:$0xff] %vm951, %v1751
        %1769 = vst.msk [vmem:[#allocation5 + $0x118] sm:$0xff] %vm951, %v1753
        %v1770 = vld [vmem:[#allocation4 + $0x9] sm:$0xff]
        %v1771 = vld [vmem:[#allocation4 + $0x11] sm:$0xff]
        %v1772 = vld [vmem:[#allocation4 + $0x19] sm:$0xff]
        %v1773 = vld [vmem:[#allocation4 + $0x21] sm:$0xff]
        %v1774 = vld [vmem:[#allocation4 + $0x29] sm:$0xff]
        %v1775 = vld [vmem:[#allocation4 + $0x31] sm:$0xff]
        %v1776 = vld [vmem:[#allocation4 + $0x39] sm:$0xff]
        %v1777 = vld [vmem:[#allocation4 + $0x41] sm:$0xff]
        %v1778 = vsel %vm976, %v1770, 0.0
        %v1779 = vsel %vm977, %v1771, 0.0
        %v1780 = vsel %vm978, %v1772, 0.0
        %v1781 = vsel %vm979, %v1773, 0.0
        %v1782 = vsel %vm980, %v1774, 0.0
        %v1783 = vsel %vm981, %v1775, 0.0
        %v1784 = vsel %vm982, %v1776, 0.0
        %v1785 = vsel %vm983, %v1777, 0.0
        %1786 = vst.msk [vmem:[#allocation5 + $0x8] sm:$0xff] %vm555, %v1778
        %1787 = vst.msk [vmem:[#allocation5 + $0x30] sm:$0xff] %vm555, %v1779
        %1788 = vst.msk [vmem:[#allocation5 + $0x58] sm:$0xff] %vm555, %v1780
        %1789 = vst.msk [vmem:[#allocation5 + $0x80] sm:$0xff] %vm555, %v1781
        %1790 = vst.msk [vmem:[#allocation5 + $0xa8] sm:$0xff] %vm555, %v1782
        %1791 = vst.msk [vmem:[#allocation5 + $0xd0] sm:$0xff] %vm555, %v1783
        %1792 = vst.msk [vmem:[#allocation5 + $0xf8] sm:$0xff] %vm555, %v1784
        %1793 = vst.msk [vmem:[#allocation5 + $0x120] sm:$0xff] %vm555, %v1785
        %v1794 = vld [vmem:[#allocation4 + $0xf] sm:$0xff]
        %v1795 = vld [vmem:[#allocation4 + $0x17] sm:$0xff]
        %v1796 = vld [vmem:[#allocation4 + $0x1f] sm:$0xff]
        %v1797 = vld [vmem:[#allocation4 + $0x27] sm:$0xff]
        %v1798 = vld [vmem:[#allocation4 + $0x2f] sm:$0xff]
        %v1799 = vld [vmem:[#allocation4 + $0x37] sm:$0xff]
        %v1800 = vld [vmem:[#allocation4 + $0x3f] sm:$0xff]
        %v1801 = vld [vmem:[#allocation4 + $0x47] sm:$0xff]
        %v1802 = vsel %vm887, %v1794, 0.0
        %v1803 = vsel %vm888, %v1795, 0.0
        %v1804 = vsel %vm889, %v1796, 0.0
        %v1805 = vsel %vm890, %v1797, 0.0
        %v1806 = vsel %vm891, %v1798, 0.0
        %v1807 = vsel %vm892, %v1799, 0.0
        %v1808 = vsel %vm893, %v1800, 0.0
        %v1809 = vsel %vm894, %v1801, 0.0
        %1818 = vrot.lane.b32.xlu0 %v1802, 64
        %v1819 = vpop.permute.xlu0 %1818
        %1820 = vrot.lane.b32.xlu0 %v1803, 64
        %v1821 = vpop.permute.xlu0 %1820
        %1822 = vrot.lane.b32.xlu0 %v1804, 64
        %v1823 = vpop.permute.xlu0 %1822
        %1824 = vrot.lane.b32.xlu0 %v1805, 64
        %v1825 = vpop.permute.xlu0 %1824
        %1826 = vrot.lane.b32.xlu0 %v1806, 64
        %v1827 = vpop.permute.xlu0 %1826
        %1828 = vrot.lane.b32.xlu0 %v1807, 64
        %v1829 = vpop.permute.xlu0 %1828
        %1830 = vrot.lane.b32.xlu0 %v1808, 64
        %v1831 = vpop.permute.xlu0 %1830
        %1832 = vrot.lane.b32.xlu0 %v1809, 64
        %v1833 = vpop.permute.xlu0 %1832
        %1842 = vst.msk [vmem:[#allocation5 + $0x8] sm:$0xff] %vm951, %v1819
        %1843 = vst.msk [vmem:[#allocation5 + $0x30] sm:$0xff] %vm951, %v1821
        %1844 = vst.msk [vmem:[#allocation5 + $0x58] sm:$0xff] %vm951, %v1823
        %1845 = vst.msk [vmem:[#allocation5 + $0x80] sm:$0xff] %vm951, %v1825
        %1846 = vst.msk [vmem:[#allocation5 + $0xa8] sm:$0xff] %vm951, %v1827
        %1847 = vst.msk [vmem:[#allocation5 + $0xd0] sm:$0xff] %vm951, %v1829
        %1848 = vst.msk [vmem:[#allocation5 + $0xf8] sm:$0xff] %vm951, %v1831
        %1849 = vst.msk [vmem:[#allocation5 + $0x120] sm:$0xff] %vm951, %v1833
        %v1850 = vld [vmem:[#allocation4 + $0x10] sm:$0xff]
        %v1851 = vld [vmem:[#allocation4 + $0x18] sm:$0xff]
        %v1852 = vld [vmem:[#allocation4 + $0x20] sm:$0xff]
        %v1853 = vld [vmem:[#allocation4 + $0x28] sm:$0xff]
        %v1854 = vld [vmem:[#allocation4 + $0x30] sm:$0xff]
        %v1855 = vld [vmem:[#allocation4 + $0x38] sm:$0xff]
        %v1856 = vld [vmem:[#allocation4 + $0x40] sm:$0xff]
        %v1857 = vld [vmem:[#allocation4 + $0x48] sm:$0xff]
        %1858 = vst.msk [vmem:[#allocation5 + $0x10] sm:$0xff] %vm555, %v1850
        %1859 = vst.msk [vmem:[#allocation5 + $0x38] sm:$0xff] %vm555, %v1851
        %1860 = vst.msk [vmem:[#allocation5 + $0x60] sm:$0xff] %vm555, %v1852
        %1861 = vst.msk [vmem:[#allocation5 + $0x88] sm:$0xff] %vm555, %v1853
        %1862 = vst.msk [vmem:[#allocation5 + $0xb0] sm:$0xff] %vm555, %v1854
        %1863 = vst.msk [vmem:[#allocation5 + $0xd8] sm:$0xff] %vm555, %v1855
        %1864 = vst.msk [vmem:[#allocation5 + $0x100] sm:$0xff] %vm555, %v1856
        %1865 = vst.msk [vmem:[#allocation5 + $0x128] sm:$0xff] %vm555, %v1857
        %v1866 = vld [vmem:[#allocation4 + $0x11] sm:$0xff]
        %v1867 = vld [vmem:[#allocation4 + $0x19] sm:$0xff]
        %v1868 = vld [vmem:[#allocation4 + $0x21] sm:$0xff]
        %v1869 = vld [vmem:[#allocation4 + $0x29] sm:$0xff]
        %v1870 = vld [vmem:[#allocation4 + $0x31] sm:$0xff]
        %v1871 = vld [vmem:[#allocation4 + $0x39] sm:$0xff]
        %v1872 = vld [vmem:[#allocation4 + $0x41] sm:$0xff]
        %v1873 = vld [vmem:[#allocation4 + $0x49] sm:$0xff]
        %v1874 = vsel %vm976, %v1866, 0.0
        %v1875 = vsel %vm977, %v1867, 0.0
        %v1876 = vsel %vm978, %v1868, 0.0
        %v1877 = vsel %vm979, %v1869, 0.0
        %v1878 = vsel %vm980, %v1870, 0.0
        %v1879 = vsel %vm981, %v1871, 0.0
        %v1880 = vsel %vm982, %v1872, 0.0
        %v1881 = vsel %vm983, %v1873, 0.0
        %1890 = vrot.lane.b32.xlu0 %v1874, 64
        %v1891 = vpop.permute.xlu0 %1890
        %1892 = vrot.lane.b32.xlu0 %v1875, 64
        %v1893 = vpop.permute.xlu0 %1892
        %1894 = vrot.lane.b32.xlu0 %v1876, 64
        %v1895 = vpop.permute.xlu0 %1894
        %1896 = vrot.lane.b32.xlu0 %v1877, 64
        %v1897 = vpop.permute.xlu0 %1896
        %1898 = vrot.lane.b32.xlu0 %v1878, 64
        %v1899 = vpop.permute.xlu0 %1898
        %1900 = vrot.lane.b32.xlu0 %v1879, 64
        %v1901 = vpop.permute.xlu0 %1900
        %1902 = vrot.lane.b32.xlu0 %v1880, 64
        %v1903 = vpop.permute.xlu0 %1902
        %1904 = vrot.lane.b32.xlu0 %v1881, 64
        %v1905 = vpop.permute.xlu0 %1904
        %1914 = vst.msk [vmem:[#allocation5 + $0x10] sm:$0xff] %vm951, %v1891
        %1915 = vst.msk [vmem:[#allocation5 + $0x38] sm:$0xff] %vm951, %v1893
        %1916 = vst.msk [vmem:[#allocation5 + $0x60] sm:$0xff] %vm951, %v1895
        %1917 = vst.msk [vmem:[#allocation5 + $0x88] sm:$0xff] %vm951, %v1897
        %1918 = vst.msk [vmem:[#allocation5 + $0xb0] sm:$0xff] %vm951, %v1899
        %1919 = vst.msk [vmem:[#allocation5 + $0xd8] sm:$0xff] %vm951, %v1901
        %1920 = vst.msk [vmem:[#allocation5 + $0x100] sm:$0xff] %vm951, %v1903
        %1921 = vst.msk [vmem:[#allocation5 + $0x128] sm:$0xff] %vm951, %v1905
        %v1922 = vld [vmem:[#allocation4 + $0x17] sm:$0xff]
        %v1923 = vld [vmem:[#allocation4 + $0x1f] sm:$0xff]
        %v1924 = vld [vmem:[#allocation4 + $0x27] sm:$0xff]
        %v1925 = vld [vmem:[#allocation4 + $0x2f] sm:$0xff]
        %v1926 = vld [vmem:[#allocation4 + $0x37] sm:$0xff]
        %v1927 = vld [vmem:[#allocation4 + $0x3f] sm:$0xff]
        %v1928 = vld [vmem:[#allocation4 + $0x47] sm:$0xff]
        %v1929 = vld [vmem:[#allocation4 + $0x4f] sm:$0xff]
        %v1930 = vsel %vm887, %v1922, 0.0
        %v1931 = vsel %vm888, %v1923, 0.0
        %v1932 = vsel %vm889, %v1924, 0.0
        %v1933 = vsel %vm890, %v1925, 0.0
        %v1934 = vsel %vm891, %v1926, 0.0
        %v1935 = vsel %vm892, %v1927, 0.0
        %v1936 = vsel %vm893, %v1928, 0.0
        %v1937 = vsel %vm894, %v1929, 0.0
        %1938 = vst.msk [vmem:[#allocation5 + $0x18] sm:$0xff] %vm555, %v1930
        %1939 = vst.msk [vmem:[#allocation5 + $0x40] sm:$0xff] %vm555, %v1931
        %1940 = vst.msk [vmem:[#allocation5 + $0x68] sm:$0xff] %vm555, %v1932
        %1941 = vst.msk [vmem:[#allocation5 + $0x90] sm:$0xff] %vm555, %v1933
        %1942 = vst.msk [vmem:[#allocation5 + $0xb8] sm:$0xff] %vm555, %v1934
        %1943 = vst.msk [vmem:[#allocation5 + $0xe0] sm:$0xff] %vm555, %v1935
        %1944 = vst.msk [vmem:[#allocation5 + $0x108] sm:$0xff] %vm555, %v1936
        %1945 = vst.msk [vmem:[#allocation5 + $0x130] sm:$0xff] %vm555, %v1937
        %v1946 = vld [vmem:[#allocation4 + $0x18] sm:$0xff]
        %v1947 = vld [vmem:[#allocation4 + $0x20] sm:$0xff]
        %v1948 = vld [vmem:[#allocation4 + $0x28] sm:$0xff]
        %v1949 = vld [vmem:[#allocation4 + $0x30] sm:$0xff]
        %v1950 = vld [vmem:[#allocation4 + $0x38] sm:$0xff]
        %v1951 = vld [vmem:[#allocation4 + $0x40] sm:$0xff]
        %v1952 = vld [vmem:[#allocation4 + $0x48] sm:$0xff]
        %v1953 = vld [vmem:[#allocation4 + $0x50] sm:$0xff]
        %1962 = vrot.lane.b32.xlu0 %v1946, 64
        %v1963 = vpop.permute.xlu0 %1962
        %1964 = vrot.lane.b32.xlu0 %v1947, 64
        %v1965 = vpop.permute.xlu0 %1964
        %1966 = vrot.lane.b32.xlu0 %v1948, 64
        %v1967 = vpop.permute.xlu0 %1966
        %1968 = vrot.lane.b32.xlu0 %v1949, 64
        %v1969 = vpop.permute.xlu0 %1968
        %1970 = vrot.lane.b32.xlu0 %v1950, 64
        %v1971 = vpop.permute.xlu0 %1970
        %1972 = vrot.lane.b32.xlu0 %v1951, 64
        %v1973 = vpop.permute.xlu0 %1972
        %1974 = vrot.lane.b32.xlu0 %v1952, 64
        %v1975 = vpop.permute.xlu0 %1974
        %1976 = vrot.lane.b32.xlu0 %v1953, 64
        %v1977 = vpop.permute.xlu0 %1976
        %1986 = vst.msk [vmem:[#allocation5 + $0x18] sm:$0xff] %vm951, %v1963
        %1987 = vst.msk [vmem:[#allocation5 + $0x40] sm:$0xff] %vm951, %v1965
        %1988 = vst.msk [vmem:[#allocation5 + $0x68] sm:$0xff] %vm951, %v1967
        %1989 = vst.msk [vmem:[#allocation5 + $0x90] sm:$0xff] %vm951, %v1969
        %1990 = vst.msk [vmem:[#allocation5 + $0xb8] sm:$0xff] %vm951, %v1971
        %1991 = vst.msk [vmem:[#allocation5 + $0xe0] sm:$0xff] %vm951, %v1973
        %1992 = vst.msk [vmem:[#allocation5 + $0x108] sm:$0xff] %vm951, %v1975
        %1993 = vst.msk [vmem:[#allocation5 + $0x130] sm:$0xff] %vm951, %v1977
        %v1994 = vld [vmem:[#allocation4 + $0x19] sm:$0xff]
        %v1995 = vld [vmem:[#allocation4 + $0x21] sm:$0xff]
        %v1996 = vld [vmem:[#allocation4 + $0x29] sm:$0xff]
        %v1997 = vld [vmem:[#allocation4 + $0x31] sm:$0xff]
        %v1998 = vld [vmem:[#allocation4 + $0x39] sm:$0xff]
        %v1999 = vld [vmem:[#allocation4 + $0x41] sm:$0xff]
        %v2000 = vld [vmem:[#allocation4 + $0x49] sm:$0xff]
        %v2001 = vld [vmem:[#allocation4 + $0x51] sm:$0xff]
        %v2002 = vsel %vm976, %v1994, 0.0
        %v2003 = vsel %vm977, %v1995, 0.0
        %v2004 = vsel %vm978, %v1996, 0.0
        %v2005 = vsel %vm979, %v1997, 0.0
        %v2006 = vsel %vm980, %v1998, 0.0
        %v2007 = vsel %vm981, %v1999, 0.0
        %v2008 = vsel %vm982, %v2000, 0.0
        %v2009 = vsel %vm983, %v2001, 0.0
        %2010 = vst.msk [vmem:[#allocation5 + $0x20] sm:$0xff] %vm555, %v2002
        %2011 = vst.msk [vmem:[#allocation5 + $0x48] sm:$0xff] %vm555, %v2003
        %2012 = vst.msk [vmem:[#allocation5 + $0x70] sm:$0xff] %vm555, %v2004
        %2013 = vst.msk [vmem:[#allocation5 + $0x98] sm:$0xff] %vm555, %v2005
        %2014 = vst.msk [vmem:[#allocation5 + $0xc0] sm:$0xff] %vm555, %v2006
        %2015 = vst.msk [vmem:[#allocation5 + $0xe8] sm:$0xff] %vm555, %v2007
        %2016 = vst.msk [vmem:[#allocation5 + $0x110] sm:$0xff] %vm555, %v2008
        %2017 = vst.msk [vmem:[#allocation5 + $0x138] sm:$0xff] %vm555, %v2009
        %v2018 = vld [vmem:[#allocation5] sm:$0xff]
        %v2019 = vld [vmem:[#allocation5 + $0x8] sm:$0xff]
        %v2020 = vld [vmem:[#allocation5 + $0x10] sm:$0xff]
        %v2021 = vld [vmem:[#allocation5 + $0x18] sm:$0xff]
        %v2022 = vld [vmem:[#allocation5 + $0x20] sm:$0xff]
        %v2023 = vld [vmem:[#allocation5 + $0x28] sm:$0xff]
        %v2024 = vld [vmem:[#allocation5 + $0x30] sm:$0xff]
        %v2025 = vld [vmem:[#allocation5 + $0x38] sm:$0xff]
        %v2026 = vld [vmem:[#allocation5 + $0x40] sm:$0xff]
        %v2027 = vld [vmem:[#allocation5 + $0x48] sm:$0xff]
        %v2028 = vld [vmem:[#allocation5 + $0x50] sm:$0xff]
        %v2029 = vld [vmem:[#allocation5 + $0x58] sm:$0xff]
        %v2030 = vld [vmem:[#allocation5 + $0x60] sm:$0xff]
        %v2031 = vld [vmem:[#allocation5 + $0x68] sm:$0xff]
        %v2032 = vld [vmem:[#allocation5 + $0x70] sm:$0xff]
        %v2033 = vld [vmem:[#allocation5 + $0x78] sm:$0xff]
        %v2034 = vld [vmem:[#allocation5 + $0x80] sm:$0xff]
        %v2035 = vld [vmem:[#allocation5 + $0x88] sm:$0xff]
        %v2036 = vld [vmem:[#allocation5 + $0x90] sm:$0xff]
        %v2037 = vld [vmem:[#allocation5 + $0x98] sm:$0xff]
        %v2038 = vld [vmem:[#allocation5 + $0xa0] sm:$0xff]
        %v2039 = vld [vmem:[#allocation5 + $0xa8] sm:$0xff]
        %v2040 = vld [vmem:[#allocation5 + $0xb0] sm:$0xff]
        %v2041 = vld [vmem:[#allocation5 + $0xb8] sm:$0xff]
        %v2042 = vld [vmem:[#allocation5 + $0xc0] sm:$0xff]
        %v2043 = vld [vmem:[#allocation5 + $0xc8] sm:$0xff]
        %v2044 = vld [vmem:[#allocation5 + $0xd0] sm:$0xff]
        %v2045 = vld [vmem:[#allocation5 + $0xd8] sm:$0xff]
        %v2046 = vld [vmem:[#allocation5 + $0xe0] sm:$0xff]
        %v2047 = vld [vmem:[#allocation5 + $0xe8] sm:$0xff]
        %v2048 = vld [vmem:[#allocation5 + $0xf0] sm:$0xff]
        %v2049 = vld [vmem:[#allocation5 + $0xf8] sm:$0xff]
        %v2050 = vld [vmem:[#allocation5 + $0x100] sm:$0xff]
        %v2051 = vld [vmem:[#allocation5 + $0x108] sm:$0xff]
        %v2052 = vld [vmem:[#allocation5 + $0x110] sm:$0xff]
        %v2053 = vld [vmem:[#allocation5 + $0x118] sm:$0xff]
        %v2054 = vld [vmem:[#allocation5 + $0x120] sm:$0xff]
        %v2055 = vld [vmem:[#allocation5 + $0x128] sm:$0xff]
        %v2056 = vld [vmem:[#allocation5 + $0x130] sm:$0xff]
        %v2057 = vld [vmem:[#allocation5 + $0x138] sm:$0xff]
        %s2058 = scalar_lea.vmem %s2, 576
        %v2059 = vld [vmem:[%s2058] sm:$0xff]
        %v2060 = vld [vmem:[%s2058 + $0x8] sm:$0xff]
        %v2061 = vld [vmem:[%s2058 + $0x10] sm:$0xff]
        %v2062 = vld [vmem:[%s2058 + $0x18] sm:$0xff]
        %v2063 = vld [vmem:[%s2058 + $0x20] sm:$0xff]
        %v2064 = vld [vmem:[%s2058 + $0x28] sm:$0xff]
        %v2065 = vld [vmem:[%s2058 + $0x30] sm:$0xff]
        %v2066 = vld [vmem:[%s2058 + $0x38] sm:$0xff]
        %v2067 = vld [vmem:[%s2058 + $0x40] sm:$0xff]
        %v2068 = vld [vmem:[%s2058 + $0x48] sm:$0xff]
        %v2069 = vld [vmem:[%s2058 + $0x50] sm:$0xff]
        %v2070 = vld [vmem:[%s2058 + $0x58] sm:$0xff]
        %v2071 = vld [vmem:[%s2058 + $0x60] sm:$0xff]
        %v2072 = vld [vmem:[%s2058 + $0x68] sm:$0xff]
        %v2073 = vld [vmem:[%s2058 + $0x70] sm:$0xff]
        %v2074 = vld [vmem:[%s2058 + $0x78] sm:$0xff]
        %v2075 = vld [vmem:[%s2058 + $0x80] sm:$0xff]
        %v2076 = vld [vmem:[%s2058 + $0x88] sm:$0xff]
        %v2077 = vld [vmem:[%s2058 + $0x90] sm:$0xff]
        %v2078 = vld [vmem:[%s2058 + $0x98] sm:$0xff]
        %v2079 = vld [vmem:[%s2058 + $0xa0] sm:$0xff]
        %v2080 = vld [vmem:[%s2058 + $0xa8] sm:$0xff]
        %v2081 = vld [vmem:[%s2058 + $0xb0] sm:$0xff]
        %v2082 = vld [vmem:[%s2058 + $0xb8] sm:$0xff]
        %v2083 = vld [vmem:[%s2058 + $0xc0] sm:$0xff]
        %v2084 = vld [vmem:[%s2058 + $0xc8] sm:$0xff]
        %v2085 = vld [vmem:[%s2058 + $0xd0] sm:$0xff]
        %v2086 = vld [vmem:[%s2058 + $0xd8] sm:$0xff]
        %v2087 = vld [vmem:[%s2058 + $0xe0] sm:$0xff]
        %v2088 = vld [vmem:[%s2058 + $0xe8] sm:$0xff]
        %v2089 = vld [vmem:[%s2058 + $0xf0] sm:$0xff]
        %v2090 = vld [vmem:[%s2058 + $0xf8] sm:$0xff]
        %v2091 = vld [vmem:[%s2058 + $0x100] sm:$0xff]
        %v2092 = vld [vmem:[%s2058 + $0x108] sm:$0xff]
        %v2093 = vld [vmem:[%s2058 + $0x110] sm:$0xff]
        %v2094 = vld [vmem:[%s2058 + $0x118] sm:$0xff]
        %v2095 = vld [vmem:[%s2058 + $0x120] sm:$0xff]
        %v2096 = vld [vmem:[%s2058 + $0x128] sm:$0xff]
        %v2097 = vld [vmem:[%s2058 + $0x130] sm:$0xff]
        %v2098 = vld [vmem:[%s2058 + $0x138] sm:$0xff]
        %v2099 = vld [vmem:[%s2058 + $0x140] sm:$0xff]
        %v2100 = vld [vmem:[%s2058 + $0x148] sm:$0xff]
        %v2101 = vld [vmem:[%s2058 + $0x150] sm:$0xff]
        %v2102 = vld [vmem:[%s2058 + $0x158] sm:$0xff]
        %v2103 = vld [vmem:[%s2058 + $0x160] sm:$0xff]
        %v2104 = vld [vmem:[%s2058 + $0x168] sm:$0xff]
        %v2105 = vld [vmem:[%s2058 + $0x170] sm:$0xff]
        %v2106 = vld [vmem:[%s2058 + $0x178] sm:$0xff]
        %v2107 = vld [vmem:[%s2058 + $0x180] sm:$0xff]
        %v2108 = vld [vmem:[%s2058 + $0x188] sm:$0xff]
        %v2109 = vld [vmem:[%s2058 + $0x190] sm:$0xff]
        %v2110 = vld [vmem:[%s2058 + $0x198] sm:$0xff]
        %v2111 = vld [vmem:[%s2058 + $0x1a0] sm:$0xff]
        %v2112 = vld [vmem:[%s2058 + $0x1a8] sm:$0xff]
        %v2113 = vld [vmem:[%s2058 + $0x1b0] sm:$0xff]
        %v2114 = vld [vmem:[%s2058 + $0x1b8] sm:$0xff]
        %v2115 = vld [vmem:[%s2058 + $0x1c0] sm:$0xff]
        %v2116 = vld [vmem:[%s2058 + $0x1c8] sm:$0xff]
        %v2117 = vld [vmem:[%s2058 + $0x1d0] sm:$0xff]
        %v2118 = vld [vmem:[%s2058 + $0x1d8] sm:$0xff]
        %v2119 = vld [vmem:[%s2058 + $0x1e0] sm:$0xff]
        %v2120 = vld [vmem:[%s2058 + $0x1e8] sm:$0xff]
        %v2121 = vld [vmem:[%s2058 + $0x1f0] sm:$0xff]
        %v2122 = vld [vmem:[%s2058 + $0x1f8] sm:$0xff]
        %v2123 = vld [vmem:[%s2058 + $0x200] sm:$0xff]
        %v2124 = vld [vmem:[%s2058 + $0x208] sm:$0xff]
        %v2125 = vld [vmem:[%s2058 + $0x210] sm:$0xff]
        %v2126 = vld [vmem:[%s2058 + $0x218] sm:$0xff]
        %v2127 = vld [vmem:[%s2058 + $0x220] sm:$0xff]
        %v2128 = vld [vmem:[%s2058 + $0x228] sm:$0xff]
        %v2129 = vld [vmem:[%s2058 + $0x230] sm:$0xff]
        %v2130 = vld [vmem:[%s2058 + $0x238] sm:$0xff]
        %s2131 = scalar_lea.vmem %s3, 1
        %v2132 = vld [vmem:[%s2131] sm:$0x1]
        %v2134 = vlaneseq
        %v2135 = vshrl.u32 %v2134, 7
        %v2136 = vsub.s32 0, %v2135
        %v2137 = vrot.slane %v2132, %v2136
        %v2140 = vsel %vm555, %v2022, 0
        %v2143 = vsel %vm555, %v2027, 0
        %v2146 = vsel %vm555, %v2032, 0
        %v2149 = vsel %vm555, %v2037, 0
        %v2152 = vsel %vm555, %v2042, 0
        %v2155 = vsel %vm555, %v2047, 0
        %v2158 = vsel %vm555, %v2052, 0
        %v2161 = vsel %vm555, %v2057, 0
        %2163 = vmatprep.subr.mxu0 0.0
        %2164 = vmatpush1.msra.mxu0 %v2059
        %2165 = vmatprep.subr.mxu0 0.0
        %2166 = vmatpush1.msra.mxu0 %v2060
        %2167 = vmatprep.subr.mxu0 0.0
        %2168 = vmatpush1.msra.mxu0 %v2061
        %2169 = vmatprep.subr.mxu0 0.0
        %2170 = vmatpush1.msra.mxu0 %v2062
        %2171 = vmatprep.subr.mxu0 0.0
        %2172 = vmatpush1.msra.mxu0 %v2063
        %2173 = vmatprep.subr.mxu0 0.0
        %2174 = vmatpush1.msra.mxu0 %v2064
        %2175 = vmatprep.subr.mxu0 0.0
        %2176 = vmatpush1.msra.mxu0 %v2065
        %2177 = vmatprep.subr.mxu0 0.0
        %2178 = vmatpush1.msra.mxu0 %v2066
        %2179 = vmatprep.subr.mxu0 0.0
        %2180 = vmatpush1.msra.mxu0 %v2067
        %2181 = vmatprep.subr.mxu0 0.0
        %2182 = vmatpush1.msra.mxu0 %v2068
        %2183 = vmatprep.subr.mxu0 0.0
        %2184 = vmatpush1.msra.mxu0 %v2069
        %2185 = vmatprep.subr.mxu0 0.0
        %2186 = vmatpush1.msra.mxu0 %v2070
        %2187 = vmatprep.subr.mxu0 0.0
        %2188 = vmatpush1.msra.mxu0 %v2071
        %2189 = vmatprep.subr.mxu0 0.0
        %2190 = vmatpush1.msra.mxu0 %v2072
        %2191 = vmatprep.subr.mxu0 0.0
        %2192 = vmatpush1.msra.mxu0 %v2073
        %2193 = vmatprep.subr.mxu0 0.0
        %2194 = vmatpush1.msra.mxu0 %v2074
        %2195 = vmatprep.subr.mxu0 0.0
        %2196 = vmatpush1.msra.mxu0 %v2075
        %2197 = vmatprep.subr.mxu0 0.0
        %2198 = vmatpush1.msra.mxu0 %v2076
        %2199 = vmatprep.subr.mxu0 0.0
        %2200 = vmatpush1.msra.mxu0 %v2077
        %2201 = vmatprep.subr.mxu0 0.0
        %2202 = vmatpush1.msra.mxu0 %v2078
        %2203 = vmatprep.subr.mxu0 0.0
        %2204 = vmatpush1.msra.mxu0 %v2079
        %2205 = vmatprep.subr.mxu0 0.0
        %2206 = vmatpush1.msra.mxu0 %v2080
        %2207 = vmatprep.subr.mxu0 0.0
        %2208 = vmatpush1.msra.mxu0 %v2081
        %2209 = vmatprep.subr.mxu0 0.0
        %2210 = vmatpush1.msra.mxu0 %v2082
        %2211 = vmatprep.subr.mxu0 0.0
        %2212 = vmatpush1.msra.mxu0 %v2083
        %2213 = vmatprep.subr.mxu0 0.0
        %2214 = vmatpush1.msra.mxu0 %v2084
        %2215 = vmatprep.subr.mxu0 0.0
        %2216 = vmatpush1.msra.mxu0 %v2085
        %2217 = vmatprep.subr.mxu0 0.0
        %2218 = vmatpush1.msra.mxu0 %v2086
        %2219 = vmatprep.subr.mxu0 0.0
        %2220 = vmatpush1.msra.mxu0 %v2087
        %2221 = vmatprep.subr.mxu0 0.0
        %2222 = vmatpush1.msra.mxu0 %v2088
        %2223 = vmatprep.subr.mxu0 0.0
        %2224 = vmatpush1.msra.mxu0 %v2089
        %2225 = vmatprep.subr.mxu0 0.0
        %2226 = vmatpush1.msra.mxu0 %v2090
        %2227 = vmatprep.mubr.f32.mxu0 %v2019
        %2228 = vmatmul.mubr.f32.gmra.mrb[0].mxu0 %v2018
        %v2229 = vpop.f32.mrb[0].mxu0
        %v2230 = vadd.f32 %v2137, %v2229
        %v2231 = vpop.f32.mrb[0].mxu0
        %2232 = vmatprep.mubr.f32.mxu0 %v2024
        %2233 = vmatmul.mubr.f32.gmra.mrb[0].mxu0 %v2023
        %v2234 = vpop.f32.mrb[0].mxu0
        %v2235 = vadd.f32 %v2137, %v2234
        %v2236 = vpop.f32.mrb[0].mxu0
        %2237 = vmatprep.mubr.f32.mxu0 %v2029
        %2238 = vmatmul.mubr.f32.gmra.mrb[0].mxu0 %v2028
        %v2239 = vpop.f32.mrb[0].mxu0
        %v2240 = vadd.f32 %v2137, %v2239
        %v2241 = vpop.f32.mrb[0].mxu0
        %2242 = vmatprep.mubr.f32.mxu0 %v2034
        %2243 = vmatmul.mubr.f32.gmra.mrb[0].mxu0 %v2033
        %v2244 = vpop.f32.mrb[0].mxu0
        %v2245 = vadd.f32 %v2137, %v2244
        %v2246 = vpop.f32.mrb[0].mxu0
        %2247 = vmatprep.mubr.f32.mxu0 %v2039
        %2248 = vmatmul.mubr.f32.gmra.mrb[0].mxu0 %v2038
        %v2249 = vpop.f32.mrb[0].mxu0
        %v2250 = vadd.f32 %v2137, %v2249
        %v2251 = vpop.f32.mrb[0].mxu0
        %2252 = vmatprep.mubr.f32.mxu0 %v2044
        %2253 = vmatmul.mubr.f32.gmra.mrb[0].mxu0 %v2043
        %v2254 = vpop.f32.mrb[0].mxu0
        %v2255 = vadd.f32 %v2137, %v2254
        %v2256 = vpop.f32.mrb[0].mxu0
        %2257 = vmatprep.mubr.f32.mxu0 %v2049
        %2258 = vmatmul.mubr.f32.gmra.mrb[0].mxu0 %v2048
        %v2259 = vpop.f32.mrb[0].mxu0
        %v2260 = vadd.f32 %v2137, %v2259
        %v2261 = vpop.f32.mrb[0].mxu0
        %2262 = vmatprep.mubr.f32.mxu0 %v2054
        %2263 = vmatmul.mubr.f32.gmra.mrb[0].mxu0 %v2053
        %v2264 = vpop.f32.mrb[0].mxu0
        %v2265 = vadd.f32 %v2137, %v2264
        %v2266 = vpop.f32.mrb[0].mxu0
        %2267 = vdwg.mxu0
        %2268 = vmatprep.subr.mxu0 0.0
        %2269 = vmatpush1.msra.mxu0 %v2091
        %2270 = vmatprep.subr.mxu0 0.0
        %2271 = vmatpush1.msra.mxu0 %v2092
        %2272 = vmatprep.subr.mxu0 0.0
        %2273 = vmatpush1.msra.mxu0 %v2093
        %2274 = vmatprep.subr.mxu0 0.0
        %2275 = vmatpush1.msra.mxu0 %v2094
        %2276 = vmatprep.subr.mxu0 0.0
        %2277 = vmatpush1.msra.mxu0 %v2095
        %2278 = vmatprep.subr.mxu0 0.0
        %2279 = vmatpush1.msra.mxu0 %v2096
        %2280 = vmatprep.subr.mxu0 0.0
        %2281 = vmatpush1.msra.mxu0 %v2097
        %2282 = vmatprep.subr.mxu0 0.0
        %2283 = vmatpush1.msra.mxu0 %v2098
        %2284 = vmatprep.subr.mxu0 0.0
        %2285 = vmatpush1.msra.mxu0 %v2099
        %2286 = vmatprep.subr.mxu0 0.0
        %2287 = vmatpush1.msra.mxu0 %v2100
        %2288 = vmatprep.subr.mxu0 0.0
        %2289 = vmatpush1.msra.mxu0 %v2101
        %2290 = vmatprep.subr.mxu0 0.0
        %2291 = vmatpush1.msra.mxu0 %v2102
        %2292 = vmatprep.subr.mxu0 0.0
        %2293 = vmatpush1.msra.mxu0 %v2103
        %2294 = vmatprep.subr.mxu0 0.0
        %2295 = vmatpush1.msra.mxu0 %v2104
        %2296 = vmatprep.subr.mxu0 0.0
        %2297 = vmatpush1.msra.mxu0 %v2105
        %2298 = vmatprep.subr.mxu0 0.0
        %2299 = vmatpush1.msra.mxu0 %v2106
        %2300 = vmatprep.subr.mxu0 0.0
        %2301 = vmatpush1.msra.mxu0 %v2107
        %2302 = vmatprep.subr.mxu0 0.0
        %2303 = vmatpush1.msra.mxu0 %v2108
        %2304 = vmatprep.subr.mxu0 0.0
        %2305 = vmatpush1.msra.mxu0 %v2109
        %2306 = vmatprep.subr.mxu0 0.0
        %2307 = vmatpush1.msra.mxu0 %v2110
        %2308 = vmatprep.subr.mxu0 0.0
        %2309 = vmatpush1.msra.mxu0 %v2111
        %2310 = vmatprep.subr.mxu0 0.0
        %2311 = vmatpush1.msra.mxu0 %v2112
        %2312 = vmatprep.subr.mxu0 0.0
        %2313 = vmatpush1.msra.mxu0 %v2113
        %2314 = vmatprep.subr.mxu0 0.0
        %2315 = vmatpush1.msra.mxu0 %v2114
        %2316 = vmatprep.subr.mxu0 0.0
        %2317 = vmatpush1.msra.mxu0 %v2115
        %2318 = vmatprep.subr.mxu0 0.0
        %2319 = vmatpush1.msra.mxu0 %v2116
        %2320 = vmatprep.subr.mxu0 0.0
        %2321 = vmatpush1.msra.mxu0 %v2117
        %2322 = vmatprep.subr.mxu0 0.0
        %2323 = vmatpush1.msra.mxu0 %v2118
        %2324 = vmatprep.subr.mxu0 0.0
        %2325 = vmatpush1.msra.mxu0 %v2119
        %2326 = vmatprep.subr.mxu0 0.0
        %2327 = vmatpush1.msra.mxu0 %v2120
        %2328 = vmatprep.subr.mxu0 0.0
        %2329 = vmatpush1.msra.mxu0 %v2121
        %2330 = vmatprep.subr.mxu0 0.0
        %2331 = vmatpush1.msra.mxu0 %v2122
        %2332 = vmatprep.mubr.f32.mxu0 %v2021
        %2333 = vmatmul.mubr.f32.gmra.mrb[0].mxu0 %v2020
        %v2334 = vpop.f32.mrb[0].mxu0
        %v2335 = vadd.f32 %v2230, %v2334
        %v2336 = vpop.f32.mrb[0].mxu0
        %2337 = vmatprep.mubr.f32.mxu0 %v2026
        %2338 = vmatmul.mubr.f32.gmra.mrb[0].mxu0 %v2025
        %v2339 = vpop.f32.mrb[0].mxu0
        %v2340 = vadd.f32 %v2235, %v2339
        %v2341 = vpop.f32.mrb[0].mxu0
        %2342 = vmatprep.mubr.f32.mxu0 %v2031
        %2343 = vmatmul.mubr.f32.gmra.mrb[0].mxu0 %v2030
        %v2344 = vpop.f32.mrb[0].mxu0
        %v2345 = vadd.f32 %v2240, %v2344
        %v2346 = vpop.f32.mrb[0].mxu0
        %2347 = vmatprep.mubr.f32.mxu0 %v2036
        %2348 = vmatmul.mubr.f32.gmra.mrb[0].mxu0 %v2035
        %v2349 = vpop.f32.mrb[0].mxu0
        %v2350 = vadd.f32 %v2245, %v2349
        %v2351 = vpop.f32.mrb[0].mxu0
        %2352 = vmatprep.mubr.f32.mxu0 %v2041
        %2353 = vmatmul.mubr.f32.gmra.mrb[0].mxu0 %v2040
        %v2354 = vpop.f32.mrb[0].mxu0
        %v2355 = vadd.f32 %v2250, %v2354
        %v2356 = vpop.f32.mrb[0].mxu0
        %2357 = vmatprep.mubr.f32.mxu0 %v2046
        %2358 = vmatmul.mubr.f32.gmra.mrb[0].mxu0 %v2045
        %v2359 = vpop.f32.mrb[0].mxu0
        %v2360 = vadd.f32 %v2255, %v2359
        %v2361 = vpop.f32.mrb[0].mxu0
        %2362 = vmatprep.mubr.f32.mxu0 %v2051
        %2363 = vmatmul.mubr.f32.gmra.mrb[0].mxu0 %v2050
        %v2364 = vpop.f32.mrb[0].mxu0
        %v2365 = vadd.f32 %v2260, %v2364
        %v2366 = vpop.f32.mrb[0].mxu0
        %2367 = vmatprep.mubr.f32.mxu0 %v2056
        %2368 = vmatmul.mubr.f32.gmra.mrb[0].mxu0 %v2055
        %v2369 = vpop.f32.mrb[0].mxu0
        %v2370 = vadd.f32 %v2265, %v2369
        %v2371 = vpop.f32.mrb[0].mxu0
        %2372 = vdwg.mxu0
        %2373 = vmatprep.subr.mxu0 0.0
        %2374 = vmatpush1.msra.mxu0 %v2123
        %2375 = vmatprep.subr.mxu0 0.0
        %2376 = vmatpush1.msra.mxu0 %v2124
        %2377 = vmatprep.subr.mxu0 0.0
        %2378 = vmatpush1.msra.mxu0 %v2125
        %2379 = vmatprep.subr.mxu0 0.0
        %2380 = vmatpush1.msra.mxu0 %v2126
        %2381 = vmatprep.subr.mxu0 0.0
        %2382 = vmatpush1.msra.mxu0 %v2127
        %2383 = vmatprep.subr.mxu0 0.0
        %2384 = vmatpush1.msra.mxu0 %v2128
        %2385 = vmatprep.subr.mxu0 0.0
        %2386 = vmatpush1.msra.mxu0 %v2129
        %2387 = vmatprep.subr.mxu0 0.0
        %2388 = vmatpush1.msra.mxu0 %v2130
        %2389 = vmatprep.subr.mxu0 0.0
        %2390 = vmatpush1.msra.mxu0 0.0
        %2391 = vmatprep.subr.mxu0 0.0
        %2392 = vmatpush1.msra.mxu0 0.0
        %2393 = vmatprep.subr.mxu0 0.0
        %2394 = vmatpush1.msra.mxu0 0.0
        %2395 = vmatprep.subr.mxu0 0.0
        %2396 = vmatpush1.msra.mxu0 0.0
        %2397 = vmatprep.subr.mxu0 0.0
        %2398 = vmatpush1.msra.mxu0 0.0
        %2399 = vmatprep.subr.mxu0 0.0
        %2400 = vmatpush1.msra.mxu0 0.0
        %2401 = vmatprep.subr.mxu0 0.0
        %2402 = vmatpush1.msra.mxu0 0.0
        %2403 = vmatprep.subr.mxu0 0.0
        %2404 = vmatpush1.msra.mxu0 0.0
        %2405 = vmatprep.subr.mxu0 0.0
        %2406 = vmatpush1.msra.mxu0 0.0
        %2407 = vmatprep.subr.mxu0 0.0
        %2408 = vmatpush1.msra.mxu0 0.0
        %2409 = vmatprep.subr.mxu0 0.0
        %2410 = vmatpush1.msra.mxu0 0.0
        %2411 = vmatprep.subr.mxu0 0.0
        %2412 = vmatpush1.msra.mxu0 0.0
        %2413 = vmatprep.subr.mxu0 0.0
        %2414 = vmatpush1.msra.mxu0 0.0
        %2415 = vmatprep.subr.mxu0 0.0
        %2416 = vmatpush1.msra.mxu0 0.0
        %2417 = vmatprep.subr.mxu0 0.0
        %2418 = vmatpush1.msra.mxu0 0.0
        %2419 = vmatprep.subr.mxu0 0.0
        %2420 = vmatpush1.msra.mxu0 0.0
        %2421 = vmatprep.subr.mxu0 0.0
        %2422 = vmatpush1.msra.mxu0 0.0
        %2423 = vmatprep.subr.mxu0 0.0
        %2424 = vmatpush1.msra.mxu0 0.0
        %2425 = vmatprep.subr.mxu0 0.0
        %2426 = vmatpush1.msra.mxu0 0.0
        %2427 = vmatprep.subr.mxu0 0.0
        %2428 = vmatpush1.msra.mxu0 0.0
        %2429 = vmatprep.subr.mxu0 0.0
        %2430 = vmatpush1.msra.mxu0 0.0
        %2431 = vmatprep.subr.mxu0 0.0
        %2432 = vmatpush1.msra.mxu0 0.0
        %2433 = vmatprep.subr.mxu0 0.0
        %2434 = vmatpush1.msra.mxu0 0.0
        %2435 = vmatprep.subr.mxu0 0.0
        %2436 = vmatpush1.msra.mxu0 0.0
        %2437 = vmatprep.mubr.f32.mxu0 0.0
        %2438 = vmatmul.mubr.f32.gmra.mrb[0].mxu0 %v2140
        %v2439 = vpop.f32.mrb[0].mxu0
        %v2440 = vadd.f32 %v2335, %v2439
        %v2441 = vpop.f32.mrb[0].mxu0
        %2442 = vmatprep.mubr.f32.mxu0 0.0
        %2443 = vmatmul.mubr.f32.gmra.mrb[0].mxu0 %v2143
        %v2444 = vpop.f32.mrb[0].mxu0
        %v2445 = vadd.f32 %v2340, %v2444
        %v2446 = vpop.f32.mrb[0].mxu0
        %2447 = vmatprep.mubr.f32.mxu0 0.0
        %2448 = vmatmul.mubr.f32.gmra.mrb[0].mxu0 %v2146
        %v2449 = vpop.f32.mrb[0].mxu0
        %v2450 = vadd.f32 %v2345, %v2449
        %v2451 = vpop.f32.mrb[0].mxu0
        %2452 = vmatprep.mubr.f32.mxu0 0.0
        %2453 = vmatmul.mubr.f32.gmra.mrb[0].mxu0 %v2149
        %v2454 = vpop.f32.mrb[0].mxu0
        %v2455 = vadd.f32 %v2350, %v2454
        %v2456 = vpop.f32.mrb[0].mxu0
        %2457 = vmatprep.mubr.f32.mxu0 0.0
        %2458 = vmatmul.mubr.f32.gmra.mrb[0].mxu0 %v2152
        %v2459 = vpop.f32.mrb[0].mxu0
        %v2460 = vadd.f32 %v2355, %v2459
        %v2461 = vpop.f32.mrb[0].mxu0
        %2462 = vmatprep.mubr.f32.mxu0 0.0
        %2463 = vmatmul.mubr.f32.gmra.mrb[0].mxu0 %v2155
        %v2464 = vpop.f32.mrb[0].mxu0
        %v2465 = vadd.f32 %v2360, %v2464
        %v2466 = vpop.f32.mrb[0].mxu0
        %2467 = vmatprep.mubr.f32.mxu0 0.0
        %2468 = vmatmul.mubr.f32.gmra.mrb[0].mxu0 %v2158
        %v2469 = vpop.f32.mrb[0].mxu0
        %v2470 = vadd.f32 %v2365, %v2469
        %v2471 = vpop.f32.mrb[0].mxu0
        %2472 = vmatprep.mubr.f32.mxu0 0.0
        %2473 = vmatmul.mubr.f32.gmra.mrb[0].mxu0 %v2161
        %v2474 = vpop.f32.mrb[0].mxu0
        %v2475 = vadd.f32 %v2370, %v2474
        %v2476 = vpop.f32.mrb[0].mxu0
        %2477 = vdwg.mxu0
        %v2478 = vadd.f32 %v2440, %v863
        %v2479 = vadd.f32 %v2445, %v864
        %v2480 = vadd.f32 %v2450, %v865
        %v2481 = vadd.f32 %v2455, %v866
        %v2482 = vadd.f32 %v2460, %v867
        %v2483 = vadd.f32 %v2465, %v868
        %v2484 = vadd.f32 %v2470, %v869
        %v2485 = vadd.f32 %v2475, %v870
        %v2486 = vmax.f32 %v2478, 0.0
        %v2487 = vmax.f32 %v2479, 0.0
        %v2488 = vmax.f32 %v2480, 0.0
        %v2489 = vmax.f32 %v2481, 0.0
        %v2490 = vmax.f32 %v2482, 0.0
        %v2491 = vmax.f32 %v2483, 0.0
        %v2492 = vmax.f32 %v2484, 0.0
        %v2493 = vmax.f32 %v2485, 0.0
        %2494 = vst.msk [vmem:[#allocation4 + $0x10] sm:$0xff] %vm555, %v2486
        %2495 = vst.msk [vmem:[#allocation4 + $0x18] sm:$0xff] %vm555, %v2487
        %2496 = vst.msk [vmem:[#allocation4 + $0x20] sm:$0xff] %vm555, %v2488
        %2497 = vst.msk [vmem:[#allocation4 + $0x28] sm:$0xff] %vm555, %v2489
        %2498 = vst.msk [vmem:[#allocation4 + $0x30] sm:$0xff] %vm555, %v2490
        %2499 = vst.msk [vmem:[#allocation4 + $0x38] sm:$0xff] %vm555, %v2491
        %2500 = vst.msk [vmem:[#allocation4 + $0x40] sm:$0xff] %vm555, %v2492
        %2501 = vst.msk [vmem:[#allocation4 + $0x48] sm:$0xff] %vm555, %v2493
        %v2502 = vld [vmem:[#allocation4 + $0x7] sm:$0xff]
        %v2503 = vld [vmem:[#allocation4 + $0xf] sm:$0xff]
        %v2504 = vld [vmem:[#allocation4 + $0x17] sm:$0xff]
        %v2505 = vld [vmem:[#allocation4 + $0x1f] sm:$0xff]
        %v2506 = vld [vmem:[#allocation4 + $0x27] sm:$0xff]
        %v2507 = vld [vmem:[#allocation4 + $0x2f] sm:$0xff]
        %v2508 = vld [vmem:[#allocation4 + $0x37] sm:$0xff]
        %v2509 = vld [vmem:[#allocation4 + $0x3f] sm:$0xff]
        %v2510 = vsel %vm887, %v2502, 0.0
        %v2511 = vsel %vm888, %v2503, 0.0
        %v2512 = vsel %vm889, %v2504, 0.0
        %v2513 = vsel %vm890, %v2505, 0.0
        %v2514 = vsel %vm891, %v2506, 0.0
        %v2515 = vsel %vm892, %v2507, 0.0
        %v2516 = vsel %vm893, %v2508, 0.0
        %v2517 = vsel %vm894, %v2509, 0.0
        %2518 = vst.msk [vmem:[#allocation5] sm:$0xff] %vm555, %v2510
        %2519 = vst.msk [vmem:[#allocation5 + $0x28] sm:$0xff] %vm555, %v2511
        %2520 = vst.msk [vmem:[#allocation5 + $0x50] sm:$0xff] %vm555, %v2512
        %2521 = vst.msk [vmem:[#allocation5 + $0x78] sm:$0xff] %vm555, %v2513
        %2522 = vst.msk [vmem:[#allocation5 + $0xa0] sm:$0xff] %vm555, %v2514
        %2523 = vst.msk [vmem:[#allocation5 + $0xc8] sm:$0xff] %vm555, %v2515
        %2524 = vst.msk [vmem:[#allocation5 + $0xf0] sm:$0xff] %vm555, %v2516
        %2525 = vst.msk [vmem:[#allocation5 + $0x118] sm:$0xff] %vm555, %v2517
        %v2526 = vld [vmem:[#allocation4 + $0x8] sm:$0xff]
        %v2527 = vld [vmem:[#allocation4 + $0x10] sm:$0xff]
        %v2528 = vld [vmem:[#allocation4 + $0x18] sm:$0xff]
        %v2529 = vld [vmem:[#allocation4 + $0x20] sm:$0xff]
        %v2530 = vld [vmem:[#allocation4 + $0x28] sm:$0xff]
        %v2531 = vld [vmem:[#allocation4 + $0x30] sm:$0xff]
        %v2532 = vld [vmem:[#allocation4 + $0x38] sm:$0xff]
        %v2533 = vld [vmem:[#allocation4 + $0x40] sm:$0xff]
        %2542 = vrot.lane.b32.xlu0 %v2526, 64
        %v2543 = vpop.permute.xlu0 %2542
        %2544 = vrot.lane.b32.xlu0 %v2527, 64
        %v2545 = vpop.permute.xlu0 %2544
        %2546 = vrot.lane.b32.xlu0 %v2528, 64
        %v2547 = vpop.permute.xlu0 %2546
        %2548 = vrot.lane.b32.xlu0 %v2529, 64
        %v2549 = vpop.permute.xlu0 %2548
        %2550 = vrot.lane.b32.xlu0 %v2530, 64
        %v2551 = vpop.permute.xlu0 %2550
        %2552 = vrot.lane.b32.xlu0 %v2531, 64
        %v2553 = vpop.permute.xlu0 %2552
        %2554 = vrot.lane.b32.xlu0 %v2532, 64
        %v2555 = vpop.permute.xlu0 %2554
        %2556 = vrot.lane.b32.xlu0 %v2533, 64
        %v2557 = vpop.permute.xlu0 %2556
        %2566 = vst.msk [vmem:[#allocation5] sm:$0xff] %vm951, %v2543
        %2567 = vst.msk [vmem:[#allocation5 + $0x28] sm:$0xff] %vm951, %v2545
        %2568 = vst.msk [vmem:[#allocation5 + $0x50] sm:$0xff] %vm951, %v2547
        %2569 = vst.msk [vmem:[#allocation5 + $0x78] sm:$0xff] %vm951, %v2549
        %2570 = vst.msk [vmem:[#allocation5 + $0xa0] sm:$0xff] %vm951, %v2551
        %2571 = vst.msk [vmem:[#allocation5 + $0xc8] sm:$0xff] %vm951, %v2553
        %2572 = vst.msk [vmem:[#allocation5 + $0xf0] sm:$0xff] %vm951, %v2555
        %2573 = vst.msk [vmem:[#allocation5 + $0x118] sm:$0xff] %vm951, %v2557
        %v2574 = vld [vmem:[#allocation4 + $0x9] sm:$0xff]
        %v2575 = vld [vmem:[#allocation4 + $0x11] sm:$0xff]
        %v2576 = vld [vmem:[#allocation4 + $0x19] sm:$0xff]
        %v2577 = vld [vmem:[#allocation4 + $0x21] sm:$0xff]
        %v2578 = vld [vmem:[#allocation4 + $0x29] sm:$0xff]
        %v2579 = vld [vmem:[#allocation4 + $0x31] sm:$0xff]
        %v2580 = vld [vmem:[#allocation4 + $0x39] sm:$0xff]
        %v2581 = vld [vmem:[#allocation4 + $0x41] sm:$0xff]
        %v2582 = vsel %vm976, %v2574, 0.0
        %v2583 = vsel %vm977, %v2575, 0.0
        %v2584 = vsel %vm978, %v2576, 0.0
        %v2585 = vsel %vm979, %v2577, 0.0
        %v2586 = vsel %vm980, %v2578, 0.0
        %v2587 = vsel %vm981, %v2579, 0.0
        %v2588 = vsel %vm982, %v2580, 0.0
        %v2589 = vsel %vm983, %v2581, 0.0
        %2590 = vst.msk [vmem:[#allocation5 + $0x8] sm:$0xff] %vm555, %v2582
        %2591 = vst.msk [vmem:[#allocation5 + $0x30] sm:$0xff] %vm555, %v2583
        %2592 = vst.msk [vmem:[#allocation5 + $0x58] sm:$0xff] %vm555, %v2584
        %2593 = vst.msk [vmem:[#allocation5 + $0x80] sm:$0xff] %vm555, %v2585
        %2594 = vst.msk [vmem:[#allocation5 + $0xa8] sm:$0xff] %vm555, %v2586
        %2595 = vst.msk [vmem:[#allocation5 + $0xd0] sm:$0xff] %vm555, %v2587
        %2596 = vst.msk [vmem:[#allocation5 + $0xf8] sm:$0xff] %vm555, %v2588
        %2597 = vst.msk [vmem:[#allocation5 + $0x120] sm:$0xff] %vm555, %v2589
        %v2598 = vld [vmem:[#allocation4 + $0xf] sm:$0xff]
        %v2599 = vld [vmem:[#allocation4 + $0x17] sm:$0xff]
        %v2600 = vld [vmem:[#allocation4 + $0x1f] sm:$0xff]
        %v2601 = vld [vmem:[#allocation4 + $0x27] sm:$0xff]
        %v2602 = vld [vmem:[#allocation4 + $0x2f] sm:$0xff]
        %v2603 = vld [vmem:[#allocation4 + $0x37] sm:$0xff]
        %v2604 = vld [vmem:[#allocation4 + $0x3f] sm:$0xff]
        %v2605 = vld [vmem:[#allocation4 + $0x47] sm:$0xff]
        %v2606 = vsel %vm887, %v2598, 0.0
        %v2607 = vsel %vm888, %v2599, 0.0
        %v2608 = vsel %vm889, %v2600, 0.0
        %v2609 = vsel %vm890, %v2601, 0.0
        %v2610 = vsel %vm891, %v2602, 0.0
        %v2611 = vsel %vm892, %v2603, 0.0
        %v2612 = vsel %vm893, %v2604, 0.0
        %v2613 = vsel %vm894, %v2605, 0.0
        %2622 = vrot.lane.b32.xlu0 %v2606, 64
        %v2623 = vpop.permute.xlu0 %2622
        %2624 = vrot.lane.b32.xlu0 %v2607, 64
        %v2625 = vpop.permute.xlu0 %2624
        %2626 = vrot.lane.b32.xlu0 %v2608, 64
        %v2627 = vpop.permute.xlu0 %2626
        %2628 = vrot.lane.b32.xlu0 %v2609, 64
        %v2629 = vpop.permute.xlu0 %2628
        %2630 = vrot.lane.b32.xlu0 %v2610, 64
        %v2631 = vpop.permute.xlu0 %2630
        %2632 = vrot.lane.b32.xlu0 %v2611, 64
        %v2633 = vpop.permute.xlu0 %2632
        %2634 = vrot.lane.b32.xlu0 %v2612, 64
        %v2635 = vpop.permute.xlu0 %2634
        %2636 = vrot.lane.b32.xlu0 %v2613, 64
        %v2637 = vpop.permute.xlu0 %2636
        %2646 = vst.msk [vmem:[#allocation5 + $0x8] sm:$0xff] %vm951, %v2623
        %2647 = vst.msk [vmem:[#allocation5 + $0x30] sm:$0xff] %vm951, %v2625
        %2648 = vst.msk [vmem:[#allocation5 + $0x58] sm:$0xff] %vm951, %v2627
        %2649 = vst.msk [vmem:[#allocation5 + $0x80] sm:$0xff] %vm951, %v2629
        %2650 = vst.msk [vmem:[#allocation5 + $0xa8] sm:$0xff] %vm951, %v2631
        %2651 = vst.msk [vmem:[#allocation5 + $0xd0] sm:$0xff] %vm951, %v2633
        %2652 = vst.msk [vmem:[#allocation5 + $0xf8] sm:$0xff] %vm951, %v2635
        %2653 = vst.msk [vmem:[#allocation5 + $0x120] sm:$0xff] %vm951, %v2637
        %v2654 = vld [vmem:[#allocation4 + $0x10] sm:$0xff]
        %v2655 = vld [vmem:[#allocation4 + $0x18] sm:$0xff]
        %v2656 = vld [vmem:[#allocation4 + $0x20] sm:$0xff]
        %v2657 = vld [vmem:[#allocation4 + $0x28] sm:$0xff]
        %v2658 = vld [vmem:[#allocation4 + $0x30] sm:$0xff]
        %v2659 = vld [vmem:[#allocation4 + $0x38] sm:$0xff]
        %v2660 = vld [vmem:[#allocation4 + $0x40] sm:$0xff]
        %v2661 = vld [vmem:[#allocation4 + $0x48] sm:$0xff]
        %2662 = vst.msk [vmem:[#allocation5 + $0x10] sm:$0xff] %vm555, %v2654
        %2663 = vst.msk [vmem:[#allocation5 + $0x38] sm:$0xff] %vm555, %v2655
        %2664 = vst.msk [vmem:[#allocation5 + $0x60] sm:$0xff] %vm555, %v2656
        %2665 = vst.msk [vmem:[#allocation5 + $0x88] sm:$0xff] %vm555, %v2657
        %2666 = vst.msk [vmem:[#allocation5 + $0xb0] sm:$0xff] %vm555, %v2658
        %2667 = vst.msk [vmem:[#allocation5 + $0xd8] sm:$0xff] %vm555, %v2659
        %2668 = vst.msk [vmem:[#allocation5 + $0x100] sm:$0xff] %vm555, %v2660
        %2669 = vst.msk [vmem:[#allocation5 + $0x128] sm:$0xff] %vm555, %v2661
        %v2670 = vld [vmem:[#allocation4 + $0x11] sm:$0xff]
        %v2671 = vld [vmem:[#allocation4 + $0x19] sm:$0xff]
        %v2672 = vld [vmem:[#allocation4 + $0x21] sm:$0xff]
        %v2673 = vld [vmem:[#allocation4 + $0x29] sm:$0xff]
        %v2674 = vld [vmem:[#allocation4 + $0x31] sm:$0xff]
        %v2675 = vld [vmem:[#allocation4 + $0x39] sm:$0xff]
        %v2676 = vld [vmem:[#allocation4 + $0x41] sm:$0xff]
        %v2677 = vld [vmem:[#allocation4 + $0x49] sm:$0xff]
        %v2678 = vsel %vm976, %v2670, 0.0
        %v2679 = vsel %vm977, %v2671, 0.0
        %v2680 = vsel %vm978, %v2672, 0.0
        %v2681 = vsel %vm979, %v2673, 0.0
        %v2682 = vsel %vm980, %v2674, 0.0
        %v2683 = vsel %vm981, %v2675, 0.0
        %v2684 = vsel %vm982, %v2676, 0.0
        %v2685 = vsel %vm983, %v2677, 0.0
        %2694 = vrot.lane.b32.xlu0 %v2678, 64
        %v2695 = vpop.permute.xlu0 %2694
        %2696 = vrot.lane.b32.xlu0 %v2679, 64
        %v2697 = vpop.permute.xlu0 %2696
        %2698 = vrot.lane.b32.xlu0 %v2680, 64
        %v2699 = vpop.permute.xlu0 %2698
        %2700 = vrot.lane.b32.xlu0 %v2681, 64
        %v2701 = vpop.permute.xlu0 %2700
        %2702 = vrot.lane.b32.xlu0 %v2682, 64
        %v2703 = vpop.permute.xlu0 %2702
        %2704 = vrot.lane.b32.xlu0 %v2683, 64
        %v2705 = vpop.permute.xlu0 %2704
        %2706 = vrot.lane.b32.xlu0 %v2684, 64
        %v2707 = vpop.permute.xlu0 %2706
        %2708 = vrot.lane.b32.xlu0 %v2685, 64
        %v2709 = vpop.permute.xlu0 %2708
        %2718 = vst.msk [vmem:[#allocation5 + $0x10] sm:$0xff] %vm951, %v2695
        %2719 = vst.msk [vmem:[#allocation5 + $0x38] sm:$0xff] %vm951, %v2697
        %2720 = vst.msk [vmem:[#allocation5 + $0x60] sm:$0xff] %vm951, %v2699
        %2721 = vst.msk [vmem:[#allocation5 + $0x88] sm:$0xff] %vm951, %v2701
        %2722 = vst.msk [vmem:[#allocation5 + $0xb0] sm:$0xff] %vm951, %v2703
        %2723 = vst.msk [vmem:[#allocation5 + $0xd8] sm:$0xff] %vm951, %v2705
        %2724 = vst.msk [vmem:[#allocation5 + $0x100] sm:$0xff] %vm951, %v2707
        %2725 = vst.msk [vmem:[#allocation5 + $0x128] sm:$0xff] %vm951, %v2709
        %v2726 = vld [vmem:[#allocation4 + $0x17] sm:$0xff]
        %v2727 = vld [vmem:[#allocation4 + $0x1f] sm:$0xff]
        %v2728 = vld [vmem:[#allocation4 + $0x27] sm:$0xff]
        %v2729 = vld [vmem:[#allocation4 + $0x2f] sm:$0xff]
        %v2730 = vld [vmem:[#allocation4 + $0x37] sm:$0xff]
        %v2731 = vld [vmem:[#allocation4 + $0x3f] sm:$0xff]
        %v2732 = vld [vmem:[#allocation4 + $0x47] sm:$0xff]
        %v2733 = vld [vmem:[#allocation4 + $0x4f] sm:$0xff]
        %v2734 = vsel %vm887, %v2726, 0.0
        %v2735 = vsel %vm888, %v2727, 0.0
        %v2736 = vsel %vm889, %v2728, 0.0
        %v2737 = vsel %vm890, %v2729, 0.0
        %v2738 = vsel %vm891, %v2730, 0.0
        %v2739 = vsel %vm892, %v2731, 0.0
        %v2740 = vsel %vm893, %v2732, 0.0
        %v2741 = vsel %vm894, %v2733, 0.0
        %2742 = vst.msk [vmem:[#allocation5 + $0x18] sm:$0xff] %vm555, %v2734
        %2743 = vst.msk [vmem:[#allocation5 + $0x40] sm:$0xff] %vm555, %v2735
        %2744 = vst.msk [vmem:[#allocation5 + $0x68] sm:$0xff] %vm555, %v2736
        %2745 = vst.msk [vmem:[#allocation5 + $0x90] sm:$0xff] %vm555, %v2737
        %2746 = vst.msk [vmem:[#allocation5 + $0xb8] sm:$0xff] %vm555, %v2738
        %2747 = vst.msk [vmem:[#allocation5 + $0xe0] sm:$0xff] %vm555, %v2739
        %2748 = vst.msk [vmem:[#allocation5 + $0x108] sm:$0xff] %vm555, %v2740
        %2749 = vst.msk [vmem:[#allocation5 + $0x130] sm:$0xff] %vm555, %v2741
        %v2750 = vld [vmem:[#allocation4 + $0x18] sm:$0xff]
        %v2751 = vld [vmem:[#allocation4 + $0x20] sm:$0xff]
        %v2752 = vld [vmem:[#allocation4 + $0x28] sm:$0xff]
        %v2753 = vld [vmem:[#allocation4 + $0x30] sm:$0xff]
        %v2754 = vld [vmem:[#allocation4 + $0x38] sm:$0xff]
        %v2755 = vld [vmem:[#allocation4 + $0x40] sm:$0xff]
        %v2756 = vld [vmem:[#allocation4 + $0x48] sm:$0xff]
        %v2757 = vld [vmem:[#allocation4 + $0x50] sm:$0xff]
        %2766 = vrot.lane.b32.xlu0 %v2750, 64
        %v2767 = vpop.permute.xlu0 %2766
        %2768 = vrot.lane.b32.xlu0 %v2751, 64
        %v2769 = vpop.permute.xlu0 %2768
        %2770 = vrot.lane.b32.xlu0 %v2752, 64
        %v2771 = vpop.permute.xlu0 %2770
        %2772 = vrot.lane.b32.xlu0 %v2753, 64
        %v2773 = vpop.permute.xlu0 %2772
        %2774 = vrot.lane.b32.xlu0 %v2754, 64
        %v2775 = vpop.permute.xlu0 %2774
        %2776 = vrot.lane.b32.xlu0 %v2755, 64
        %v2777 = vpop.permute.xlu0 %2776
        %2778 = vrot.lane.b32.xlu0 %v2756, 64
        %v2779 = vpop.permute.xlu0 %2778
        %2780 = vrot.lane.b32.xlu0 %v2757, 64
        %v2781 = vpop.permute.xlu0 %2780
        %2790 = vst.msk [vmem:[#allocation5 + $0x18] sm:$0xff] %vm951, %v2767
        %2791 = vst.msk [vmem:[#allocation5 + $0x40] sm:$0xff] %vm951, %v2769
        %2792 = vst.msk [vmem:[#allocation5 + $0x68] sm:$0xff] %vm951, %v2771
        %2793 = vst.msk [vmem:[#allocation5 + $0x90] sm:$0xff] %vm951, %v2773
        %2794 = vst.msk [vmem:[#allocation5 + $0xb8] sm:$0xff] %vm951, %v2775
        %2795 = vst.msk [vmem:[#allocation5 + $0xe0] sm:$0xff] %vm951, %v2777
        %2796 = vst.msk [vmem:[#allocation5 + $0x108] sm:$0xff] %vm951, %v2779
        %2797 = vst.msk [vmem:[#allocation5 + $0x130] sm:$0xff] %vm951, %v2781
        %v2798 = vld [vmem:[#allocation4 + $0x19] sm:$0xff]
        %v2799 = vld [vmem:[#allocation4 + $0x21] sm:$0xff]
        %v2800 = vld [vmem:[#allocation4 + $0x29] sm:$0xff]
        %v2801 = vld [vmem:[#allocation4 + $0x31] sm:$0xff]
        %v2802 = vld [vmem:[#allocation4 + $0x39] sm:$0xff]
        %v2803 = vld [vmem:[#allocation4 + $0x41] sm:$0xff]
        %v2804 = vld [vmem:[#allocation4 + $0x49] sm:$0xff]
        %v2805 = vld [vmem:[#allocation4 + $0x51] sm:$0xff]
        %v2806 = vsel %vm976, %v2798, 0.0
        %v2807 = vsel %vm977, %v2799, 0.0
        %v2808 = vsel %vm978, %v2800, 0.0
        %v2809 = vsel %vm979, %v2801, 0.0
        %v2810 = vsel %vm980, %v2802, 0.0
        %v2811 = vsel %vm981, %v2803, 0.0
        %v2812 = vsel %vm982, %v2804, 0.0
        %v2813 = vsel %vm983, %v2805, 0.0
        %2814 = vst.msk [vmem:[#allocation5 + $0x20] sm:$0xff] %vm555, %v2806
        %2815 = vst.msk [vmem:[#allocation5 + $0x48] sm:$0xff] %vm555, %v2807
        %2816 = vst.msk [vmem:[#allocation5 + $0x70] sm:$0xff] %vm555, %v2808
        %2817 = vst.msk [vmem:[#allocation5 + $0x98] sm:$0xff] %vm555, %v2809
        %2818 = vst.msk [vmem:[#allocation5 + $0xc0] sm:$0xff] %vm555, %v2810
        %2819 = vst.msk [vmem:[#allocation5 + $0xe8] sm:$0xff] %vm555, %v2811
        %2820 = vst.msk [vmem:[#allocation5 + $0x110] sm:$0xff] %vm555, %v2812
        %2821 = vst.msk [vmem:[#allocation5 + $0x138] sm:$0xff] %vm555, %v2813
        %v2822 = vld [vmem:[#allocation5] sm:$0xff]
        %v2823 = vld [vmem:[#allocation5 + $0x8] sm:$0xff]
        %v2824 = vld [vmem:[#allocation5 + $0x10] sm:$0xff]
        %v2825 = vld [vmem:[#allocation5 + $0x18] sm:$0xff]
        %v2826 = vld [vmem:[#allocation5 + $0x20] sm:$0xff]
        %v2827 = vld [vmem:[#allocation5 + $0x28] sm:$0xff]
        %v2828 = vld [vmem:[#allocation5 + $0x30] sm:$0xff]
        %v2829 = vld [vmem:[#allocation5 + $0x38] sm:$0xff]
        %v2830 = vld [vmem:[#allocation5 + $0x40] sm:$0xff]
        %v2831 = vld [vmem:[#allocation5 + $0x48] sm:$0xff]
        %v2832 = vld [vmem:[#allocation5 + $0x50] sm:$0xff]
        %v2833 = vld [vmem:[#allocation5 + $0x58] sm:$0xff]
        %v2834 = vld [vmem:[#allocation5 + $0x60] sm:$0xff]
        %v2835 = vld [vmem:[#allocation5 + $0x68] sm:$0xff]
        %v2836 = vld [vmem:[#allocation5 + $0x70] sm:$0xff]
        %v2837 = vld [vmem:[#allocation5 + $0x78] sm:$0xff]
        %v2838 = vld [vmem:[#allocation5 + $0x80] sm:$0xff]
        %v2839 = vld [vmem:[#allocation5 + $0x88] sm:$0xff]
        %v2840 = vld [vmem:[#allocation5 + $0x90] sm:$0xff]
        %v2841 = vld [vmem:[#allocation5 + $0x98] sm:$0xff]
        %v2842 = vld [vmem:[#allocation5 + $0xa0] sm:$0xff]
        %v2843 = vld [vmem:[#allocation5 + $0xa8] sm:$0xff]
        %v2844 = vld [vmem:[#allocation5 + $0xb0] sm:$0xff]
        %v2845 = vld [vmem:[#allocation5 + $0xb8] sm:$0xff]
        %v2846 = vld [vmem:[#allocation5 + $0xc0] sm:$0xff]
        %v2847 = vld [vmem:[#allocation5 + $0xc8] sm:$0xff]
        %v2848 = vld [vmem:[#allocation5 + $0xd0] sm:$0xff]
        %v2849 = vld [vmem:[#allocation5 + $0xd8] sm:$0xff]
        %v2850 = vld [vmem:[#allocation5 + $0xe0] sm:$0xff]
        %v2851 = vld [vmem:[#allocation5 + $0xe8] sm:$0xff]
        %v2852 = vld [vmem:[#allocation5 + $0xf0] sm:$0xff]
        %v2853 = vld [vmem:[#allocation5 + $0xf8] sm:$0xff]
        %v2854 = vld [vmem:[#allocation5 + $0x100] sm:$0xff]
        %v2855 = vld [vmem:[#allocation5 + $0x108] sm:$0xff]
        %v2856 = vld [vmem:[#allocation5 + $0x110] sm:$0xff]
        %v2857 = vld [vmem:[#allocation5 + $0x118] sm:$0xff]
        %v2858 = vld [vmem:[#allocation5 + $0x120] sm:$0xff]
        %v2859 = vld [vmem:[#allocation5 + $0x128] sm:$0xff]
        %v2860 = vld [vmem:[#allocation5 + $0x130] sm:$0xff]
        %v2861 = vld [vmem:[#allocation5 + $0x138] sm:$0xff]
        %s2862 = scalar_lea.vmem %s2, 1152
        %v2863 = vld [vmem:[%s2862] sm:$0xff]
        %v2864 = vld [vmem:[%s2862 + $0x8] sm:$0xff]
        %v2865 = vld [vmem:[%s2862 + $0x10] sm:$0xff]
        %v2866 = vld [vmem:[%s2862 + $0x18] sm:$0xff]
        %v2867 = vld [vmem:[%s2862 + $0x20] sm:$0xff]
        %v2868 = vld [vmem:[%s2862 + $0x28] sm:$0xff]
        %v2869 = vld [vmem:[%s2862 + $0x30] sm:$0xff]
        %v2870 = vld [vmem:[%s2862 + $0x38] sm:$0xff]
        %v2871 = vld [vmem:[%s2862 + $0x40] sm:$0xff]
        %v2872 = vld [vmem:[%s2862 + $0x48] sm:$0xff]
        %v2873 = vld [vmem:[%s2862 + $0x50] sm:$0xff]
        %v2874 = vld [vmem:[%s2862 + $0x58] sm:$0xff]
        %v2875 = vld [vmem:[%s2862 + $0x60] sm:$0xff]
        %v2876 = vld [vmem:[%s2862 + $0x68] sm:$0xff]
        %v2877 = vld [vmem:[%s2862 + $0x70] sm:$0xff]
        %v2878 = vld [vmem:[%s2862 + $0x78] sm:$0xff]
        %v2879 = vld [vmem:[%s2862 + $0x80] sm:$0xff]
        %v2880 = vld [vmem:[%s2862 + $0x88] sm:$0xff]
        %v2881 = vld [vmem:[%s2862 + $0x90] sm:$0xff]
        %v2882 = vld [vmem:[%s2862 + $0x98] sm:$0xff]
        %v2883 = vld [vmem:[%s2862 + $0xa0] sm:$0xff]
        %v2884 = vld [vmem:[%s2862 + $0xa8] sm:$0xff]
        %v2885 = vld [vmem:[%s2862 + $0xb0] sm:$0xff]
        %v2886 = vld [vmem:[%s2862 + $0xb8] sm:$0xff]
        %v2887 = vld [vmem:[%s2862 + $0xc0] sm:$0xff]
        %v2888 = vld [vmem:[%s2862 + $0xc8] sm:$0xff]
        %v2889 = vld [vmem:[%s2862 + $0xd0] sm:$0xff]
        %v2890 = vld [vmem:[%s2862 + $0xd8] sm:$0xff]
        %v2891 = vld [vmem:[%s2862 + $0xe0] sm:$0xff]
        %v2892 = vld [vmem:[%s2862 + $0xe8] sm:$0xff]
        %v2893 = vld [vmem:[%s2862 + $0xf0] sm:$0xff]
        %v2894 = vld [vmem:[%s2862 + $0xf8] sm:$0xff]
        %v2895 = vld [vmem:[%s2862 + $0x100] sm:$0xff]
        %v2896 = vld [vmem:[%s2862 + $0x108] sm:$0xff]
        %v2897 = vld [vmem:[%s2862 + $0x110] sm:$0xff]
        %v2898 = vld [vmem:[%s2862 + $0x118] sm:$0xff]
        %v2899 = vld [vmem:[%s2862 + $0x120] sm:$0xff]
        %v2900 = vld [vmem:[%s2862 + $0x128] sm:$0xff]
        %v2901 = vld [vmem:[%s2862 + $0x130] sm:$0xff]
        %v2902 = vld [vmem:[%s2862 + $0x138] sm:$0xff]
        %v2903 = vld [vmem:[%s2862 + $0x140] sm:$0xff]
        %v2904 = vld [vmem:[%s2862 + $0x148] sm:$0xff]
        %v2905 = vld [vmem:[%s2862 + $0x150] sm:$0xff]
        %v2906 = vld [vmem:[%s2862 + $0x158] sm:$0xff]
        %v2907 = vld [vmem:[%s2862 + $0x160] sm:$0xff]
        %v2908 = vld [vmem:[%s2862 + $0x168] sm:$0xff]
        %v2909 = vld [vmem:[%s2862 + $0x170] sm:$0xff]
        %v2910 = vld [vmem:[%s2862 + $0x178] sm:$0xff]
        %v2911 = vld [vmem:[%s2862 + $0x180] sm:$0xff]
        %v2912 = vld [vmem:[%s2862 + $0x188] sm:$0xff]
        %v2913 = vld [vmem:[%s2862 + $0x190] sm:$0xff]
        %v2914 = vld [vmem:[%s2862 + $0x198] sm:$0xff]
        %v2915 = vld [vmem:[%s2862 + $0x1a0] sm:$0xff]
        %v2916 = vld [vmem:[%s2862 + $0x1a8] sm:$0xff]
        %v2917 = vld [vmem:[%s2862 + $0x1b0] sm:$0xff]
        %v2918 = vld [vmem:[%s2862 + $0x1b8] sm:$0xff]
        %v2919 = vld [vmem:[%s2862 + $0x1c0] sm:$0xff]
        %v2920 = vld [vmem:[%s2862 + $0x1c8] sm:$0xff]
        %v2921 = vld [vmem:[%s2862 + $0x1d0] sm:$0xff]
        %v2922 = vld [vmem:[%s2862 + $0x1d8] sm:$0xff]
        %v2923 = vld [vmem:[%s2862 + $0x1e0] sm:$0xff]
        %v2924 = vld [vmem:[%s2862 + $0x1e8] sm:$0xff]
        %v2925 = vld [vmem:[%s2862 + $0x1f0] sm:$0xff]
        %v2926 = vld [vmem:[%s2862 + $0x1f8] sm:$0xff]
        %v2927 = vld [vmem:[%s2862 + $0x200] sm:$0xff]
        %v2928 = vld [vmem:[%s2862 + $0x208] sm:$0xff]
        %v2929 = vld [vmem:[%s2862 + $0x210] sm:$0xff]
        %v2930 = vld [vmem:[%s2862 + $0x218] sm:$0xff]
        %v2931 = vld [vmem:[%s2862 + $0x220] sm:$0xff]
        %v2932 = vld [vmem:[%s2862 + $0x228] sm:$0xff]
        %v2933 = vld [vmem:[%s2862 + $0x230] sm:$0xff]
        %v2934 = vld [vmem:[%s2862 + $0x238] sm:$0xff]
        %s2935 = scalar_lea.vmem %s3, 2
        %v2936 = vld [vmem:[%s2935] sm:$0x1]
        %v2938 = vlaneseq
        %v2939 = vshrl.u32 %v2938, 7
        %v2940 = vsub.s32 0, %v2939
        %v2941 = vrot.slane %v2936, %v2940
        %v2944 = vsel %vm555, %v2826, 0
        %v2947 = vsel %vm555, %v2831, 0
        %v2950 = vsel %vm555, %v2836, 0
        %v2953 = vsel %vm555, %v2841, 0
        %v2956 = vsel %vm555, %v2846, 0
        %v2959 = vsel %vm555, %v2851, 0
        %v2962 = vsel %vm555, %v2856, 0
        %v2965 = vsel %vm555, %v2861, 0
        %2967 = vmatprep.subr.mxu0 0.0
        %2968 = vmatpush1.msra.mxu0 %v2863
        %2969 = vmatprep.subr.mxu0 0.0
        %2970 = vmatpush1.msra.mxu0 %v2864
        %2971 = vmatprep.subr.mxu0 0.0
        %2972 = vmatpush1.msra.mxu0 %v2865
        %2973 = vmatprep.subr.mxu0 0.0
        %2974 = vmatpush1.msra.mxu0 %v2866
        %2975 = vmatprep.subr.mxu0 0.0
        %2976 = vmatpush1.msra.mxu0 %v2867
        %2977 = vmatprep.subr.mxu0 0.0
        %2978 = vmatpush1.msra.mxu0 %v2868
        %2979 = vmatprep.subr.mxu0 0.0
        %2980 = vmatpush1.msra.mxu0 %v2869
        %2981 = vmatprep.subr.mxu0 0.0
        %2982 = vmatpush1.msra.mxu0 %v2870
        %2983 = vmatprep.subr.mxu0 0.0
        %2984 = vmatpush1.msra.mxu0 %v2871
        %2985 = vmatprep.subr.mxu0 0.0
        %2986 = vmatpush1.msra.mxu0 %v2872
        %2987 = vmatprep.subr.mxu0 0.0
        %2988 = vmatpush1.msra.mxu0 %v2873
        %2989 = vmatprep.subr.mxu0 0.0
        %2990 = vmatpush1.msra.mxu0 %v2874
        %2991 = vmatprep.subr.mxu0 0.0
        %2992 = vmatpush1.msra.mxu0 %v2875
        %2993 = vmatprep.subr.mxu0 0.0
        %2994 = vmatpush1.msra.mxu0 %v2876
        %2995 = vmatprep.subr.mxu0 0.0
        %2996 = vmatpush1.msra.mxu0 %v2877
        %2997 = vmatprep.subr.mxu0 0.0
        %2998 = vmatpush1.msra.mxu0 %v2878
        %2999 = vmatprep.subr.mxu0 0.0
        %3000 = vmatpush1.msra.mxu0 %v2879
        %3001 = vmatprep.subr.mxu0 0.0
        %3002 = vmatpush1.msra.mxu0 %v2880
        %3003 = vmatprep.subr.mxu0 0.0
        %3004 = vmatpush1.msra.mxu0 %v2881
        %3005 = vmatprep.subr.mxu0 0.0
        %3006 = vmatpush1.msra.mxu0 %v2882
        %3007 = vmatprep.subr.mxu0 0.0
        %3008 = vmatpush1.msra.mxu0 %v2883
        %3009 = vmatprep.subr.mxu0 0.0
        %3010 = vmatpush1.msra.mxu0 %v2884
        %3011 = vmatprep.subr.mxu0 0.0
        %3012 = vmatpush1.msra.mxu0 %v2885
        %3013 = vmatprep.subr.mxu0 0.0
        %3014 = vmatpush1.msra.mxu0 %v2886
        %3015 = vmatprep.subr.mxu0 0.0
        %3016 = vmatpush1.msra.mxu0 %v2887
        %3017 = vmatprep.subr.mxu0 0.0
        %3018 = vmatpush1.msra.mxu0 %v2888
        %3019 = vmatprep.subr.mxu0 0.0
        %3020 = vmatpush1.msra.mxu0 %v2889
        %3021 = vmatprep.subr.mxu0 0.0
        %3022 = vmatpush1.msra.mxu0 %v2890
        %3023 = vmatprep.subr.mxu0 0.0
        %3024 = vmatpush1.msra.mxu0 %v2891
        %3025 = vmatprep.subr.mxu0 0.0
        %3026 = vmatpush1.msra.mxu0 %v2892
        %3027 = vmatprep.subr.mxu0 0.0
        %3028 = vmatpush1.msra.mxu0 %v2893
        %3029 = vmatprep.subr.mxu0 0.0
        %3030 = vmatpush1.msra.mxu0 %v2894
        %3031 = vmatprep.mubr.f32.mxu0 %v2823
        %3032 = vmatmul.mubr.f32.gmra.mrb[0].mxu0 %v2822
        %v3033 = vpop.f32.mrb[0].mxu0
        %v3034 = vadd.f32 %v2941, %v3033
        %v3035 = vpop.f32.mrb[0].mxu0
        %3036 = vmatprep.mubr.f32.mxu0 %v2828
        %3037 = vmatmul.mubr.f32.gmra.mrb[0].mxu0 %v2827
        %v3038 = vpop.f32.mrb[0].mxu0
        %v3039 = vadd.f32 %v2941, %v3038
        %v3040 = vpop.f32.mrb[0].mxu0
        %3041 = vmatprep.mubr.f32.mxu0 %v2833
        %3042 = vmatmul.mubr.f32.gmra.mrb[0].mxu0 %v2832
        %v3043 = vpop.f32.mrb[0].mxu0
        %v3044 = vadd.f32 %v2941, %v3043
        %v3045 = vpop.f32.mrb[0].mxu0
        %3046 = vmatprep.mubr.f32.mxu0 %v2838
        %3047 = vmatmul.mubr.f32.gmra.mrb[0].mxu0 %v2837
        %v3048 = vpop.f32.mrb[0].mxu0
        %v3049 = vadd.f32 %v2941, %v3048
        %v3050 = vpop.f32.mrb[0].mxu0
        %3051 = vmatprep.mubr.f32.mxu0 %v2843
        %3052 = vmatmul.mubr.f32.gmra.mrb[0].mxu0 %v2842
        %v3053 = vpop.f32.mrb[0].mxu0
        %v3054 = vadd.f32 %v2941, %v3053
        %v3055 = vpop.f32.mrb[0].mxu0
        %3056 = vmatprep.mubr.f32.mxu0 %v2848
        %3057 = vmatmul.mubr.f32.gmra.mrb[0].mxu0 %v2847
        %v3058 = vpop.f32.mrb[0].mxu0
        %v3059 = vadd.f32 %v2941, %v3058
        %v3060 = vpop.f32.mrb[0].mxu0
        %3061 = vmatprep.mubr.f32.mxu0 %v2853
        %3062 = vmatmul.mubr.f32.gmra.mrb[0].mxu0 %v2852
        %v3063 = vpop.f32.mrb[0].mxu0
        %v3064 = vadd.f32 %v2941, %v3063
        %v3065 = vpop.f32.mrb[0].mxu0
        %3066 = vmatprep.mubr.f32.mxu0 %v2858
        %3067 = vmatmul.mubr.f32.gmra.mrb[0].mxu0 %v2857
        %v3068 = vpop.f32.mrb[0].mxu0
        %v3069 = vadd.f32 %v2941, %v3068
        %v3070 = vpop.f32.mrb[0].mxu0
        %3071 = vdwg.mxu0
        %3072 = vmatprep.subr.mxu0 0.0
        %3073 = vmatpush1.msra.mxu0 %v2895
        %3074 = vmatprep.subr.mxu0 0.0
        %3075 = vmatpush1.msra.mxu0 %v2896
        %3076 = vmatprep.subr.mxu0 0.0
        %3077 = vmatpush1.msra.mxu0 %v2897
        %3078 = vmatprep.subr.mxu0 0.0
        %3079 = vmatpush1.msra.mxu0 %v2898
        %3080 = vmatprep.subr.mxu0 0.0
        %3081 = vmatpush1.msra.mxu0 %v2899
        %3082 = vmatprep.subr.mxu0 0.0
        %3083 = vmatpush1.msra.mxu0 %v2900
        %3084 = vmatprep.subr.mxu0 0.0
        %3085 = vmatpush1.msra.mxu0 %v2901
        %3086 = vmatprep.subr.mxu0 0.0
        %3087 = vmatpush1.msra.mxu0 %v2902
        %3088 = vmatprep.subr.mxu0 0.0
        %3089 = vmatpush1.msra.mxu0 %v2903
        %3090 = vmatprep.subr.mxu0 0.0
        %3091 = vmatpush1.msra.mxu0 %v2904
        %3092 = vmatprep.subr.mxu0 0.0
        %3093 = vmatpush1.msra.mxu0 %v2905
        %3094 = vmatprep.subr.mxu0 0.0
        %3095 = vmatpush1.msra.mxu0 %v2906
        %3096 = vmatprep.subr.mxu0 0.0
        %3097 = vmatpush1.msra.mxu0 %v2907
        %3098 = vmatprep.subr.mxu0 0.0
        %3099 = vmatpush1.msra.mxu0 %v2908
        %3100 = vmatprep.subr.mxu0 0.0
        %3101 = vmatpush1.msra.mxu0 %v2909
        %3102 = vmatprep.subr.mxu0 0.0
        %3103 = vmatpush1.msra.mxu0 %v2910
        %3104 = vmatprep.subr.mxu0 0.0
        %3105 = vmatpush1.msra.mxu0 %v2911
        %3106 = vmatprep.subr.mxu0 0.0
        %3107 = vmatpush1.msra.mxu0 %v2912
        %3108 = vmatprep.subr.mxu0 0.0
        %3109 = vmatpush1.msra.mxu0 %v2913
        %3110 = vmatprep.subr.mxu0 0.0
        %3111 = vmatpush1.msra.mxu0 %v2914
        %3112 = vmatprep.subr.mxu0 0.0
        %3113 = vmatpush1.msra.mxu0 %v2915
        %3114 = vmatprep.subr.mxu0 0.0
        %3115 = vmatpush1.msra.mxu0 %v2916
        %3116 = vmatprep.subr.mxu0 0.0
        %3117 = vmatpush1.msra.mxu0 %v2917
        %3118 = vmatprep.subr.mxu0 0.0
        %3119 = vmatpush1.msra.mxu0 %v2918
        %3120 = vmatprep.subr.mxu0 0.0
        %3121 = vmatpush1.msra.mxu0 %v2919
        %3122 = vmatprep.subr.mxu0 0.0
        %3123 = vmatpush1.msra.mxu0 %v2920
        %3124 = vmatprep.subr.mxu0 0.0
        %3125 = vmatpush1.msra.mxu0 %v2921
        %3126 = vmatprep.subr.mxu0 0.0
        %3127 = vmatpush1.msra.mxu0 %v2922
        %3128 = vmatprep.subr.mxu0 0.0
        %3129 = vmatpush1.msra.mxu0 %v2923
        %3130 = vmatprep.subr.mxu0 0.0
        %3131 = vmatpush1.msra.mxu0 %v2924
        %3132 = vmatprep.subr.mxu0 0.0
        %3133 = vmatpush1.msra.mxu0 %v2925
        %3134 = vmatprep.subr.mxu0 0.0
        %3135 = vmatpush1.msra.mxu0 %v2926
        %3136 = vmatprep.mubr.f32.mxu0 %v2825
        %3137 = vmatmul.mubr.f32.gmra.mrb[0].mxu0 %v2824
        %v3138 = vpop.f32.mrb[0].mxu0
        %v3139 = vadd.f32 %v3034, %v3138
        %v3140 = vpop.f32.mrb[0].mxu0
        %3141 = vmatprep.mubr.f32.mxu0 %v2830
        %3142 = vmatmul.mubr.f32.gmra.mrb[0].mxu0 %v2829
        %v3143 = vpop.f32.mrb[0].mxu0
        %v3144 = vadd.f32 %v3039, %v3143
        %v3145 = vpop.f32.mrb[0].mxu0
        %3146 = vmatprep.mubr.f32.mxu0 %v2835
        %3147 = vmatmul.mubr.f32.gmra.mrb[0].mxu0 %v2834
        %v3148 = vpop.f32.mrb[0].mxu0
        %v3149 = vadd.f32 %v3044, %v3148
        %v3150 = vpop.f32.mrb[0].mxu0
        %3151 = vmatprep.mubr.f32.mxu0 %v2840
        %3152 = vmatmul.mubr.f32.gmra.mrb[0].mxu0 %v2839
        %v3153 = vpop.f32.mrb[0].mxu0
        %v3154 = vadd.f32 %v3049, %v3153
        %v3155 = vpop.f32.mrb[0].mxu0
        %3156 = vmatprep.mubr.f32.mxu0 %v2845
        %3157 = vmatmul.mubr.f32.gmra.mrb[0].mxu0 %v2844
        %v3158 = vpop.f32.mrb[0].mxu0
        %v3159 = vadd.f32 %v3054, %v3158
        %v3160 = vpop.f32.mrb[0].mxu0
        %3161 = vmatprep.mubr.f32.mxu0 %v2850
        %3162 = vmatmul.mubr.f32.gmra.mrb[0].mxu0 %v2849
        %v3163 = vpop.f32.mrb[0].mxu0
        %v3164 = vadd.f32 %v3059, %v3163
        %v3165 = vpop.f32.mrb[0].mxu0
        %3166 = vmatprep.mubr.f32.mxu0 %v2855
        %3167 = vmatmul.mubr.f32.gmra.mrb[0].mxu0 %v2854
        %v3168 = vpop.f32.mrb[0].mxu0
        %v3169 = vadd.f32 %v3064, %v3168
        %v3170 = vpop.f32.mrb[0].mxu0
        %3171 = vmatprep.mubr.f32.mxu0 %v2860
        %3172 = vmatmul.mubr.f32.gmra.mrb[0].mxu0 %v2859
        %v3173 = vpop.f32.mrb[0].mxu0
        %v3174 = vadd.f32 %v3069, %v3173
        %v3175 = vpop.f32.mrb[0].mxu0
        %3176 = vdwg.mxu0
        %3177 = vmatprep.subr.mxu0 0.0
        %3178 = vmatpush1.msra.mxu0 %v2927
        %3179 = vmatprep.subr.mxu0 0.0
        %3180 = vmatpush1.msra.mxu0 %v2928
        %3181 = vmatprep.subr.mxu0 0.0
        %3182 = vmatpush1.msra.mxu0 %v2929
        %3183 = vmatprep.subr.mxu0 0.0
        %3184 = vmatpush1.msra.mxu0 %v2930
        %3185 = vmatprep.subr.mxu0 0.0
        %3186 = vmatpush1.msra.mxu0 %v2931
        %3187 = vmatprep.subr.mxu0 0.0
        %3188 = vmatpush1.msra.mxu0 %v2932
        %3189 = vmatprep.subr.mxu0 0.0
        %3190 = vmatpush1.msra.mxu0 %v2933
        %3191 = vmatprep.subr.mxu0 0.0
        %3192 = vmatpush1.msra.mxu0 %v2934
        %3193 = vmatprep.subr.mxu0 0.0
        %3194 = vmatpush1.msra.mxu0 0.0
        %3195 = vmatprep.subr.mxu0 0.0
        %3196 = vmatpush1.msra.mxu0 0.0
        %3197 = vmatprep.subr.mxu0 0.0
        %3198 = vmatpush1.msra.mxu0 0.0
        %3199 = vmatprep.subr.mxu0 0.0
        %3200 = vmatpush1.msra.mxu0 0.0
        %3201 = vmatprep.subr.mxu0 0.0
        %3202 = vmatpush1.msra.mxu0 0.0
        %3203 = vmatprep.subr.mxu0 0.0
        %3204 = vmatpush1.msra.mxu0 0.0
        %3205 = vmatprep.subr.mxu0 0.0
        %3206 = vmatpush1.msra.mxu0 0.0
        %3207 = vmatprep.subr.mxu0 0.0
        %3208 = vmatpush1.msra.mxu0 0.0
        %3209 = vmatprep.subr.mxu0 0.0
        %3210 = vmatpush1.msra.mxu0 0.0
        %3211 = vmatprep.subr.mxu0 0.0
        %3212 = vmatpush1.msra.mxu0 0.0
        %3213 = vmatprep.subr.mxu0 0.0
        %3214 = vmatpush1.msra.mxu0 0.0
        %3215 = vmatprep.subr.mxu0 0.0
        %3216 = vmatpush1.msra.mxu0 0.0
        %3217 = vmatprep.subr.mxu0 0.0
        %3218 = vmatpush1.msra.mxu0 0.0
        %3219 = vmatprep.subr.mxu0 0.0
        %3220 = vmatpush1.msra.mxu0 0.0
        %3221 = vmatprep.subr.mxu0 0.0
        %3222 = vmatpush1.msra.mxu0 0.0
        %3223 = vmatprep.subr.mxu0 0.0
        %3224 = vmatpush1.msra.mxu0 0.0
        %3225 = vmatprep.subr.mxu0 0.0
        %3226 = vmatpush1.msra.mxu0 0.0
        %3227 = vmatprep.subr.mxu0 0.0
        %3228 = vmatpush1.msra.mxu0 0.0
        %3229 = vmatprep.subr.mxu0 0.0
        %3230 = vmatpush1.msra.mxu0 0.0
        %3231 = vmatprep.subr.mxu0 0.0
        %3232 = vmatpush1.msra.mxu0 0.0
        %3233 = vmatprep.subr.mxu0 0.0
        %3234 = vmatpush1.msra.mxu0 0.0
        %3235 = vmatprep.subr.mxu0 0.0
        %3236 = vmatpush1.msra.mxu0 0.0
        %3237 = vmatprep.subr.mxu0 0.0
        %3238 = vmatpush1.msra.mxu0 0.0
        %3239 = vmatprep.subr.mxu0 0.0
        %3240 = vmatpush1.msra.mxu0 0.0
        %3241 = vmatprep.mubr.f32.mxu0 0.0
        %3242 = vmatmul.mubr.f32.gmra.mrb[0].mxu0 %v2944
        %v3243 = vpop.f32.mrb[0].mxu0
        %v3244 = vadd.f32 %v3139, %v3243
        %v3245 = vpop.f32.mrb[0].mxu0
        %3246 = vmatprep.mubr.f32.mxu0 0.0
        %3247 = vmatmul.mubr.f32.gmra.mrb[0].mxu0 %v2947
        %v3248 = vpop.f32.mrb[0].mxu0
        %v3249 = vadd.f32 %v3144, %v3248
        %v3250 = vpop.f32.mrb[0].mxu0
        %3251 = vmatprep.mubr.f32.mxu0 0.0
        %3252 = vmatmul.mubr.f32.gmra.mrb[0].mxu0 %v2950
        %v3253 = vpop.f32.mrb[0].mxu0
        %v3254 = vadd.f32 %v3149, %v3253
        %v3255 = vpop.f32.mrb[0].mxu0
        %3256 = vmatprep.mubr.f32.mxu0 0.0
        %3257 = vmatmul.mubr.f32.gmra.mrb[0].mxu0 %v2953
        %v3258 = vpop.f32.mrb[0].mxu0
        %v3259 = vadd.f32 %v3154, %v3258
        %v3260 = vpop.f32.mrb[0].mxu0
        %3261 = vmatprep.mubr.f32.mxu0 0.0
        %3262 = vmatmul.mubr.f32.gmra.mrb[0].mxu0 %v2956
        %v3263 = vpop.f32.mrb[0].mxu0
        %v3264 = vadd.f32 %v3159, %v3263
        %v3265 = vpop.f32.mrb[0].mxu0
        %3266 = vmatprep.mubr.f32.mxu0 0.0
        %3267 = vmatmul.mubr.f32.gmra.mrb[0].mxu0 %v2959
        %v3268 = vpop.f32.mrb[0].mxu0
        %v3269 = vadd.f32 %v3164, %v3268
        %v3270 = vpop.f32.mrb[0].mxu0
        %3271 = vmatprep.mubr.f32.mxu0 0.0
        %3272 = vmatmul.mubr.f32.gmra.mrb[0].mxu0 %v2962
        %v3273 = vpop.f32.mrb[0].mxu0
        %v3274 = vadd.f32 %v3169, %v3273
        %v3275 = vpop.f32.mrb[0].mxu0
        %3276 = vmatprep.mubr.f32.mxu0 0.0
        %3277 = vmatmul.mubr.f32.gmra.mrb[0].mxu0 %v2965
        %v3278 = vpop.f32.mrb[0].mxu0
        %v3279 = vadd.f32 %v3174, %v3278
        %v3280 = vpop.f32.mrb[0].mxu0
        %3281 = vdwg.mxu0
        %v3282 = vmax.f32 %v3244, 0.0
        %v3283 = vmax.f32 %v3249, 0.0
        %v3284 = vmax.f32 %v3254, 0.0
        %v3285 = vmax.f32 %v3259, 0.0
        %v3286 = vmax.f32 %v3264, 0.0
        %v3287 = vmax.f32 %v3269, 0.0
        %v3288 = vmax.f32 %v3274, 0.0
        %v3289 = vmax.f32 %v3279, 0.0
        %3290 = vst.msk [vmem:[#allocation4 + $0x10] sm:$0xff] %vm555, %v3282
        %3291 = vst.msk [vmem:[#allocation4 + $0x18] sm:$0xff] %vm555, %v3283
        %3292 = vst.msk [vmem:[#allocation4 + $0x20] sm:$0xff] %vm555, %v3284
        %3293 = vst.msk [vmem:[#allocation4 + $0x28] sm:$0xff] %vm555, %v3285
        %3294 = vst.msk [vmem:[#allocation4 + $0x30] sm:$0xff] %vm555, %v3286
        %3295 = vst.msk [vmem:[#allocation4 + $0x38] sm:$0xff] %vm555, %v3287
        %3296 = vst.msk [vmem:[#allocation4 + $0x40] sm:$0xff] %vm555, %v3288
        %3297 = vst.msk [vmem:[#allocation4 + $0x48] sm:$0xff] %vm555, %v3289
        %v3298 = vld [vmem:[#allocation4 + $0x7] sm:$0xff]
        %v3299 = vld [vmem:[#allocation4 + $0xf] sm:$0xff]
        %v3300 = vld [vmem:[#allocation4 + $0x17] sm:$0xff]
        %v3301 = vld [vmem:[#allocation4 + $0x1f] sm:$0xff]
        %v3302 = vld [vmem:[#allocation4 + $0x27] sm:$0xff]
        %v3303 = vld [vmem:[#allocation4 + $0x2f] sm:$0xff]
        %v3304 = vld [vmem:[#allocation4 + $0x37] sm:$0xff]
        %v3305 = vld [vmem:[#allocation4 + $0x3f] sm:$0xff]
        %v3306 = vsel %vm887, %v3298, 0.0
        %v3307 = vsel %vm888, %v3299, 0.0
        %v3308 = vsel %vm889, %v3300, 0.0
        %v3309 = vsel %vm890, %v3301, 0.0
        %v3310 = vsel %vm891, %v3302, 0.0
        %v3311 = vsel %vm892, %v3303, 0.0
        %v3312 = vsel %vm893, %v3304, 0.0
        %v3313 = vsel %vm894, %v3305, 0.0
        %3314 = vst.msk [vmem:[#allocation5] sm:$0xff] %vm555, %v3306
        %3315 = vst.msk [vmem:[#allocation5 + $0x28] sm:$0xff] %vm555, %v3307
        %3316 = vst.msk [vmem:[#allocation5 + $0x50] sm:$0xff] %vm555, %v3308
        %3317 = vst.msk [vmem:[#allocation5 + $0x78] sm:$0xff] %vm555, %v3309
        %3318 = vst.msk [vmem:[#allocation5 + $0xa0] sm:$0xff] %vm555, %v3310
        %3319 = vst.msk [vmem:[#allocation5 + $0xc8] sm:$0xff] %vm555, %v3311
        %3320 = vst.msk [vmem:[#allocation5 + $0xf0] sm:$0xff] %vm555, %v3312
        %3321 = vst.msk [vmem:[#allocation5 + $0x118] sm:$0xff] %vm555, %v3313
        %v3322 = vld [vmem:[#allocation4 + $0x8] sm:$0xff]
        %v3323 = vld [vmem:[#allocation4 + $0x10] sm:$0xff]
        %v3324 = vld [vmem:[#allocation4 + $0x18] sm:$0xff]
        %v3325 = vld [vmem:[#allocation4 + $0x20] sm:$0xff]
        %v3326 = vld [vmem:[#allocation4 + $0x28] sm:$0xff]
        %v3327 = vld [vmem:[#allocation4 + $0x30] sm:$0xff]
        %v3328 = vld [vmem:[#allocation4 + $0x38] sm:$0xff]
        %v3329 = vld [vmem:[#allocation4 + $0x40] sm:$0xff]
        %3338 = vrot.lane.b32.xlu0 %v3322, 64
        %v3339 = vpop.permute.xlu0 %3338
        %3340 = vrot.lane.b32.xlu0 %v3323, 64
        %v3341 = vpop.permute.xlu0 %3340
        %3342 = vrot.lane.b32.xlu0 %v3324, 64
        %v3343 = vpop.permute.xlu0 %3342
        %3344 = vrot.lane.b32.xlu0 %v3325, 64
        %v3345 = vpop.permute.xlu0 %3344
        %3346 = vrot.lane.b32.xlu0 %v3326, 64
        %v3347 = vpop.permute.xlu0 %3346
        %3348 = vrot.lane.b32.xlu0 %v3327, 64
        %v3349 = vpop.permute.xlu0 %3348
        %3350 = vrot.lane.b32.xlu0 %v3328, 64
        %v3351 = vpop.permute.xlu0 %3350
        %3352 = vrot.lane.b32.xlu0 %v3329, 64
        %v3353 = vpop.permute.xlu0 %3352
        %3362 = vst.msk [vmem:[#allocation5] sm:$0xff] %vm951, %v3339
        %3363 = vst.msk [vmem:[#allocation5 + $0x28] sm:$0xff] %vm951, %v3341
        %3364 = vst.msk [vmem:[#allocation5 + $0x50] sm:$0xff] %vm951, %v3343
        %3365 = vst.msk [vmem:[#allocation5 + $0x78] sm:$0xff] %vm951, %v3345
        %3366 = vst.msk [vmem:[#allocation5 + $0xa0] sm:$0xff] %vm951, %v3347
        %3367 = vst.msk [vmem:[#allocation5 + $0xc8] sm:$0xff] %vm951, %v3349
        %3368 = vst.msk [vmem:[#allocation5 + $0xf0] sm:$0xff] %vm951, %v3351
        %3369 = vst.msk [vmem:[#allocation5 + $0x118] sm:$0xff] %vm951, %v3353
        %v3370 = vld [vmem:[#allocation4 + $0x9] sm:$0xff]
        %v3371 = vld [vmem:[#allocation4 + $0x11] sm:$0xff]
        %v3372 = vld [vmem:[#allocation4 + $0x19] sm:$0xff]
        %v3373 = vld [vmem:[#allocation4 + $0x21] sm:$0xff]
        %v3374 = vld [vmem:[#allocation4 + $0x29] sm:$0xff]
        %v3375 = vld [vmem:[#allocation4 + $0x31] sm:$0xff]
        %v3376 = vld [vmem:[#allocation4 + $0x39] sm:$0xff]
        %v3377 = vld [vmem:[#allocation4 + $0x41] sm:$0xff]
        %v3378 = vsel %vm976, %v3370, 0.0
        %v3379 = vsel %vm977, %v3371, 0.0
        %v3380 = vsel %vm978, %v3372, 0.0
        %v3381 = vsel %vm979, %v3373, 0.0
        %v3382 = vsel %vm980, %v3374, 0.0
        %v3383 = vsel %vm981, %v3375, 0.0
        %v3384 = vsel %vm982, %v3376, 0.0
        %v3385 = vsel %vm983, %v3377, 0.0
        %3386 = vst.msk [vmem:[#allocation5 + $0x8] sm:$0xff] %vm555, %v3378
        %3387 = vst.msk [vmem:[#allocation5 + $0x30] sm:$0xff] %vm555, %v3379
        %3388 = vst.msk [vmem:[#allocation5 + $0x58] sm:$0xff] %vm555, %v3380
        %3389 = vst.msk [vmem:[#allocation5 + $0x80] sm:$0xff] %vm555, %v3381
        %3390 = vst.msk [vmem:[#allocation5 + $0xa8] sm:$0xff] %vm555, %v3382
        %3391 = vst.msk [vmem:[#allocation5 + $0xd0] sm:$0xff] %vm555, %v3383
        %3392 = vst.msk [vmem:[#allocation5 + $0xf8] sm:$0xff] %vm555, %v3384
        %3393 = vst.msk [vmem:[#allocation5 + $0x120] sm:$0xff] %vm555, %v3385
        %v3394 = vld [vmem:[#allocation4 + $0xf] sm:$0xff]
        %v3395 = vld [vmem:[#allocation4 + $0x17] sm:$0xff]
        %v3396 = vld [vmem:[#allocation4 + $0x1f] sm:$0xff]
        %v3397 = vld [vmem:[#allocation4 + $0x27] sm:$0xff]
        %v3398 = vld [vmem:[#allocation4 + $0x2f] sm:$0xff]
        %v3399 = vld [vmem:[#allocation4 + $0x37] sm:$0xff]
        %v3400 = vld [vmem:[#allocation4 + $0x3f] sm:$0xff]
        %v3401 = vld [vmem:[#allocation4 + $0x47] sm:$0xff]
        %v3402 = vsel %vm887, %v3394, 0.0
        %v3403 = vsel %vm888, %v3395, 0.0
        %v3404 = vsel %vm889, %v3396, 0.0
        %v3405 = vsel %vm890, %v3397, 0.0
        %v3406 = vsel %vm891, %v3398, 0.0
        %v3407 = vsel %vm892, %v3399, 0.0
        %v3408 = vsel %vm893, %v3400, 0.0
        %v3409 = vsel %vm894, %v3401, 0.0
        %3418 = vrot.lane.b32.xlu0 %v3402, 64
        %v3419 = vpop.permute.xlu0 %3418
        %3420 = vrot.lane.b32.xlu0 %v3403, 64
        %v3421 = vpop.permute.xlu0 %3420
        %3422 = vrot.lane.b32.xlu0 %v3404, 64
        %v3423 = vpop.permute.xlu0 %3422
        %3424 = vrot.lane.b32.xlu0 %v3405, 64
        %v3425 = vpop.permute.xlu0 %3424
        %3426 = vrot.lane.b32.xlu0 %v3406, 64
        %v3427 = vpop.permute.xlu0 %3426
        %3428 = vrot.lane.b32.xlu0 %v3407, 64
        %v3429 = vpop.permute.xlu0 %3428
        %3430 = vrot.lane.b32.xlu0 %v3408, 64
        %v3431 = vpop.permute.xlu0 %3430
        %3432 = vrot.lane.b32.xlu0 %v3409, 64
        %v3433 = vpop.permute.xlu0 %3432
        %3442 = vst.msk [vmem:[#allocation5 + $0x8] sm:$0xff] %vm951, %v3419
        %3443 = vst.msk [vmem:[#allocation5 + $0x30] sm:$0xff] %vm951, %v3421
        %3444 = vst.msk [vmem:[#allocation5 + $0x58] sm:$0xff] %vm951, %v3423
        %3445 = vst.msk [vmem:[#allocation5 + $0x80] sm:$0xff] %vm951, %v3425
        %3446 = vst.msk [vmem:[#allocation5 + $0xa8] sm:$0xff] %vm951, %v3427
        %3447 = vst.msk [vmem:[#allocation5 + $0xd0] sm:$0xff] %vm951, %v3429
        %3448 = vst.msk [vmem:[#allocation5 + $0xf8] sm:$0xff] %vm951, %v3431
        %3449 = vst.msk [vmem:[#allocation5 + $0x120] sm:$0xff] %vm951, %v3433
        %v3450 = vld [vmem:[#allocation4 + $0x10] sm:$0xff]
        %v3451 = vld [vmem:[#allocation4 + $0x18] sm:$0xff]
        %v3452 = vld [vmem:[#allocation4 + $0x20] sm:$0xff]
        %v3453 = vld [vmem:[#allocation4 + $0x28] sm:$0xff]
        %v3454 = vld [vmem:[#allocation4 + $0x30] sm:$0xff]
        %v3455 = vld [vmem:[#allocation4 + $0x38] sm:$0xff]
        %v3456 = vld [vmem:[#allocation4 + $0x40] sm:$0xff]
        %v3457 = vld [vmem:[#allocation4 + $0x48] sm:$0xff]
        %3458 = vst.msk [vmem:[#allocation5 + $0x10] sm:$0xff] %vm555, %v3450
        %3459 = vst.msk [vmem:[#allocation5 + $0x38] sm:$0xff] %vm555, %v3451
        %3460 = vst.msk [vmem:[#allocation5 + $0x60] sm:$0xff] %vm555, %v3452
        %3461 = vst.msk [vmem:[#allocation5 + $0x88] sm:$0xff] %vm555, %v3453
        %3462 = vst.msk [vmem:[#allocation5 + $0xb0] sm:$0xff] %vm555, %v3454
        %3463 = vst.msk [vmem:[#allocation5 + $0xd8] sm:$0xff] %vm555, %v3455
        %3464 = vst.msk [vmem:[#allocation5 + $0x100] sm:$0xff] %vm555, %v3456
        %3465 = vst.msk [vmem:[#allocation5 + $0x128] sm:$0xff] %vm555, %v3457
        %v3466 = vld [vmem:[#allocation4 + $0x11] sm:$0xff]
        %v3467 = vld [vmem:[#allocation4 + $0x19] sm:$0xff]
        %v3468 = vld [vmem:[#allocation4 + $0x21] sm:$0xff]
        %v3469 = vld [vmem:[#allocation4 + $0x29] sm:$0xff]
        %v3470 = vld [vmem:[#allocation4 + $0x31] sm:$0xff]
        %v3471 = vld [vmem:[#allocation4 + $0x39] sm:$0xff]
        %v3472 = vld [vmem:[#allocation4 + $0x41] sm:$0xff]
        %v3473 = vld [vmem:[#allocation4 + $0x49] sm:$0xff]
        %v3474 = vsel %vm976, %v3466, 0.0
        %v3475 = vsel %vm977, %v3467, 0.0
        %v3476 = vsel %vm978, %v3468, 0.0
        %v3477 = vsel %vm979, %v3469, 0.0
        %v3478 = vsel %vm980, %v3470, 0.0
        %v3479 = vsel %vm981, %v3471, 0.0
        %v3480 = vsel %vm982, %v3472, 0.0
        %v3481 = vsel %vm983, %v3473, 0.0
        %3490 = vrot.lane.b32.xlu0 %v3474, 64
        %v3491 = vpop.permute.xlu0 %3490
        %3492 = vrot.lane.b32.xlu0 %v3475, 64
        %v3493 = vpop.permute.xlu0 %3492
        %3494 = vrot.lane.b32.xlu0 %v3476, 64
        %v3495 = vpop.permute.xlu0 %3494
        %3496 = vrot.lane.b32.xlu0 %v3477, 64
        %v3497 = vpop.permute.xlu0 %3496
        %3498 = vrot.lane.b32.xlu0 %v3478, 64
        %v3499 = vpop.permute.xlu0 %3498
        %3500 = vrot.lane.b32.xlu0 %v3479, 64
        %v3501 = vpop.permute.xlu0 %3500
        %3502 = vrot.lane.b32.xlu0 %v3480, 64
        %v3503 = vpop.permute.xlu0 %3502
        %3504 = vrot.lane.b32.xlu0 %v3481, 64
        %v3505 = vpop.permute.xlu0 %3504
        %3514 = vst.msk [vmem:[#allocation5 + $0x10] sm:$0xff] %vm951, %v3491
        %3515 = vst.msk [vmem:[#allocation5 + $0x38] sm:$0xff] %vm951, %v3493
        %3516 = vst.msk [vmem:[#allocation5 + $0x60] sm:$0xff] %vm951, %v3495
        %3517 = vst.msk [vmem:[#allocation5 + $0x88] sm:$0xff] %vm951, %v3497
        %3518 = vst.msk [vmem:[#allocation5 + $0xb0] sm:$0xff] %vm951, %v3499
        %3519 = vst.msk [vmem:[#allocation5 + $0xd8] sm:$0xff] %vm951, %v3501
        %3520 = vst.msk [vmem:[#allocation5 + $0x100] sm:$0xff] %vm951, %v3503
        %3521 = vst.msk [vmem:[#allocation5 + $0x128] sm:$0xff] %vm951, %v3505
        %v3522 = vld [vmem:[#allocation4 + $0x17] sm:$0xff]
        %v3523 = vld [vmem:[#allocation4 + $0x1f] sm:$0xff]
        %v3524 = vld [vmem:[#allocation4 + $0x27] sm:$0xff]
        %v3525 = vld [vmem:[#allocation4 + $0x2f] sm:$0xff]
        %v3526 = vld [vmem:[#allocation4 + $0x37] sm:$0xff]
        %v3527 = vld [vmem:[#allocation4 + $0x3f] sm:$0xff]
        %v3528 = vld [vmem:[#allocation4 + $0x47] sm:$0xff]
        %v3529 = vld [vmem:[#allocation4 + $0x4f] sm:$0xff]
        %v3530 = vsel %vm887, %v3522, 0.0
        %v3531 = vsel %vm888, %v3523, 0.0
        %v3532 = vsel %vm889, %v3524, 0.0
        %v3533 = vsel %vm890, %v3525, 0.0
        %v3534 = vsel %vm891, %v3526, 0.0
        %v3535 = vsel %vm892, %v3527, 0.0
        %v3536 = vsel %vm893, %v3528, 0.0
        %v3537 = vsel %vm894, %v3529, 0.0
        %3538 = vst.msk [vmem:[#allocation5 + $0x18] sm:$0xff] %vm555, %v3530
        %3539 = vst.msk [vmem:[#allocation5 + $0x40] sm:$0xff] %vm555, %v3531
        %3540 = vst.msk [vmem:[#allocation5 + $0x68] sm:$0xff] %vm555, %v3532
        %3541 = vst.msk [vmem:[#allocation5 + $0x90] sm:$0xff] %vm555, %v3533
        %3542 = vst.msk [vmem:[#allocation5 + $0xb8] sm:$0xff] %vm555, %v3534
        %3543 = vst.msk [vmem:[#allocation5 + $0xe0] sm:$0xff] %vm555, %v3535
        %3544 = vst.msk [vmem:[#allocation5 + $0x108] sm:$0xff] %vm555, %v3536
        %3545 = vst.msk [vmem:[#allocation5 + $0x130] sm:$0xff] %vm555, %v3537
        %v3546 = vld [vmem:[#allocation4 + $0x18] sm:$0xff]
        %v3547 = vld [vmem:[#allocation4 + $0x20] sm:$0xff]
        %v3548 = vld [vmem:[#allocation4 + $0x28] sm:$0xff]
        %v3549 = vld [vmem:[#allocation4 + $0x30] sm:$0xff]
        %v3550 = vld [vmem:[#allocation4 + $0x38] sm:$0xff]
        %v3551 = vld [vmem:[#allocation4 + $0x40] sm:$0xff]
        %v3552 = vld [vmem:[#allocation4 + $0x48] sm:$0xff]
        %v3553 = vld [vmem:[#allocation4 + $0x50] sm:$0xff]
        %3562 = vrot.lane.b32.xlu0 %v3546, 64
        %v3563 = vpop.permute.xlu0 %3562
        %3564 = vrot.lane.b32.xlu0 %v3547, 64
        %v3565 = vpop.permute.xlu0 %3564
        %3566 = vrot.lane.b32.xlu0 %v3548, 64
        %v3567 = vpop.permute.xlu0 %3566
        %3568 = vrot.lane.b32.xlu0 %v3549, 64
        %v3569 = vpop.permute.xlu0 %3568
        %3570 = vrot.lane.b32.xlu0 %v3550, 64
        %v3571 = vpop.permute.xlu0 %3570
        %3572 = vrot.lane.b32.xlu0 %v3551, 64
        %v3573 = vpop.permute.xlu0 %3572
        %3574 = vrot.lane.b32.xlu0 %v3552, 64
        %v3575 = vpop.permute.xlu0 %3574
        %3576 = vrot.lane.b32.xlu0 %v3553, 64
        %v3577 = vpop.permute.xlu0 %3576
        %3586 = vst.msk [vmem:[#allocation5 + $0x18] sm:$0xff] %vm951, %v3563
        %3587 = vst.msk [vmem:[#allocation5 + $0x40] sm:$0xff] %vm951, %v3565
        %3588 = vst.msk [vmem:[#allocation5 + $0x68] sm:$0xff] %vm951, %v3567
        %3589 = vst.msk [vmem:[#allocation5 + $0x90] sm:$0xff] %vm951, %v3569
        %3590 = vst.msk [vmem:[#allocation5 + $0xb8] sm:$0xff] %vm951, %v3571
        %3591 = vst.msk [vmem:[#allocation5 + $0xe0] sm:$0xff] %vm951, %v3573
        %3592 = vst.msk [vmem:[#allocation5 + $0x108] sm:$0xff] %vm951, %v3575
        %3593 = vst.msk [vmem:[#allocation5 + $0x130] sm:$0xff] %vm951, %v3577
        %v3594 = vld [vmem:[#allocation4 + $0x19] sm:$0xff]
        %v3595 = vld [vmem:[#allocation4 + $0x21] sm:$0xff]
        %v3596 = vld [vmem:[#allocation4 + $0x29] sm:$0xff]
        %v3597 = vld [vmem:[#allocation4 + $0x31] sm:$0xff]
        %v3598 = vld [vmem:[#allocation4 + $0x39] sm:$0xff]
        %v3599 = vld [vmem:[#allocation4 + $0x41] sm:$0xff]
        %v3600 = vld [vmem:[#allocation4 + $0x49] sm:$0xff]
        %v3601 = vld [vmem:[#allocation4 + $0x51] sm:$0xff]
        %v3602 = vsel %vm976, %v3594, 0.0
        %v3603 = vsel %vm977, %v3595, 0.0
        %v3604 = vsel %vm978, %v3596, 0.0
        %v3605 = vsel %vm979, %v3597, 0.0
        %v3606 = vsel %vm980, %v3598, 0.0
        %v3607 = vsel %vm981, %v3599, 0.0
        %v3608 = vsel %vm982, %v3600, 0.0
        %v3609 = vsel %vm983, %v3601, 0.0
        %3610 = vst.msk [vmem:[#allocation5 + $0x20] sm:$0xff] %vm555, %v3602
        %3611 = vst.msk [vmem:[#allocation5 + $0x48] sm:$0xff] %vm555, %v3603
        %3612 = vst.msk [vmem:[#allocation5 + $0x70] sm:$0xff] %vm555, %v3604
        %3613 = vst.msk [vmem:[#allocation5 + $0x98] sm:$0xff] %vm555, %v3605
        %3614 = vst.msk [vmem:[#allocation5 + $0xc0] sm:$0xff] %vm555, %v3606
        %3615 = vst.msk [vmem:[#allocation5 + $0xe8] sm:$0xff] %vm555, %v3607
        %3616 = vst.msk [vmem:[#allocation5 + $0x110] sm:$0xff] %vm555, %v3608
        %3617 = vst.msk [vmem:[#allocation5 + $0x138] sm:$0xff] %vm555, %v3609
        %v3618 = vld [vmem:[#allocation5] sm:$0xff]
        %v3619 = vld [vmem:[#allocation5 + $0x8] sm:$0xff]
        %v3620 = vld [vmem:[#allocation5 + $0x10] sm:$0xff]
        %v3621 = vld [vmem:[#allocation5 + $0x18] sm:$0xff]
        %v3622 = vld [vmem:[#allocation5 + $0x20] sm:$0xff]
        %v3623 = vld [vmem:[#allocation5 + $0x28] sm:$0xff]
        %v3624 = vld [vmem:[#allocation5 + $0x30] sm:$0xff]
        %v3625 = vld [vmem:[#allocation5 + $0x38] sm:$0xff]
        %v3626 = vld [vmem:[#allocation5 + $0x40] sm:$0xff]
        %v3627 = vld [vmem:[#allocation5 + $0x48] sm:$0xff]
        %v3628 = vld [vmem:[#allocation5 + $0x50] sm:$0xff]
        %v3629 = vld [vmem:[#allocation5 + $0x58] sm:$0xff]
        %v3630 = vld [vmem:[#allocation5 + $0x60] sm:$0xff]
        %v3631 = vld [vmem:[#allocation5 + $0x68] sm:$0xff]
        %v3632 = vld [vmem:[#allocation5 + $0x70] sm:$0xff]
        %v3633 = vld [vmem:[#allocation5 + $0x78] sm:$0xff]
        %v3634 = vld [vmem:[#allocation5 + $0x80] sm:$0xff]
        %v3635 = vld [vmem:[#allocation5 + $0x88] sm:$0xff]
        %v3636 = vld [vmem:[#allocation5 + $0x90] sm:$0xff]
        %v3637 = vld [vmem:[#allocation5 + $0x98] sm:$0xff]
        %v3638 = vld [vmem:[#allocation5 + $0xa0] sm:$0xff]
        %v3639 = vld [vmem:[#allocation5 + $0xa8] sm:$0xff]
        %v3640 = vld [vmem:[#allocation5 + $0xb0] sm:$0xff]
        %v3641 = vld [vmem:[#allocation5 + $0xb8] sm:$0xff]
        %v3642 = vld [vmem:[#allocation5 + $0xc0] sm:$0xff]
        %v3643 = vld [vmem:[#allocation5 + $0xc8] sm:$0xff]
        %v3644 = vld [vmem:[#allocation5 + $0xd0] sm:$0xff]
        %v3645 = vld [vmem:[#allocation5 + $0xd8] sm:$0xff]
        %v3646 = vld [vmem:[#allocation5 + $0xe0] sm:$0xff]
        %v3647 = vld [vmem:[#allocation5 + $0xe8] sm:$0xff]
        %v3648 = vld [vmem:[#allocation5 + $0xf0] sm:$0xff]
        %v3649 = vld [vmem:[#allocation5 + $0xf8] sm:$0xff]
        %v3650 = vld [vmem:[#allocation5 + $0x100] sm:$0xff]
        %v3651 = vld [vmem:[#allocation5 + $0x108] sm:$0xff]
        %v3652 = vld [vmem:[#allocation5 + $0x110] sm:$0xff]
        %v3653 = vld [vmem:[#allocation5 + $0x118] sm:$0xff]
        %v3654 = vld [vmem:[#allocation5 + $0x120] sm:$0xff]
        %v3655 = vld [vmem:[#allocation5 + $0x128] sm:$0xff]
        %v3656 = vld [vmem:[#allocation5 + $0x130] sm:$0xff]
        %v3657 = vld [vmem:[#allocation5 + $0x138] sm:$0xff]
        %s3658 = scalar_lea.vmem %s2, 1728
        %v3659 = vld [vmem:[%s3658] sm:$0xff]
        %v3660 = vld [vmem:[%s3658 + $0x8] sm:$0xff]
        %v3661 = vld [vmem:[%s3658 + $0x10] sm:$0xff]
        %v3662 = vld [vmem:[%s3658 + $0x18] sm:$0xff]
        %v3663 = vld [vmem:[%s3658 + $0x20] sm:$0xff]
        %v3664 = vld [vmem:[%s3658 + $0x28] sm:$0xff]
        %v3665 = vld [vmem:[%s3658 + $0x30] sm:$0xff]
        %v3666 = vld [vmem:[%s3658 + $0x38] sm:$0xff]
        %v3667 = vld [vmem:[%s3658 + $0x40] sm:$0xff]
        %v3668 = vld [vmem:[%s3658 + $0x48] sm:$0xff]
        %v3669 = vld [vmem:[%s3658 + $0x50] sm:$0xff]
        %v3670 = vld [vmem:[%s3658 + $0x58] sm:$0xff]
        %v3671 = vld [vmem:[%s3658 + $0x60] sm:$0xff]
        %v3672 = vld [vmem:[%s3658 + $0x68] sm:$0xff]
        %v3673 = vld [vmem:[%s3658 + $0x70] sm:$0xff]
        %v3674 = vld [vmem:[%s3658 + $0x78] sm:$0xff]
        %v3675 = vld [vmem:[%s3658 + $0x80] sm:$0xff]
        %v3676 = vld [vmem:[%s3658 + $0x88] sm:$0xff]
        %v3677 = vld [vmem:[%s3658 + $0x90] sm:$0xff]
        %v3678 = vld [vmem:[%s3658 + $0x98] sm:$0xff]
        %v3679 = vld [vmem:[%s3658 + $0xa0] sm:$0xff]
        %v3680 = vld [vmem:[%s3658 + $0xa8] sm:$0xff]
        %v3681 = vld [vmem:[%s3658 + $0xb0] sm:$0xff]
        %v3682 = vld [vmem:[%s3658 + $0xb8] sm:$0xff]
        %v3683 = vld [vmem:[%s3658 + $0xc0] sm:$0xff]
        %v3684 = vld [vmem:[%s3658 + $0xc8] sm:$0xff]
        %v3685 = vld [vmem:[%s3658 + $0xd0] sm:$0xff]
        %v3686 = vld [vmem:[%s3658 + $0xd8] sm:$0xff]
        %v3687 = vld [vmem:[%s3658 + $0xe0] sm:$0xff]
        %v3688 = vld [vmem:[%s3658 + $0xe8] sm:$0xff]
        %v3689 = vld [vmem:[%s3658 + $0xf0] sm:$0xff]
        %v3690 = vld [vmem:[%s3658 + $0xf8] sm:$0xff]
        %v3691 = vld [vmem:[%s3658 + $0x100] sm:$0xff]
        %v3692 = vld [vmem:[%s3658 + $0x108] sm:$0xff]
        %v3693 = vld [vmem:[%s3658 + $0x110] sm:$0xff]
        %v3694 = vld [vmem:[%s3658 + $0x118] sm:$0xff]
        %v3695 = vld [vmem:[%s3658 + $0x120] sm:$0xff]
        %v3696 = vld [vmem:[%s3658 + $0x128] sm:$0xff]
        %v3697 = vld [vmem:[%s3658 + $0x130] sm:$0xff]
        %v3698 = vld [vmem:[%s3658 + $0x138] sm:$0xff]
        %v3699 = vld [vmem:[%s3658 + $0x140] sm:$0xff]
        %v3700 = vld [vmem:[%s3658 + $0x148] sm:$0xff]
        %v3701 = vld [vmem:[%s3658 + $0x150] sm:$0xff]
        %v3702 = vld [vmem:[%s3658 + $0x158] sm:$0xff]
        %v3703 = vld [vmem:[%s3658 + $0x160] sm:$0xff]
        %v3704 = vld [vmem:[%s3658 + $0x168] sm:$0xff]
        %v3705 = vld [vmem:[%s3658 + $0x170] sm:$0xff]
        %v3706 = vld [vmem:[%s3658 + $0x178] sm:$0xff]
        %v3707 = vld [vmem:[%s3658 + $0x180] sm:$0xff]
        %v3708 = vld [vmem:[%s3658 + $0x188] sm:$0xff]
        %v3709 = vld [vmem:[%s3658 + $0x190] sm:$0xff]
        %v3710 = vld [vmem:[%s3658 + $0x198] sm:$0xff]
        %v3711 = vld [vmem:[%s3658 + $0x1a0] sm:$0xff]
        %v3712 = vld [vmem:[%s3658 + $0x1a8] sm:$0xff]
        %v3713 = vld [vmem:[%s3658 + $0x1b0] sm:$0xff]
        %v3714 = vld [vmem:[%s3658 + $0x1b8] sm:$0xff]
        %v3715 = vld [vmem:[%s3658 + $0x1c0] sm:$0xff]
        %v3716 = vld [vmem:[%s3658 + $0x1c8] sm:$0xff]
        %v3717 = vld [vmem:[%s3658 + $0x1d0] sm:$0xff]
        %v3718 = vld [vmem:[%s3658 + $0x1d8] sm:$0xff]
        %v3719 = vld [vmem:[%s3658 + $0x1e0] sm:$0xff]
        %v3720 = vld [vmem:[%s3658 + $0x1e8] sm:$0xff]
        %v3721 = vld [vmem:[%s3658 + $0x1f0] sm:$0xff]
        %v3722 = vld [vmem:[%s3658 + $0x1f8] sm:$0xff]
        %v3723 = vld [vmem:[%s3658 + $0x200] sm:$0xff]
        %v3724 = vld [vmem:[%s3658 + $0x208] sm:$0xff]
        %v3725 = vld [vmem:[%s3658 + $0x210] sm:$0xff]
        %v3726 = vld [vmem:[%s3658 + $0x218] sm:$0xff]
        %v3727 = vld [vmem:[%s3658 + $0x220] sm:$0xff]
        %v3728 = vld [vmem:[%s3658 + $0x228] sm:$0xff]
        %v3729 = vld [vmem:[%s3658 + $0x230] sm:$0xff]
        %v3730 = vld [vmem:[%s3658 + $0x238] sm:$0xff]
        %s3731 = scalar_lea.vmem %s3, 3
        %v3732 = vld [vmem:[%s3731] sm:$0x1]
        %v3734 = vlaneseq
        %v3735 = vshrl.u32 %v3734, 7
        %v3736 = vsub.s32 0, %v3735
        %v3737 = vrot.slane %v3732, %v3736
        %v3740 = vsel %vm555, %v3622, 0
        %v3743 = vsel %vm555, %v3627, 0
        %v3746 = vsel %vm555, %v3632, 0
        %v3749 = vsel %vm555, %v3637, 0
        %v3752 = vsel %vm555, %v3642, 0
        %v3755 = vsel %vm555, %v3647, 0
        %v3758 = vsel %vm555, %v3652, 0
        %v3761 = vsel %vm555, %v3657, 0
        %3763 = vmatprep.subr.mxu0 0.0
        %3764 = vmatpush1.msra.mxu0 %v3659
        %3765 = vmatprep.subr.mxu0 0.0
        %3766 = vmatpush1.msra.mxu0 %v3660
        %3767 = vmatprep.subr.mxu0 0.0
        %3768 = vmatpush1.msra.mxu0 %v3661
        %3769 = vmatprep.subr.mxu0 0.0
        %3770 = vmatpush1.msra.mxu0 %v3662
        %3771 = vmatprep.subr.mxu0 0.0
        %3772 = vmatpush1.msra.mxu0 %v3663
        %3773 = vmatprep.subr.mxu0 0.0
        %3774 = vmatpush1.msra.mxu0 %v3664
        %3775 = vmatprep.subr.mxu0 0.0
        %3776 = vmatpush1.msra.mxu0 %v3665
        %3777 = vmatprep.subr.mxu0 0.0
        %3778 = vmatpush1.msra.mxu0 %v3666
        %3779 = vmatprep.subr.mxu0 0.0
        %3780 = vmatpush1.msra.mxu0 %v3667
        %3781 = vmatprep.subr.mxu0 0.0
        %3782 = vmatpush1.msra.mxu0 %v3668
        %3783 = vmatprep.subr.mxu0 0.0
        %3784 = vmatpush1.msra.mxu0 %v3669
        %3785 = vmatprep.subr.mxu0 0.0
        %3786 = vmatpush1.msra.mxu0 %v3670
        %3787 = vmatprep.subr.mxu0 0.0
        %3788 = vmatpush1.msra.mxu0 %v3671
        %3789 = vmatprep.subr.mxu0 0.0
        %3790 = vmatpush1.msra.mxu0 %v3672
        %3791 = vmatprep.subr.mxu0 0.0
        %3792 = vmatpush1.msra.mxu0 %v3673
        %3793 = vmatprep.subr.mxu0 0.0
        %3794 = vmatpush1.msra.mxu0 %v3674
        %3795 = vmatprep.subr.mxu0 0.0
        %3796 = vmatpush1.msra.mxu0 %v3675
        %3797 = vmatprep.subr.mxu0 0.0
        %3798 = vmatpush1.msra.mxu0 %v3676
        %3799 = vmatprep.subr.mxu0 0.0
        %3800 = vmatpush1.msra.mxu0 %v3677
        %3801 = vmatprep.subr.mxu0 0.0
        %3802 = vmatpush1.msra.mxu0 %v3678
        %3803 = vmatprep.subr.mxu0 0.0
        %3804 = vmatpush1.msra.mxu0 %v3679
        %3805 = vmatprep.subr.mxu0 0.0
        %3806 = vmatpush1.msra.mxu0 %v3680
        %3807 = vmatprep.subr.mxu0 0.0
        %3808 = vmatpush1.msra.mxu0 %v3681
        %3809 = vmatprep.subr.mxu0 0.0
        %3810 = vmatpush1.msra.mxu0 %v3682
        %3811 = vmatprep.subr.mxu0 0.0
        %3812 = vmatpush1.msra.mxu0 %v3683
        %3813 = vmatprep.subr.mxu0 0.0
        %3814 = vmatpush1.msra.mxu0 %v3684
        %3815 = vmatprep.subr.mxu0 0.0
        %3816 = vmatpush1.msra.mxu0 %v3685
        %3817 = vmatprep.subr.mxu0 0.0
        %3818 = vmatpush1.msra.mxu0 %v3686
        %3819 = vmatprep.subr.mxu0 0.0
        %3820 = vmatpush1.msra.mxu0 %v3687
        %3821 = vmatprep.subr.mxu0 0.0
        %3822 = vmatpush1.msra.mxu0 %v3688
        %3823 = vmatprep.subr.mxu0 0.0
        %3824 = vmatpush1.msra.mxu0 %v3689
        %3825 = vmatprep.subr.mxu0 0.0
        %3826 = vmatpush1.msra.mxu0 %v3690
        %3827 = vmatprep.mubr.f32.mxu0 %v3619
        %3828 = vmatmul.mubr.f32.gmra.mrb[0].mxu0 %v3618
        %v3829 = vpop.f32.mrb[0].mxu0
        %v3830 = vadd.f32 %v3737, %v3829
        %v3831 = vpop.f32.mrb[0].mxu0
        %3832 = vmatprep.mubr.f32.mxu0 %v3624
        %3833 = vmatmul.mubr.f32.gmra.mrb[0].mxu0 %v3623
        %v3834 = vpop.f32.mrb[0].mxu0
        %v3835 = vadd.f32 %v3737, %v3834
        %v3836 = vpop.f32.mrb[0].mxu0
        %3837 = vmatprep.mubr.f32.mxu0 %v3629
        %3838 = vmatmul.mubr.f32.gmra.mrb[0].mxu0 %v3628
        %v3839 = vpop.f32.mrb[0].mxu0
        %v3840 = vadd.f32 %v3737, %v3839
        %v3841 = vpop.f32.mrb[0].mxu0
        %3842 = vmatprep.mubr.f32.mxu0 %v3634
        %3843 = vmatmul.mubr.f32.gmra.mrb[0].mxu0 %v3633
        %v3844 = vpop.f32.mrb[0].mxu0
        %v3845 = vadd.f32 %v3737, %v3844
        %v3846 = vpop.f32.mrb[0].mxu0
        %3847 = vmatprep.mubr.f32.mxu0 %v3639
        %3848 = vmatmul.mubr.f32.gmra.mrb[0].mxu0 %v3638
        %v3849 = vpop.f32.mrb[0].mxu0
        %v3850 = vadd.f32 %v3737, %v3849
        %v3851 = vpop.f32.mrb[0].mxu0
        %3852 = vmatprep.mubr.f32.mxu0 %v3644
        %3853 = vmatmul.mubr.f32.gmra.mrb[0].mxu0 %v3643
        %v3854 = vpop.f32.mrb[0].mxu0
        %v3855 = vadd.f32 %v3737, %v3854
        %v3856 = vpop.f32.mrb[0].mxu0
        %3857 = vmatprep.mubr.f32.mxu0 %v3649
        %3858 = vmatmul.mubr.f32.gmra.mrb[0].mxu0 %v3648
        %v3859 = vpop.f32.mrb[0].mxu0
        %v3860 = vadd.f32 %v3737, %v3859
        %v3861 = vpop.f32.mrb[0].mxu0
        %3862 = vmatprep.mubr.f32.mxu0 %v3654
        %3863 = vmatmul.mubr.f32.gmra.mrb[0].mxu0 %v3653
        %v3864 = vpop.f32.mrb[0].mxu0
        %v3865 = vadd.f32 %v3737, %v3864
        %v3866 = vpop.f32.mrb[0].mxu0
        %3867 = vdwg.mxu0
        %3868 = vmatprep.subr.mxu0 0.0
        %3869 = vmatpush1.msra.mxu0 %v3691
        %3870 = vmatprep.subr.mxu0 0.0
        %3871 = vmatpush1.msra.mxu0 %v3692
        %3872 = vmatprep.subr.mxu0 0.0
        %3873 = vmatpush1.msra.mxu0 %v3693
        %3874 = vmatprep.subr.mxu0 0.0
        %3875 = vmatpush1.msra.mxu0 %v3694
        %3876 = vmatprep.subr.mxu0 0.0
        %3877 = vmatpush1.msra.mxu0 %v3695
        %3878 = vmatprep.subr.mxu0 0.0
        %3879 = vmatpush1.msra.mxu0 %v3696
        %3880 = vmatprep.subr.mxu0 0.0
        %3881 = vmatpush1.msra.mxu0 %v3697
        %3882 = vmatprep.subr.mxu0 0.0
        %3883 = vmatpush1.msra.mxu0 %v3698
        %3884 = vmatprep.subr.mxu0 0.0
        %3885 = vmatpush1.msra.mxu0 %v3699
        %3886 = vmatprep.subr.mxu0 0.0
        %3887 = vmatpush1.msra.mxu0 %v3700
        %3888 = vmatprep.subr.mxu0 0.0
        %3889 = vmatpush1.msra.mxu0 %v3701
        %3890 = vmatprep.subr.mxu0 0.0
        %3891 = vmatpush1.msra.mxu0 %v3702
        %3892 = vmatprep.subr.mxu0 0.0
        %3893 = vmatpush1.msra.mxu0 %v3703
        %3894 = vmatprep.subr.mxu0 0.0
        %3895 = vmatpush1.msra.mxu0 %v3704
        %3896 = vmatprep.subr.mxu0 0.0
        %3897 = vmatpush1.msra.mxu0 %v3705
        %3898 = vmatprep.subr.mxu0 0.0
        %3899 = vmatpush1.msra.mxu0 %v3706
        %3900 = vmatprep.subr.mxu0 0.0
        %3901 = vmatpush1.msra.mxu0 %v3707
        %3902 = vmatprep.subr.mxu0 0.0
        %3903 = vmatpush1.msra.mxu0 %v3708
        %3904 = vmatprep.subr.mxu0 0.0
        %3905 = vmatpush1.msra.mxu0 %v3709
        %3906 = vmatprep.subr.mxu0 0.0
        %3907 = vmatpush1.msra.mxu0 %v3710
        %3908 = vmatprep.subr.mxu0 0.0
        %3909 = vmatpush1.msra.mxu0 %v3711
        %3910 = vmatprep.subr.mxu0 0.0
        %3911 = vmatpush1.msra.mxu0 %v3712
        %3912 = vmatprep.subr.mxu0 0.0
        %3913 = vmatpush1.msra.mxu0 %v3713
        %3914 = vmatprep.subr.mxu0 0.0
        %3915 = vmatpush1.msra.mxu0 %v3714
        %3916 = vmatprep.subr.mxu0 0.0
        %3917 = vmatpush1.msra.mxu0 %v3715
        %3918 = vmatprep.subr.mxu0 0.0
        %3919 = vmatpush1.msra.mxu0 %v3716
        %3920 = vmatprep.subr.mxu0 0.0
        %3921 = vmatpush1.msra.mxu0 %v3717
        %3922 = vmatprep.subr.mxu0 0.0
        %3923 = vmatpush1.msra.mxu0 %v3718
        %3924 = vmatprep.subr.mxu0 0.0
        %3925 = vmatpush1.msra.mxu0 %v3719
        %3926 = vmatprep.subr.mxu0 0.0
        %3927 = vmatpush1.msra.mxu0 %v3720
        %3928 = vmatprep.subr.mxu0 0.0
        %3929 = vmatpush1.msra.mxu0 %v3721
        %3930 = vmatprep.subr.mxu0 0.0
        %3931 = vmatpush1.msra.mxu0 %v3722
        %3932 = vmatprep.mubr.f32.mxu0 %v3621
        %3933 = vmatmul.mubr.f32.gmra.mrb[0].mxu0 %v3620
        %v3934 = vpop.f32.mrb[0].mxu0
        %v3935 = vadd.f32 %v3830, %v3934
        %v3936 = vpop.f32.mrb[0].mxu0
        %3937 = vmatprep.mubr.f32.mxu0 %v3626
        %3938 = vmatmul.mubr.f32.gmra.mrb[0].mxu0 %v3625
        %v3939 = vpop.f32.mrb[0].mxu0
        %v3940 = vadd.f32 %v3835, %v3939
        %v3941 = vpop.f32.mrb[0].mxu0
        %3942 = vmatprep.mubr.f32.mxu0 %v3631
        %3943 = vmatmul.mubr.f32.gmra.mrb[0].mxu0 %v3630
        %v3944 = vpop.f32.mrb[0].mxu0
        %v3945 = vadd.f32 %v3840, %v3944
        %v3946 = vpop.f32.mrb[0].mxu0
        %3947 = vmatprep.mubr.f32.mxu0 %v3636
        %3948 = vmatmul.mubr.f32.gmra.mrb[0].mxu0 %v3635
        %v3949 = vpop.f32.mrb[0].mxu0
        %v3950 = vadd.f32 %v3845, %v3949
        %v3951 = vpop.f32.mrb[0].mxu0
        %3952 = vmatprep.mubr.f32.mxu0 %v3641
        %3953 = vmatmul.mubr.f32.gmra.mrb[0].mxu0 %v3640
        %v3954 = vpop.f32.mrb[0].mxu0
        %v3955 = vadd.f32 %v3850, %v3954
        %v3956 = vpop.f32.mrb[0].mxu0
        %3957 = vmatprep.mubr.f32.mxu0 %v3646
        %3958 = vmatmul.mubr.f32.gmra.mrb[0].mxu0 %v3645
        %v3959 = vpop.f32.mrb[0].mxu0
        %v3960 = vadd.f32 %v3855, %v3959
        %v3961 = vpop.f32.mrb[0].mxu0
        %3962 = vmatprep.mubr.f32.mxu0 %v3651
        %3963 = vmatmul.mubr.f32.gmra.mrb[0].mxu0 %v3650
        %v3964 = vpop.f32.mrb[0].mxu0
        %v3965 = vadd.f32 %v3860, %v3964
        %v3966 = vpop.f32.mrb[0].mxu0
        %3967 = vmatprep.mubr.f32.mxu0 %v3656
        %3968 = vmatmul.mubr.f32.gmra.mrb[0].mxu0 %v3655
        %v3969 = vpop.f32.mrb[0].mxu0
        %v3970 = vadd.f32 %v3865, %v3969
        %v3971 = vpop.f32.mrb[0].mxu0
        %3972 = vdwg.mxu0
        %3973 = vmatprep.subr.mxu0 0.0
        %3974 = vmatpush1.msra.mxu0 %v3723
        %3975 = vmatprep.subr.mxu0 0.0
        %3976 = vmatpush1.msra.mxu0 %v3724
        %3977 = vmatprep.subr.mxu0 0.0
        %3978 = vmatpush1.msra.mxu0 %v3725
        %3979 = vmatprep.subr.mxu0 0.0
        %3980 = vmatpush1.msra.mxu0 %v3726
        %3981 = vmatprep.subr.mxu0 0.0
        %3982 = vmatpush1.msra.mxu0 %v3727
        %3983 = vmatprep.subr.mxu0 0.0
        %3984 = vmatpush1.msra.mxu0 %v3728
        %3985 = vmatprep.subr.mxu0 0.0
        %3986 = vmatpush1.msra.mxu0 %v3729
        %3987 = vmatprep.subr.mxu0 0.0
        %3988 = vmatpush1.msra.mxu0 %v3730
        %3989 = vmatprep.subr.mxu0 0.0
        %3990 = vmatpush1.msra.mxu0 0.0
        %3991 = vmatprep.subr.mxu0 0.0
        %3992 = vmatpush1.msra.mxu0 0.0
        %3993 = vmatprep.subr.mxu0 0.0
        %3994 = vmatpush1.msra.mxu0 0.0
        %3995 = vmatprep.subr.mxu0 0.0
        %3996 = vmatpush1.msra.mxu0 0.0
        %3997 = vmatprep.subr.mxu0 0.0
        %3998 = vmatpush1.msra.mxu0 0.0
        %3999 = vmatprep.subr.mxu0 0.0
        %4000 = vmatpush1.msra.mxu0 0.0
        %4001 = vmatprep.subr.mxu0 0.0
        %4002 = vmatpush1.msra.mxu0 0.0
        %4003 = vmatprep.subr.mxu0 0.0
        %4004 = vmatpush1.msra.mxu0 0.0
        %4005 = vmatprep.subr.mxu0 0.0
        %4006 = vmatpush1.msra.mxu0 0.0
        %4007 = vmatprep.subr.mxu0 0.0
        %4008 = vmatpush1.msra.mxu0 0.0
        %4009 = vmatprep.subr.mxu0 0.0
        %4010 = vmatpush1.msra.mxu0 0.0
        %4011 = vmatprep.subr.mxu0 0.0
        %4012 = vmatpush1.msra.mxu0 0.0
        %4013 = vmatprep.subr.mxu0 0.0
        %4014 = vmatpush1.msra.mxu0 0.0
        %4015 = vmatprep.subr.mxu0 0.0
        %4016 = vmatpush1.msra.mxu0 0.0
        %4017 = vmatprep.subr.mxu0 0.0
        %4018 = vmatpush1.msra.mxu0 0.0
        %4019 = vmatprep.subr.mxu0 0.0
        %4020 = vmatpush1.msra.mxu0 0.0
        %4021 = vmatprep.subr.mxu0 0.0
        %4022 = vmatpush1.msra.mxu0 0.0
        %4023 = vmatprep.subr.mxu0 0.0
        %4024 = vmatpush1.msra.mxu0 0.0
        %4025 = vmatprep.subr.mxu0 0.0
        %4026 = vmatpush1.msra.mxu0 0.0
        %4027 = vmatprep.subr.mxu0 0.0
        %4028 = vmatpush1.msra.mxu0 0.0
        %4029 = vmatprep.subr.mxu0 0.0
        %4030 = vmatpush1.msra.mxu0 0.0
        %4031 = vmatprep.subr.mxu0 0.0
        %4032 = vmatpush1.msra.mxu0 0.0
        %4033 = vmatprep.subr.mxu0 0.0
        %4034 = vmatpush1.msra.mxu0 0.0
        %4035 = vmatprep.subr.mxu0 0.0
        %4036 = vmatpush1.msra.mxu0 0.0
        %4037 = vmatprep.mubr.f32.mxu0 0.0
        %4038 = vmatmul.mubr.f32.gmra.mrb[0].mxu0 %v3740
        %v4039 = vpop.f32.mrb[0].mxu0
        %v4040 = vadd.f32 %v3935, %v4039
        %v4041 = vpop.f32.mrb[0].mxu0
        %4042 = vmatprep.mubr.f32.mxu0 0.0
        %4043 = vmatmul.mubr.f32.gmra.mrb[0].mxu0 %v3743
        %v4044 = vpop.f32.mrb[0].mxu0
        %v4045 = vadd.f32 %v3940, %v4044
        %v4046 = vpop.f32.mrb[0].mxu0
        %4047 = vmatprep.mubr.f32.mxu0 0.0
        %4048 = vmatmul.mubr.f32.gmra.mrb[0].mxu0 %v3746
        %v4049 = vpop.f32.mrb[0].mxu0
        %v4050 = vadd.f32 %v3945, %v4049
        %v4051 = vpop.f32.mrb[0].mxu0
        %4052 = vmatprep.mubr.f32.mxu0 0.0
        %4053 = vmatmul.mubr.f32.gmra.mrb[0].mxu0 %v3749
        %v4054 = vpop.f32.mrb[0].mxu0
        %v4055 = vadd.f32 %v3950, %v4054
        %v4056 = vpop.f32.mrb[0].mxu0
        %4057 = vmatprep.mubr.f32.mxu0 0.0
        %4058 = vmatmul.mubr.f32.gmra.mrb[0].mxu0 %v3752
        %v4059 = vpop.f32.mrb[0].mxu0
        %v4060 = vadd.f32 %v3955, %v4059
        %v4061 = vpop.f32.mrb[0].mxu0
        %4062 = vmatprep.mubr.f32.mxu0 0.0
        %4063 = vmatmul.mubr.f32.gmra.mrb[0].mxu0 %v3755
        %v4064 = vpop.f32.mrb[0].mxu0
        %v4065 = vadd.f32 %v3960, %v4064
        %v4066 = vpop.f32.mrb[0].mxu0
        %4067 = vmatprep.mubr.f32.mxu0 0.0
        %4068 = vmatmul.mubr.f32.gmra.mrb[0].mxu0 %v3758
        %v4069 = vpop.f32.mrb[0].mxu0
        %v4070 = vadd.f32 %v3965, %v4069
        %v4071 = vpop.f32.mrb[0].mxu0
        %4072 = vmatprep.mubr.f32.mxu0 0.0
        %4073 = vmatmul.mubr.f32.gmra.mrb[0].mxu0 %v3761
        %v4074 = vpop.f32.mrb[0].mxu0
        %v4075 = vadd.f32 %v3970, %v4074
        %v4076 = vpop.f32.mrb[0].mxu0
        %4077 = vdwg.mxu0
        %v4078 = vadd.f32 %v4040, %v2486
        %v4079 = vadd.f32 %v4045, %v2487
        %v4080 = vadd.f32 %v4050, %v2488
        %v4081 = vadd.f32 %v4055, %v2489
        %v4082 = vadd.f32 %v4060, %v2490
        %v4083 = vadd.f32 %v4065, %v2491
        %v4084 = vadd.f32 %v4070, %v2492
        %v4085 = vadd.f32 %v4075, %v2493
        %v4086 = vmax.f32 %v4078, 0.0
        %v4087 = vmax.f32 %v4079, 0.0
        %v4088 = vmax.f32 %v4080, 0.0
        %v4089 = vmax.f32 %v4081, 0.0
        %v4090 = vmax.f32 %v4082, 0.0
        %v4091 = vmax.f32 %v4083, 0.0
        %v4092 = vmax.f32 %v4084, 0.0
        %v4093 = vmax.f32 %v4085, 0.0
        %4094 = vst.msk [vmem:[%s193] sm:$0xff] %vm555, %v4086
        %4095 = vst.msk [vmem:[%s193 + $0x8] sm:$0xff] %vm555, %v4087
        %4096 = vst.msk [vmem:[%s193 + $0x10] sm:$0xff] %vm555, %v4088
        %4097 = vst.msk [vmem:[%s193 + $0x18] sm:$0xff] %vm555, %v4089
        %4098 = vst.msk [vmem:[%s193 + $0x20] sm:$0xff] %vm555, %v4090
        %4099 = vst.msk [vmem:[%s193 + $0x28] sm:$0xff] %vm555, %v4091
        %4100 = vst.msk [vmem:[%s193 + $0x30] sm:$0xff] %vm555, %v4092
        %4101 = vst.msk [vmem:[%s193 + $0x38] sm:$0xff] %vm555, %v4093
        %s4102 = sand.u32 %s115, 1
        %s4103 = scalar_lea.sflag [#allocation7], %s4102
        %s4104 = sand.u32 %s115, 1
        %s4105 = smul.addr %s4104, 64
        %s4106 = scalar_lea.vmem [#allocation6], %s4105
        // Predicated region
        $region37: #{mycnn_sppnet_front.1} parent=35 // pred_check
          %p4107 = pneg %p125
        $region38: #{mycnn_sppnet_front.1} parent=35 // pred_check_branch
          %4109 = sbr.rel (%p4107) target = $region40
        $region39: #{mycnn_sppnet_front.1} parent=35 // pred_region
          %s4110 = smul.u32 8, %s18
          %s4112 = ssub.s32 1024, 1024
          %4113 = vsyncadd %s4103, %s4112
          %s4114 = smul.addr %s4110, 128
          %s4115 = scalar_lea.hbm %s4, %s4114
          %s4116 = sshll.u32 %s4106, 4
          %s4117 = int_to_ptr.vmem [resolvable:$true] %s4116
          %4122 = dma.vmem_to_hbm [thread:$0]  %s4117, 1024, %s4115, %s4103, 128, 128, 8
        $region40: #{mycnn_sppnet_front.1} parent=35 // pred_fallthru
          _
      $region36: #{mycnn_sppnet_front.1} parent=5 // pred_fallthru
        _
      %p4123 = scmp.le.s32.totalorder 2, %s13
      // Predicated region
      $region41: #{mycnn_sppnet_front.1} parent=5 // pred_check
        %p4124 = pneg %p4123
      $region42: #{mycnn_sppnet_front.1} parent=5 // pred_check_branch
        %4126 = sbr.rel (%p4124) target = $region44
      $region43: #{mycnn_sppnet_front.1} parent=5 // pred_region
        %s4127 = ssub.s32 %s13, 2
        // Predicated region
        $region45: #{mycnn_sppnet_front.1} parent=43 // pred_check
          %p4128 = pneg %p131
        $region46: #{mycnn_sppnet_front.1} parent=43 // pred_check_branch
          %4130 = sbr.rel (%p4128) target = $region48
        $region47: #{mycnn_sppnet_front.1} parent=43 // pred_region
          %s4131 = sand.u32 %s116, 1
          %s4132 = scalar_lea.sflag [#allocation7], %s4131
          %s4133 = sand.u32 %s116, 1
          %s4134 = smul.addr %s4133, 64
          %s4135 = scalar_lea.vmem [#allocation6], %s4134
          %4136 = dma.done %s4132, 1024
        $region48: #{mycnn_sppnet_front.1} parent=43 // pred_fallthru
          _
      $region44: #{mycnn_sppnet_front.1} parent=5 // pred_fallthru
        _
    $region6: #{mycnn_sppnet_front.1} parent=1 // loop_footer
      %s17 = sadd.s32 1, %s13
    $region7: #{mycnn_sppnet_front.1} parent=1 // loop_footer_branch
      %12 = sbr.rel target = $region3
    $region8: #{mycnn_sppnet_front.1} parent=1 // loop_exit
      _
    %4137 = vsyncpa [#allocation7], 1
    %s4138 = scalar_lea.sflag [#allocation7], 1
    %4139 = vsyncpa %s4138, 1

</llo_original>
